<compile_context>
chip_gen: v6e
topology: v6e:2x2x1
jax: 0.10.0
libtpu: 0.0.40
codegen_flags: <defaults>
</compile_context>

<pallas_src>
from functools import partial
import math

import jax
import jax.numpy as jnp
from jax.experimental import pallas as pl
from jax.experimental.pallas import tpu as pltpu

LN_EPS = 1e-5


def _layer_norm(z, w, b):
    mu = jnp.mean(z, axis=-1, keepdims=True)
    var = jnp.mean((z - mu) ** 2, axis=-1, keepdims=True)
    return (z - mu) * jax.lax.rsqrt(var + LN_EPS) * w + b


def transformer_speaker_id_kernel(
    x_ref,        # (BB*S, D_in) bf16
    w_emb_ref,    # (D_in, H)    bf16
    w_qkv_ref,    # (H, 3H)      bf16  (q-part pre-scaled by 1/sqrt(hd))
    b_qkv_ref,    # (1, 3H)      f32   (q-part pre-scaled)
    w_o_ref,      # (H, H)       bf16
    w_ff1_ref,    # (H, DFF)     bf16
    b_ff1_ref,    # (1, DFF)     f32
    w_ff2_ref,    # (DFF, H)     bf16
    w_fc_ref,     # (H, C_pad)   bf16  (zero-padded to 128 lanes)
    b_fc_ref,     # (1, C_pad)   f32
    vec_ref,      # (8, H)  f32: rows = [b_emb, b_o, ln1_w, ln1_b, ln2_w, ln2_b, b_ff2, 0]
    out_ref,      # (BB, C_pad)  f32
    *, num_heads, seq_len, ff_chunk,
):
    rows, _ = x_ref.shape
    H = w_emb_ref.shape[1]
    DFF = w_ff1_ref.shape[1]
    S = seq_len
    BB = rows // S
    hd = H // num_heads
    bf16, f32 = jnp.bfloat16, jnp.float32

    vecs = vec_ref[...]
    b_emb, b_o = vecs[0:1, :], vecs[1:2, :]
    ln1_w, ln1_b = vecs[2:3, :], vecs[3:4, :]
    ln2_w, ln2_b = vecs[4:5, :], vecs[5:6, :]
    b_ff2 = vecs[6:7, :]

    # --- embedding (x already bf16, 2-D) ---------------------------------------
    emb = jnp.dot(x_ref[...], w_emb_ref[...], preferred_element_type=f32) + b_emb
    emb_bf = emb.astype(bf16)

    # --- fused qkv projection (scale folded into q weights/bias) ---------------
    qkv = jnp.dot(emb_bf, w_qkv_ref[...], preferred_element_type=f32) + b_qkv_ref[...]
    q3 = qkv[:, 0:H].reshape(BB, S, H).astype(bf16)
    k3 = qkv[:, H:2 * H].reshape(BB, S, H).astype(bf16)
    v3 = qkv[:, 2 * H:3 * H].reshape(BB, S, H).astype(bf16)

    # --- multi-head self-attention (dropout == identity in eval) ---------------
    head_outs = []
    for h in range(num_heads):            # static, tiny unrolled loop
        lo = h * hd
        qh = q3[:, :, lo:lo + hd]
        kh = k3[:, :, lo:lo + hd]
        vh = v3[:, :, lo:lo + hd]
        s = jnp.einsum("bqd,bkd->bqk", qh, kh, preferred_element_type=f32)   # (BB,S,S)
        s = s - jnp.max(s, axis=-1, keepdims=True)
        p = jnp.exp(s)
        p = p * pl.reciprocal(jnp.sum(p, axis=-1, keepdims=True), approx=True)
        head_outs.append(
            jnp.einsum("bqk,bkd->bqd", p.astype(bf16), vh, preferred_element_type=f32))
    attn = jnp.concatenate(head_outs, axis=-1).reshape(rows, H)
    attn = jnp.dot(attn.astype(bf16), w_o_ref[...], preferred_element_type=f32) + b_o

    # --- residual + LayerNorm 1 (post-norm) ------------------------------------
    x1 = _layer_norm(emb + attn, ln1_w, ln1_b)
    x1_bf = x1.astype(bf16)

    # --- feed-forward (ReLU), chunked over DFF to cap live VMEM ----------------
    h2 = jnp.zeros((rows, H), f32)
    for c in range(DFF // ff_chunk):       # static, 4 chunks at DFF=2048
        lo = c * ff_chunk
        h1c = jnp.dot(x1_bf, w_ff1_ref[:, lo:lo + ff_chunk],
                      preferred_element_type=f32) + b_ff1_ref[:, lo:lo + ff_chunk]
        h1c = jnp.maximum(h1c, 0.0)
        h2 = h2 + jnp.dot(h1c.astype(bf16), w_ff2_ref[lo:lo + ff_chunk, :],
                          preferred_element_type=f32)
    h2 = h2 + b_ff2

    # --- residual + LayerNorm 2 -------------------------------------------------
    x2 = _layer_norm(x1 + h2, ln2_w, ln2_b)

    # --- temporal mean pooling + (lane-padded) classifier -----------------------
    pooled = x2.reshape(BB, S, H).sum(axis=1) * (1.0 / S)                 # (BB, H)
    logits = jnp.dot(pooled.astype(bf16), w_fc_ref[...],
                     preferred_element_type=f32) + b_fc_ref[...]
    out_ref[...] = logits.astype(out_ref.dtype)


def pack_params(params, *, num_heads, lane_pad=128):
    """One-time layout/dtype transform: pre-transpose, fuse qkv, fold the
    attention scale into q, zero-pad the classifier to a lane-dense width,
    pack the tiny bias/LN vectors, cast matmul weights to bf16."""
    bf, f32 = jnp.bfloat16, jnp.float32
    H = params["w_emb"].shape[0]
    hd = H // num_heads
    scale = 1.0 / math.sqrt(hd)

    w_qkv, b_qkv = params["w_qkv"], params["b_qkv"]        # (3H,H), (1,3H)
    w_qkv_packed = jnp.concatenate(
        [w_qkv[0:H] * scale, w_qkv[H:3 * H]], axis=0).T.astype(bf)        # (H, 3H)
    b_qkv_packed = jnp.concatenate(
        [b_qkv[:, 0:H] * scale, b_qkv[:, H:3 * H]], axis=1).astype(f32)   # (1, 3H)

    C = params["w_fc"].shape[0]
    C_pad = max(lane_pad, ((C + lane_pad - 1) // lane_pad) * lane_pad)
    w_fc = jnp.zeros((H, C_pad), f32).at[:, :C].set(params["w_fc"].T.astype(f32))
    b_fc = jnp.zeros((1, C_pad), f32).at[:, :C].set(params["b_fc"].astype(f32))

    vecs = jnp.concatenate(
        [params["b_emb"], params["b_o"],
         params["ln1_w"], params["ln1_b"],
         params["ln2_w"], params["ln2_b"],
         params["b_ff2"], jnp.zeros((1, H), f32)], axis=0).astype(f32)    # (8, H)

    return {
        "w_emb": params["w_emb"].T.astype(bf),
        "w_qkv": w_qkv_packed,
        "b_qkv": b_qkv_packed,
        "w_o": params["w_o"].T.astype(bf),
        "w_ff1": params["w_ff1"].T.astype(bf),
        "b_ff1": params["b_ff1"].astype(f32),
        "w_ff2": params["w_ff2"].T.astype(bf),
        "w_fc": w_fc.astype(bf),
        "b_fc": b_fc,
        "vecs": vecs,
    }


def _pick_batch_block(B, S, target_rows=1024):
    """BB is a multiple of 8 (sublane granularity), sized to ~target_rows rows
    per grid step, with >=2 grid steps when the batch is big enough (v7x has
    2 TensorCores). Returns (BB, padded_batch)."""
    b8 = ((B + 7) // 8) * 8
    bb = max(8, min(b8, (max(target_rows // max(S, 1), 8) // 8) * 8))
    if b8 >= 16 and bb > b8 // 2:
        bb = max(8, ((b8 // 2) // 8) * 8)
    b_pad = ((B + bb - 1) // bb) * bb
    return bb, b_pad


_PARAM_ORDER = ["w_emb", "w_qkv", "b_qkv", "w_o", "w_ff1", "b_ff1",
                "w_ff2", "w_fc", "b_fc", "vecs"]


def transformer_speaker_id(x_ncl, packed, *, num_heads, num_classes,
                           target_rows=1024, ff_chunk=512):
    """x_ncl: (B, input_dim, seq) like the PyTorch module; `packed` comes from
    pack_params() called ONCE at model init. Returns (B, num_classes)."""
    B, D_in, S = x_ncl.shape
    C_pad = packed["w_fc"].shape[1]
    DFF = packed["w_ff1"].shape[1]
    ff_chunk = min(ff_chunk, DFF)
    if DFF % ff_chunk:
        ff_chunk = DFF   # fall back to a single chunk

    BB, B_pad = _pick_batch_block(B, S, target_rows)
    grid = (B_pad // BB,)

    # Permute NCL->NLC, zero-pad batch, cast to bf16, flatten to dense 2-D rows
    # in the wrapper so the per-step x DMA is a plain 2-D tile.
    x = jnp.transpose(x_ncl, (0, 2, 1)).astype(jnp.bfloat16)      # (B, S, D_in)
    if B_pad != B:
        x = jnp.concatenate(
            [x, jnp.zeros((B_pad - B, S, D_in), jnp.bfloat16)], axis=0)
    x2d = x.reshape(B_pad * S, D_in)

    weight_args = [packed[name] for name in _PARAM_ORDER]

    def fixed(arr):
        n = arr.ndim
        return pl.BlockSpec(arr.shape, lambda i, _n=n: (0,) * _n)

    weight_specs = [fixed(a) for a in weight_args]

    kernel = partial(transformer_speaker_id_kernel,
                     num_heads=num_heads, seq_len=S, ff_chunk=ff_chunk)

    out = pl.pallas_call(
        kernel,
        out_shape=jax.ShapeDtypeStruct((B_pad, C_pad), jnp.float32),
        grid=grid,
        in_specs=[pl.BlockSpec((BB * S, D_in), lambda i: (i, 0))] + weight_specs,
        out_specs=pl.BlockSpec((BB, C_pad), lambda i: (i, 0)),
        compiler_params=pltpu.CompilerParams(
            dimension_semantics=("parallel",),
            vmem_limit_bytes=48 * 1024 * 1024,
        ),
    )(x2d, *weight_args)
    return out[:B, :num_classes]


def _reference_jax(x_ncl, params, *, num_heads):
    """Pure-JAX f32 reference of the same forward pass for a correctness check."""
    x = jnp.transpose(x_ncl, (0, 2, 1)).astype(jnp.float32)   # (B, S, D_in)
    H = params["w_emb"].shape[0]
    hd = H // num_heads

    emb = x @ params["w_emb"].T + params["b_emb"]             # (B, S, H)
    w_qkv, b_qkv = params["w_qkv"], params["b_qkv"]
    q = emb @ w_qkv[0:H].T + b_qkv[:, 0:H]
    k = emb @ w_qkv[H:2 * H].T + b_qkv[:, H:2 * H]
    v = emb @ w_qkv[2 * H:3 * H].T + b_qkv[:, 2 * H:3 * H]

    def split(t):  # (B, S, H) -> (B, nh, S, hd)
        B, S, _ = t.shape
        return t.reshape(B, S, num_heads, hd).transpose(0, 2, 1, 3)

    qh, kh, vh = split(q), split(k), split(v)
    scores = (qh / jnp.sqrt(jnp.float32(hd))) @ kh.transpose(0, 1, 3, 2)
    p = jax.nn.softmax(scores, axis=-1)
    ao = (p @ vh).transpose(0, 2, 1, 3).reshape(emb.shape)
    ao = ao @ params["w_o"].T + params["b_o"]

    def ln(z, w, b):
        mu = jnp.mean(z, axis=-1, keepdims=True)
        var = jnp.mean((z - mu) ** 2, axis=-1, keepdims=True)
        return (z - mu) / jnp.sqrt(var + LN_EPS) * w + b

    x1 = ln(emb + ao, params["ln1_w"], params["ln1_b"])
    h = jnp.maximum(x1 @ params["w_ff1"].T + params["b_ff1"], 0.0)
    h = h @ params["w_ff2"].T + params["b_ff2"]
    x2 = ln(x1 + h, params["ln2_w"], params["ln2_b"])
    pooled = jnp.mean(x2, axis=1)
    return pooled @ params["w_fc"].T + params["b_fc"]


def make_params(key, input_dim, hidden_dim, num_classes, dim_feedforward):
    keys = jax.random.split(key, 10)
    s = 0.05
    return {
        "w_emb": s * jax.random.normal(keys[0], (hidden_dim, input_dim), jnp.float32),
        "b_emb": s * jax.random.normal(keys[1], (1, hidden_dim), jnp.float32),
        "w_qkv": s * jax.random.normal(keys[2], (3 * hidden_dim, hidden_dim), jnp.float32),
        "b_qkv": s * jax.random.normal(keys[3], (1, 3 * hidden_dim), jnp.float32),
        "w_o": s * jax.random.normal(keys[4], (hidden_dim, hidden_dim), jnp.float32),
        "b_o": s * jax.random.normal(keys[5], (1, hidden_dim), jnp.float32),
        "ln1_w": jnp.ones((1, hidden_dim), jnp.float32),
        "ln1_b": jnp.zeros((1, hidden_dim), jnp.float32),
        "w_ff1": s * jax.random.normal(keys[6], (dim_feedforward, hidden_dim), jnp.float32),
        "b_ff1": s * jax.random.normal(keys[7], (1, dim_feedforward), jnp.float32),
        "w_ff2": s * jax.random.normal(keys[8], (hidden_dim, dim_feedforward), jnp.float32),
        "b_ff2": jnp.zeros((1, hidden_dim), jnp.float32),
        "ln2_w": jnp.ones((1, hidden_dim), jnp.float32),
        "ln2_b": jnp.zeros((1, hidden_dim), jnp.float32),
        "w_fc": s * jax.random.normal(keys[9], (num_classes, hidden_dim), jnp.float32),
        "b_fc": jnp.zeros((1, num_classes), jnp.float32),
    }


if __name__ == "__main__":
    # Module hyper-parameters (defaults of TransformerSpeakerID):
    B, INPUT_DIM, SEQ = 2, 16, 8
    HIDDEN, NUM_HEADS, NUM_CLASSES = 64, 2, 4
    DIM_FF = 2048   # nn.TransformerEncoderLayer default dim_feedforward

    key = jax.random.PRNGKey(0)
    k_x, k_p = jax.random.split(key)
    x = jax.random.normal(k_x, (B, INPUT_DIM, SEQ), jnp.float32)   # PyTorch NCL input
    params = make_params(k_p, INPUT_DIM, HIDDEN, NUM_CLASSES, DIM_FF)

    # Pack weights ONCE at model init (hoisted out of the forward path).
    packed = jax.tree_util.tree_map(jax.block_until_ready,
                                    pack_params(params, num_heads=NUM_HEADS))

    out = transformer_speaker_id(x, packed, num_heads=NUM_HEADS,
                                 num_classes=NUM_CLASSES)
    out = jax.block_until_ready(out)

    ref = jax.block_until_ready(_reference_jax(x, params, num_heads=NUM_HEADS))
    assert out.shape == (B, NUM_CLASSES)
    # Tolerance loosened relative to the pure-f32 reference because matmul operands
    # (weights + activations) run in bf16 on the MXU and the softmax denominator
    # uses the approximate EUP reciprocal.
    assert jnp.allclose(out, ref, rtol=5e-2, atol=5e-2), (out, ref)

    print("KERNEL_OK")
</pallas_src>

<mosaic_0001>
module attributes {stable_mosaic.version = 11 : i64} {
  func.func @transformer_speaker_id_kernel(%arg0: i32, %arg1: memref<64x16xbf16, #tpu.memory_space<vmem>>, %arg2: memref<16x64xbf16, #tpu.memory_space<vmem>>, %arg3: memref<64x192xbf16, #tpu.memory_space<vmem>>, %arg4: memref<1x192xf32, #tpu.memory_space<vmem>>, %arg5: memref<64x64xbf16, #tpu.memory_space<vmem>>, %arg6: memref<64x2048xbf16, #tpu.memory_space<vmem>>, %arg7: memref<1x2048xf32, #tpu.memory_space<vmem>>, %arg8: memref<2048x64xbf16, #tpu.memory_space<vmem>>, %arg9: memref<64x128xbf16, #tpu.memory_space<vmem>>, %arg10: memref<1x128xf32, #tpu.memory_space<vmem>>, %arg11: memref<8x64xf32, #tpu.memory_space<vmem>>, %arg12: memref<8x128xf32, #tpu.memory_space<vmem>>) attributes {dimension_semantics = [#tpu.dimension_semantics<parallel>], iteration_bounds = array<i64: 1>, scalar_prefetch = 0 : i64, scratch_operands = 0 : i64, tpu.core_type = #tpu.core_type<tc>, window_params = [{transform_indices = @transform_0, window_bounds = array<i64: 64, 16>}, {pipeline_mode = #tpu.pipeline_mode<synchronous>, transform_indices = @transform_1, window_bounds = array<i64: 16, 64>}, {pipeline_mode = #tpu.pipeline_mode<synchronous>, transform_indices = @transform_2, window_bounds = array<i64: 64, 192>}, {pipeline_mode = #tpu.pipeline_mode<synchronous>, transform_indices = @transform_3, window_bounds = array<i64: 1, 192>}, {pipeline_mode = #tpu.pipeline_mode<synchronous>, transform_indices = @transform_4, window_bounds = array<i64: 64, 64>}, {pipeline_mode = #tpu.pipeline_mode<synchronous>, transform_indices = @transform_5, window_bounds = array<i64: 64, 2048>}, {pipeline_mode = #tpu.pipeline_mode<synchronous>, transform_indices = @transform_6, window_bounds = array<i64: 1, 2048>}, {pipeline_mode = #tpu.pipeline_mode<synchronous>, transform_indices = @transform_7, window_bounds = array<i64: 2048, 64>}, {pipeline_mode = #tpu.pipeline_mode<synchronous>, transform_indices = @transform_8, window_bounds = array<i64: 64, 128>}, {pipeline_mode = #tpu.pipeline_mode<synchronous>, transform_indices = @transform_9, window_bounds = array<i64: 1, 128>}, {pipeline_mode = #tpu.pipeline_mode<synchronous>, transform_indices = @transform_10, window_bounds = array<i64: 8, 64>}, {transform_indices = @transform_11, window_bounds = array<i64: 8, 128>}]} {
    %c0 = arith.constant 0 : index
    %c0_0 = arith.constant 0 : index
    %0 = vector.load %arg11[%c0, %c0_0] : memref<8x64xf32, #tpu.memory_space<vmem>>, vector<8x64xf32>
    %1 = vector.extract_strided_slice %0 {offsets = [0, 0], sizes = [1, 64], strides = [1, 1]} : vector<8x64xf32> to vector<1x64xf32>
    %2 = vector.extract_strided_slice %0 {offsets = [1, 0], sizes = [1, 64], strides = [1, 1]} : vector<8x64xf32> to vector<1x64xf32>
    %3 = vector.extract_strided_slice %0 {offsets = [2, 0], sizes = [1, 64], strides = [1, 1]} : vector<8x64xf32> to vector<1x64xf32>
    %4 = vector.extract_strided_slice %0 {offsets = [3, 0], sizes = [1, 64], strides = [1, 1]} : vector<8x64xf32> to vector<1x64xf32>
    %5 = vector.extract_strided_slice %0 {offsets = [4, 0], sizes = [1, 64], strides = [1, 1]} : vector<8x64xf32> to vector<1x64xf32>
    %6 = vector.extract_strided_slice %0 {offsets = [5, 0], sizes = [1, 64], strides = [1, 1]} : vector<8x64xf32> to vector<1x64xf32>
    %7 = vector.extract_strided_slice %0 {offsets = [6, 0], sizes = [1, 64], strides = [1, 1]} : vector<8x64xf32> to vector<1x64xf32>
    %c0_1 = arith.constant 0 : index
    %c0_2 = arith.constant 0 : index
    %8 = vector.load %arg1[%c0_1, %c0_2] : memref<64x16xbf16, #tpu.memory_space<vmem>>, vector<64x16xbf16>
    %c0_3 = arith.constant 0 : index
    %c0_4 = arith.constant 0 : index
    %9 = vector.load %arg2[%c0_3, %c0_4] : memref<16x64xbf16, #tpu.memory_space<vmem>>, vector<16x64xbf16>
    %cst = arith.constant dense<0.000000e+00> : vector<64x64xf32>
    %10 = tpu.matmul %8, %9, %cst {dimension_numbers = #tpu.dot_dimension_numbers<[1], [0], [0], [1], [0, 0, 1, 1], [], []>} : vector<64x16xbf16>, vector<16x64xbf16>, vector<64x64xf32> -> vector<64x64xf32>
    %11 = vector.broadcast %1 : vector<1x64xf32> to vector<64x64xf32>
    %12 = arith.addf %10, %11 : vector<64x64xf32>
    %13 = arith.truncf %12 : vector<64x64xf32> to vector<64x64xbf16>
    %c0_5 = arith.constant 0 : index
    %c0_6 = arith.constant 0 : index
    %14 = vector.load %arg3[%c0_5, %c0_6] : memref<64x192xbf16, #tpu.memory_space<vmem>>, vector<64x192xbf16>
    %cst_7 = arith.constant dense<0.000000e+00> : vector<64x192xf32>
    %15 = tpu.matmul %13, %14, %cst_7 {dimension_numbers = #tpu.dot_dimension_numbers<[1], [0], [0], [1], [0, 0, 1, 1], [], []>} : vector<64x64xbf16>, vector<64x192xbf16>, vector<64x192xf32> -> vector<64x192xf32>
    %c0_8 = arith.constant 0 : index
    %c0_9 = arith.constant 0 : index
    %16 = vector.load %arg4[%c0_8, %c0_9] : memref<1x192xf32, #tpu.memory_space<vmem>>, vector<1x192xf32>
    %17 = vector.broadcast %16 : vector<1x192xf32> to vector<64x192xf32>
    %18 = arith.addf %15, %17 : vector<64x192xf32>
    %19 = vector.extract_strided_slice %18 {offsets = [0, 0], sizes = [64, 64], strides = [1, 1]} : vector<64x192xf32> to vector<64x64xf32>
    %20 = vector.shape_cast %19 : vector<64x64xf32> to vector<8x8x64xf32>
    %21 = arith.truncf %20 : vector<8x8x64xf32> to vector<8x8x64xbf16>
    %22 = vector.extract_strided_slice %18 {offsets = [0, 64], sizes = [64, 64], strides = [1, 1]} : vector<64x192xf32> to vector<64x64xf32>
    %23 = vector.shape_cast %22 : vector<64x64xf32> to vector<8x8x64xf32>
    %24 = arith.truncf %23 : vector<8x8x64xf32> to vector<8x8x64xbf16>
    %25 = vector.extract_strided_slice %18 {offsets = [0, 128], sizes = [64, 64], strides = [1, 1]} : vector<64x192xf32> to vector<64x64xf32>
    %26 = vector.shape_cast %25 : vector<64x64xf32> to vector<8x8x64xf32>
    %27 = arith.truncf %26 : vector<8x8x64xf32> to vector<8x8x64xbf16>
    %28 = vector.extract_strided_slice %21 {offsets = [0, 0, 0], sizes = [8, 8, 32], strides = [1, 1, 1]} : vector<8x8x64xbf16> to vector<8x8x32xbf16>
    %29 = vector.extract_strided_slice %24 {offsets = [0, 0, 0], sizes = [8, 8, 32], strides = [1, 1, 1]} : vector<8x8x64xbf16> to vector<8x8x32xbf16>
    %30 = vector.extract_strided_slice %27 {offsets = [0, 0, 0], sizes = [8, 8, 32], strides = [1, 1, 1]} : vector<8x8x64xbf16> to vector<8x8x32xbf16>
    "tpu.trace_start"() <{level = 10 : i32, message = "bqd,bkd->bqk"}> : () -> ()
    %cst_10 = arith.constant dense<0.000000e+00> : vector<8x8x8xf32>
    %31 = tpu.matmul %28, %29, %cst_10 {dimension_numbers = #tpu.dot_dimension_numbers<[2], [2], [1], [1], [0, 0, 0, 1, 1, 1], [0], [0]>} : vector<8x8x32xbf16>, vector<8x8x32xbf16>, vector<8x8x8xf32> -> vector<8x8x8xf32>
    "tpu.trace_stop"() : () -> ()
    %cst_11 = arith.constant dense<0xFF800000> : vector<8x8xf32>
    %32 = vector.multi_reduction <maximumf>, %31, %cst_11 [2] : vector<8x8x8xf32> to vector<8x8xf32>
    %33 = vector.shape_cast %32 : vector<8x8xf32> to vector<8x8x1xf32>
    %34 = vector.broadcast %33 : vector<8x8x1xf32> to vector<8x8x8xf32>
    %35 = arith.subf %31, %34 : vector<8x8x8xf32>
    %36 = math.exp %35 : vector<8x8x8xf32>
    %cst_12 = arith.constant dense<0.000000e+00> : vector<8x8xf32>
    %37 = vector.multi_reduction <add>, %36, %cst_12 [2] : vector<8x8x8xf32> to vector<8x8xf32>
    %38 = vector.shape_cast %37 : vector<8x8xf32> to vector<8x8x1xf32>
    %39 = tpu.reciprocal %38 {approx = true} : vector<8x8x1xf32> -> vector<8x8x1xf32>
    %40 = vector.broadcast %39 : vector<8x8x1xf32> to vector<8x8x8xf32>
    %41 = arith.mulf %36, %40 : vector<8x8x8xf32>
    %42 = arith.truncf %41 : vector<8x8x8xf32> to vector<8x8x8xbf16>
    "tpu.trace_start"() <{level = 10 : i32, message = "bqk,bkd->bqd"}> : () -> ()
    %cst_13 = arith.constant dense<0.000000e+00> : vector<8x8x32xf32>
    %43 = tpu.matmul %42, %30, %cst_13 {dimension_numbers = #tpu.dot_dimension_numbers<[2], [1], [1], [2], [0, 0, 0, 1, 1, 2], [0], [0]>} : vector<8x8x8xbf16>, vector<8x8x32xbf16>, vector<8x8x32xf32> -> vector<8x8x32xf32>
    "tpu.trace_stop"() : () -> ()
    %44 = vector.extract_strided_slice %21 {offsets = [0, 0, 32], sizes = [8, 8, 32], strides = [1, 1, 1]} : vector<8x8x64xbf16> to vector<8x8x32xbf16>
    %45 = vector.extract_strided_slice %24 {offsets = [0, 0, 32], sizes = [8, 8, 32], strides = [1, 1, 1]} : vector<8x8x64xbf16> to vector<8x8x32xbf16>
    %46 = vector.extract_strided_slice %27 {offsets = [0, 0, 32], sizes = [8, 8, 32], strides = [1, 1, 1]} : vector<8x8x64xbf16> to vector<8x8x32xbf16>
    "tpu.trace_start"() <{level = 10 : i32, message = "bqd,bkd->bqk"}> : () -> ()
    %cst_14 = arith.constant dense<0.000000e+00> : vector<8x8x8xf32>
    %47 = tpu.matmul %44, %45, %cst_14 {dimension_numbers = #tpu.dot_dimension_numbers<[2], [2], [1], [1], [0, 0, 0, 1, 1, 1], [0], [0]>} : vector<8x8x32xbf16>, vector<8x8x32xbf16>, vector<8x8x8xf32> -> vector<8x8x8xf32>
    "tpu.trace_stop"() : () -> ()
    %cst_15 = arith.constant dense<0xFF800000> : vector<8x8xf32>
    %48 = vector.multi_reduction <maximumf>, %47, %cst_15 [2] : vector<8x8x8xf32> to vector<8x8xf32>
    %49 = vector.shape_cast %48 : vector<8x8xf32> to vector<8x8x1xf32>
    %50 = vector.broadcast %49 : vector<8x8x1xf32> to vector<8x8x8xf32>
    %51 = arith.subf %47, %50 : vector<8x8x8xf32>
    %52 = math.exp %51 : vector<8x8x8xf32>
    %cst_16 = arith.constant dense<0.000000e+00> : vector<8x8xf32>
    %53 = vector.multi_reduction <add>, %52, %cst_16 [2] : vector<8x8x8xf32> to vector<8x8xf32>
    %54 = vector.shape_cast %53 : vector<8x8xf32> to vector<8x8x1xf32>
    %55 = tpu.reciprocal %54 {approx = true} : vector<8x8x1xf32> -> vector<8x8x1xf32>
    %56 = vector.broadcast %55 : vector<8x8x1xf32> to vector<8x8x8xf32>
    %57 = arith.mulf %52, %56 : vector<8x8x8xf32>
    %58 = arith.truncf %57 : vector<8x8x8xf32> to vector<8x8x8xbf16>
    "tpu.trace_start"() <{level = 10 : i32, message = "bqk,bkd->bqd"}> : () -> ()
    %cst_17 = arith.constant dense<0.000000e+00> : vector<8x8x32xf32>
    %59 = tpu.matmul %58, %46, %cst_17 {dimension_numbers = #tpu.dot_dimension_numbers<[2], [1], [1], [2], [0, 0, 0, 1, 1, 2], [0], [0]>} : vector<8x8x8xbf16>, vector<8x8x32xbf16>, vector<8x8x32xf32> -> vector<8x8x32xf32>
    "tpu.trace_stop"() : () -> ()
    %60 = tpu.concatenate %43, %59 in 2 : vector<8x8x32xf32>, vector<8x8x32xf32> -> vector<8x8x64xf32>
    %61 = vector.shape_cast %60 : vector<8x8x64xf32> to vector<64x64xf32>
    %62 = arith.truncf %61 : vector<64x64xf32> to vector<64x64xbf16>
    %c0_18 = arith.constant 0 : index
    %c0_19 = arith.constant 0 : index
    %63 = vector.load %arg5[%c0_18, %c0_19] : memref<64x64xbf16, #tpu.memory_space<vmem>>, vector<64x64xbf16>
    %cst_20 = arith.constant dense<0.000000e+00> : vector<64x64xf32>
    %64 = tpu.matmul %62, %63, %cst_20 {dimension_numbers = #tpu.dot_dimension_numbers<[1], [0], [0], [1], [0, 0, 1, 1], [], []>} : vector<64x64xbf16>, vector<64x64xbf16>, vector<64x64xf32> -> vector<64x64xf32>
    %65 = vector.broadcast %2 : vector<1x64xf32> to vector<64x64xf32>
    %66 = arith.addf %64, %65 : vector<64x64xf32>
    %67 = arith.addf %12, %66 : vector<64x64xf32>
    %cst_21 = arith.constant dense<0.000000e+00> : vector<64xf32>
    %68 = vector.multi_reduction <add>, %67, %cst_21 [1] : vector<64x64xf32> to vector<64xf32>
    %69 = vector.shape_cast %68 : vector<64xf32> to vector<64x1xf32>
    %cst_22 = arith.constant 6.400000e+01 : f32
    %70 = vector.broadcast %cst_22 : f32 to vector<64x1xf32>
    %71 = arith.divf %69, %70 : vector<64x1xf32>
    %72 = vector.broadcast %71 : vector<64x1xf32> to vector<64x64xf32>
    %73 = arith.subf %67, %72 : vector<64x64xf32>
    %74 = arith.mulf %73, %73 : vector<64x64xf32>
    %cst_23 = arith.constant dense<0.000000e+00> : vector<64xf32>
    %75 = vector.multi_reduction <add>, %74, %cst_23 [1] : vector<64x64xf32> to vector<64xf32>
    %76 = vector.shape_cast %75 : vector<64xf32> to vector<64x1xf32>
    %cst_24 = arith.constant 6.400000e+01 : f32
    %77 = vector.broadcast %cst_24 : f32 to vector<64x1xf32>
    %78 = arith.divf %76, %77 : vector<64x1xf32>
    %79 = vector.broadcast %71 : vector<64x1xf32> to vector<64x64xf32>
    %80 = arith.subf %67, %79 : vector<64x64xf32>
    %cst_25 = arith.constant 9.99999974E-6 : f32
    %81 = vector.broadcast %cst_25 : f32 to vector<64x1xf32>
    %82 = arith.addf %78, %81 : vector<64x1xf32>
    %83 = math.rsqrt %82 : vector<64x1xf32>
    %84 = vector.broadcast %83 : vector<64x1xf32> to vector<64x64xf32>
    %85 = arith.mulf %80, %84 : vector<64x64xf32>
    %86 = vector.broadcast %3 : vector<1x64xf32> to vector<64x64xf32>
    %87 = arith.mulf %85, %86 : vector<64x64xf32>
    %88 = vector.broadcast %4 : vector<1x64xf32> to vector<64x64xf32>
    %89 = arith.addf %87, %88 : vector<64x64xf32>
    %90 = arith.truncf %89 : vector<64x64xf32> to vector<64x64xbf16>
    %cst_26 = arith.constant 0.000000e+00 : f32
    %91 = vector.broadcast %cst_26 : f32 to vector<64x64xf32>
    %c0_27 = arith.constant 0 : index
    %c0_28 = arith.constant 0 : index
    %92 = vector.load %arg6[%c0_27, %c0_28] : memref<64x2048xbf16, #tpu.memory_space<vmem>>, vector<64x512xbf16>
    %cst_29 = arith.constant dense<0.000000e+00> : vector<64x512xf32>
    %93 = tpu.matmul %90, %92, %cst_29 {dimension_numbers = #tpu.dot_dimension_numbers<[1], [0], [0], [1], [0, 0, 1, 1], [], []>} : vector<64x64xbf16>, vector<64x512xbf16>, vector<64x512xf32> -> vector<64x512xf32>
    %c0_30 = arith.constant 0 : index
    %c0_31 = arith.constant 0 : index
    %94 = vector.load %arg7[%c0_30, %c0_31] : memref<1x2048xf32, #tpu.memory_space<vmem>>, vector<1x512xf32>
    %95 = vector.broadcast %94 : vector<1x512xf32> to vector<64x512xf32>
    %96 = arith.addf %93, %95 : vector<64x512xf32>
    %cst_32 = arith.constant 0.000000e+00 : f32
    %97 = vector.broadcast %cst_32 : f32 to vector<64x512xf32>
    %98 = arith.maximumf %96, %97 : vector<64x512xf32>
    %99 = arith.truncf %98 : vector<64x512xf32> to vector<64x512xbf16>
    %c0_33 = arith.constant 0 : index
    %c0_34 = arith.constant 0 : index
    %100 = vector.load %arg8[%c0_33, %c0_34] : memref<2048x64xbf16, #tpu.memory_space<vmem>>, vector<512x64xbf16>
    %cst_35 = arith.constant dense<0.000000e+00> : vector<64x64xf32>
    %101 = tpu.matmul %99, %100, %cst_35 {dimension_numbers = #tpu.dot_dimension_numbers<[1], [0], [0], [1], [0, 0, 1, 1], [], []>} : vector<64x512xbf16>, vector<512x64xbf16>, vector<64x64xf32> -> vector<64x64xf32>
    %102 = arith.addf %91, %101 : vector<64x64xf32>
    %c0_36 = arith.constant 0 : index
    %c512 = arith.constant 512 : index
    %103 = vector.load %arg6[%c0_36, %c512] : memref<64x2048xbf16, #tpu.memory_space<vmem>>, vector<64x512xbf16>
    %cst_37 = arith.constant dense<0.000000e+00> : vector<64x512xf32>
    %104 = tpu.matmul %90, %103, %cst_37 {dimension_numbers = #tpu.dot_dimension_numbers<[1], [0], [0], [1], [0, 0, 1, 1], [], []>} : vector<64x64xbf16>, vector<64x512xbf16>, vector<64x512xf32> -> vector<64x512xf32>
    %c0_38 = arith.constant 0 : index
    %c512_39 = arith.constant 512 : index
    %105 = vector.load %arg7[%c0_38, %c512_39] : memref<1x2048xf32, #tpu.memory_space<vmem>>, vector<1x512xf32>
    %106 = vector.broadcast %105 : vector<1x512xf32> to vector<64x512xf32>
    %107 = arith.addf %104, %106 : vector<64x512xf32>
    %cst_40 = arith.constant 0.000000e+00 : f32
    %108 = vector.broadcast %cst_40 : f32 to vector<64x512xf32>
    %109 = arith.maximumf %107, %108 : vector<64x512xf32>
    %110 = arith.truncf %109 : vector<64x512xf32> to vector<64x512xbf16>
    %c512_41 = arith.constant 512 : index
    %c0_42 = arith.constant 0 : index
    %111 = vector.load %arg8[%c512_41, %c0_42] : memref<2048x64xbf16, #tpu.memory_space<vmem>>, vector<512x64xbf16>
    %cst_43 = arith.constant dense<0.000000e+00> : vector<64x64xf32>
    %112 = tpu.matmul %110, %111, %cst_43 {dimension_numbers = #tpu.dot_dimension_numbers<[1], [0], [0], [1], [0, 0, 1, 1], [], []>} : vector<64x512xbf16>, vector<512x64xbf16>, vector<64x64xf32> -> vector<64x64xf32>
    %113 = arith.addf %102, %112 : vector<64x64xf32>
    %c0_44 = arith.constant 0 : index
    %c1024 = arith.constant 1024 : index
    %114 = vector.load %arg6[%c0_44, %c1024] : memref<64x2048xbf16, #tpu.memory_space<vmem>>, vector<64x512xbf16>
    %cst_45 = arith.constant dense<0.000000e+00> : vector<64x512xf32>
    %115 = tpu.matmul %90, %114, %cst_45 {dimension_numbers = #tpu.dot_dimension_numbers<[1], [0], [0], [1], [0, 0, 1, 1], [], []>} : vector<64x64xbf16>, vector<64x512xbf16>, vector<64x512xf32> -> vector<64x512xf32>
    %c0_46 = arith.constant 0 : index
    %c1024_47 = arith.constant 1024 : index
    %116 = vector.load %arg7[%c0_46, %c1024_47] : memref<1x2048xf32, #tpu.memory_space<vmem>>, vector<1x512xf32>
    %117 = vector.broadcast %116 : vector<1x512xf32> to vector<64x512xf32>
    %118 = arith.addf %115, %117 : vector<64x512xf32>
    %cst_48 = arith.constant 0.000000e+00 : f32
    %119 = vector.broadcast %cst_48 : f32 to vector<64x512xf32>
    %120 = arith.maximumf %118, %119 : vector<64x512xf32>
    %121 = arith.truncf %120 : vector<64x512xf32> to vector<64x512xbf16>
    %c1024_49 = arith.constant 1024 : index
    %c0_50 = arith.constant 0 : index
    %122 = vector.load %arg8[%c1024_49, %c0_50] : memref<2048x64xbf16, #tpu.memory_space<vmem>>, vector<512x64xbf16>
    %cst_51 = arith.constant dense<0.000000e+00> : vector<64x64xf32>
    %123 = tpu.matmul %121, %122, %cst_51 {dimension_numbers = #tpu.dot_dimension_numbers<[1], [0], [0], [1], [0, 0, 1, 1], [], []>} : vector<64x512xbf16>, vector<512x64xbf16>, vector<64x64xf32> -> vector<64x64xf32>
    %124 = arith.addf %113, %123 : vector<64x64xf32>
    %c0_52 = arith.constant 0 : index
    %c1536 = arith.constant 1536 : index
    %125 = vector.load %arg6[%c0_52, %c1536] : memref<64x2048xbf16, #tpu.memory_space<vmem>>, vector<64x512xbf16>
    %cst_53 = arith.constant dense<0.000000e+00> : vector<64x512xf32>
    %126 = tpu.matmul %90, %125, %cst_53 {dimension_numbers = #tpu.dot_dimension_numbers<[1], [0], [0], [1], [0, 0, 1, 1], [], []>} : vector<64x64xbf16>, vector<64x512xbf16>, vector<64x512xf32> -> vector<64x512xf32>
    %c0_54 = arith.constant 0 : index
    %c1536_55 = arith.constant 1536 : index
    %127 = vector.load %arg7[%c0_54, %c1536_55] : memref<1x2048xf32, #tpu.memory_space<vmem>>, vector<1x512xf32>
    %128 = vector.broadcast %127 : vector<1x512xf32> to vector<64x512xf32>
    %129 = arith.addf %126, %128 : vector<64x512xf32>
    %cst_56 = arith.constant 0.000000e+00 : f32
    %130 = vector.broadcast %cst_56 : f32 to vector<64x512xf32>
    %131 = arith.maximumf %129, %130 : vector<64x512xf32>
    %132 = arith.truncf %131 : vector<64x512xf32> to vector<64x512xbf16>
    %c1536_57 = arith.constant 1536 : index
    %c0_58 = arith.constant 0 : index
    %133 = vector.load %arg8[%c1536_57, %c0_58] : memref<2048x64xbf16, #tpu.memory_space<vmem>>, vector<512x64xbf16>
    %cst_59 = arith.constant dense<0.000000e+00> : vector<64x64xf32>
    %134 = tpu.matmul %132, %133, %cst_59 {dimension_numbers = #tpu.dot_dimension_numbers<[1], [0], [0], [1], [0, 0, 1, 1], [], []>} : vector<64x512xbf16>, vector<512x64xbf16>, vector<64x64xf32> -> vector<64x64xf32>
    %135 = arith.addf %124, %134 : vector<64x64xf32>
    %136 = vector.broadcast %7 : vector<1x64xf32> to vector<64x64xf32>
    %137 = arith.addf %135, %136 : vector<64x64xf32>
    %138 = arith.addf %89, %137 : vector<64x64xf32>
    %cst_60 = arith.constant dense<0.000000e+00> : vector<64xf32>
    %139 = vector.multi_reduction <add>, %138, %cst_60 [1] : vector<64x64xf32> to vector<64xf32>
    %140 = vector.shape_cast %139 : vector<64xf32> to vector<64x1xf32>
    %cst_61 = arith.constant 6.400000e+01 : f32
    %141 = vector.broadcast %cst_61 : f32 to vector<64x1xf32>
    %142 = arith.divf %140, %141 : vector<64x1xf32>
    %143 = vector.broadcast %142 : vector<64x1xf32> to vector<64x64xf32>
    %144 = arith.subf %138, %143 : vector<64x64xf32>
    %145 = arith.mulf %144, %144 : vector<64x64xf32>
    %cst_62 = arith.constant dense<0.000000e+00> : vector<64xf32>
    %146 = vector.multi_reduction <add>, %145, %cst_62 [1] : vector<64x64xf32> to vector<64xf32>
    %147 = vector.shape_cast %146 : vector<64xf32> to vector<64x1xf32>
    %cst_63 = arith.constant 6.400000e+01 : f32
    %148 = vector.broadcast %cst_63 : f32 to vector<64x1xf32>
    %149 = arith.divf %147, %148 : vector<64x1xf32>
    %150 = vector.broadcast %142 : vector<64x1xf32> to vector<64x64xf32>
    %151 = arith.subf %138, %150 : vector<64x64xf32>
    %cst_64 = arith.constant 9.99999974E-6 : f32
    %152 = vector.broadcast %cst_64 : f32 to vector<64x1xf32>
    %153 = arith.addf %149, %152 : vector<64x1xf32>
    %154 = math.rsqrt %153 : vector<64x1xf32>
    %155 = vector.broadcast %154 : vector<64x1xf32> to vector<64x64xf32>
    %156 = arith.mulf %151, %155 : vector<64x64xf32>
    %157 = vector.broadcast %5 : vector<1x64xf32> to vector<64x64xf32>
    %158 = arith.mulf %156, %157 : vector<64x64xf32>
    %159 = vector.broadcast %6 : vector<1x64xf32> to vector<64x64xf32>
    %160 = arith.addf %158, %159 : vector<64x64xf32>
    %161 = vector.shape_cast %160 : vector<64x64xf32> to vector<8x8x64xf32>
    %cst_65 = arith.constant dense<0.000000e+00> : vector<8x64xf32>
    %162 = vector.multi_reduction <add>, %161, %cst_65 [1] : vector<8x8x64xf32> to vector<8x64xf32>
    %cst_66 = arith.constant 1.250000e-01 : f32
    %163 = vector.broadcast %cst_66 : f32 to vector<8x64xf32>
    %164 = arith.mulf %162, %163 : vector<8x64xf32>
    %165 = arith.truncf %164 : vector<8x64xf32> to vector<8x64xbf16>
    %c0_67 = arith.constant 0 : index
    %c0_68 = arith.constant 0 : index
    %166 = vector.load %arg9[%c0_67, %c0_68] : memref<64x128xbf16, #tpu.memory_space<vmem>>, vector<64x128xbf16>
    %cst_69 = arith.constant dense<0.000000e+00> : vector<8x128xf32>
    %167 = tpu.matmul %165, %166, %cst_69 {dimension_numbers = #tpu.dot_dimension_numbers<[1], [0], [0], [1], [0, 0, 1, 1], [], []>} : vector<8x64xbf16>, vector<64x128xbf16>, vector<8x128xf32> -> vector<8x128xf32>
    %c0_70 = arith.constant 0 : index
    %c0_71 = arith.constant 0 : index
    %168 = vector.load %arg10[%c0_70, %c0_71] : memref<1x128xf32, #tpu.memory_space<vmem>>, vector<1x128xf32>
    %169 = vector.broadcast %168 : vector<1x128xf32> to vector<8x128xf32>
    %170 = arith.addf %167, %169 : vector<8x128xf32>
    %c0_72 = arith.constant 0 : index
    %c0_73 = arith.constant 0 : index
    %171 = vector.load %arg12[%c0_72, %c0_73] : memref<8x128xf32, #tpu.memory_space<vmem>>, vector<8x128xf32>
    tpu.vector_store %arg12[%c0_72, %c0_73], %170 {strides = array<i32>} : memref<8x128xf32, #tpu.memory_space<vmem>>, vector<8x128xf32>,
    return
  }
  func.func @transform_0(%arg0: i32) -> (i32, i32) {
    %c0_i32 = arith.constant 0 : i32
    %c0_i32_0 = arith.constant 0 : i32
    return %arg0, %c0_i32 : i32, i32
  }
  func.func @transform_1(%arg0: i32) -> (i32, i32) {
    %c0_i32 = arith.constant 0 : i32
    %c0_i32_0 = arith.constant 0 : i32
    %c0_i32_1 = arith.constant 0 : i32
    return %c0_i32, %c0_i32_0 : i32, i32
  }
  func.func @transform_2(%arg0: i32) -> (i32, i32) {
    %c0_i32 = arith.constant 0 : i32
    %c0_i32_0 = arith.constant 0 : i32
    %c0_i32_1 = arith.constant 0 : i32
    return %c0_i32, %c0_i32_0 : i32, i32
  }
  func.func @transform_3(%arg0: i32) -> (i32, i32) {
    %c0_i32 = arith.constant 0 : i32
    %c0_i32_0 = arith.constant 0 : i32
    %c0_i32_1 = arith.constant 0 : i32
    return %c0_i32, %c0_i32_0 : i32, i32
  }
  func.func @transform_4(%arg0: i32) -> (i32, i32) {
    %c0_i32 = arith.constant 0 : i32
    %c0_i32_0 = arith.constant 0 : i32
    %c0_i32_1 = arith.constant 0 : i32
    return %c0_i32, %c0_i32_0 : i32, i32
  }
  func.func @transform_5(%arg0: i32) -> (i32, i32) {
    %c0_i32 = arith.constant 0 : i32
    %c0_i32_0 = arith.constant 0 : i32
    %c0_i32_1 = arith.constant 0 : i32
    return %c0_i32, %c0_i32_0 : i32, i32
  }
  func.func @transform_6(%arg0: i32) -> (i32, i32) {
    %c0_i32 = arith.constant 0 : i32
    %c0_i32_0 = arith.constant 0 : i32
    %c0_i32_1 = arith.constant 0 : i32
    return %c0_i32, %c0_i32_0 : i32, i32
  }
  func.func @transform_7(%arg0: i32) -> (i32, i32) {
    %c0_i32 = arith.constant 0 : i32
    %c0_i32_0 = arith.constant 0 : i32
    %c0_i32_1 = arith.constant 0 : i32
    return %c0_i32, %c0_i32_0 : i32, i32
  }
  func.func @transform_8(%arg0: i32) -> (i32, i32) {
    %c0_i32 = arith.constant 0 : i32
    %c0_i32_0 = arith.constant 0 : i32
    %c0_i32_1 = arith.constant 0 : i32
    return %c0_i32, %c0_i32_0 : i32, i32
  }
  func.func @transform_9(%arg0: i32) -> (i32, i32) {
    %c0_i32 = arith.constant 0 : i32
    %c0_i32_0 = arith.constant 0 : i32
    %c0_i32_1 = arith.constant 0 : i32
    return %c0_i32, %c0_i32_0 : i32, i32
  }
  func.func @transform_10(%arg0: i32) -> (i32, i32) {
    %c0_i32 = arith.constant 0 : i32
    %c0_i32_0 = arith.constant 0 : i32
    %c0_i32_1 = arith.constant 0 : i32
    return %c0_i32, %c0_i32_0 : i32, i32
  }
  func.func @transform_11(%arg0: i32) -> (i32, i32) {
    %c0_i32 = arith.constant 0 : i32
    %c0_i32_0 = arith.constant 0 : i32
    return %arg0, %c0_i32 : i32, i32
  }
}

</mosaic_0001>

<llo_original>
// kernel: tpu_custom_call.1
$region0: #{tpu_custom_call.1}
  #allocation0 [shape = 'u32[]', space=smem, size = 0x4, offset = 0x4, fixed_abs, tag = 'smem constant byte address 0x4 - core index']
  #allocation1 [shape = 'u32[144,128]{1,0:T(1,128)}', space=vmem, size = 0x12000, scoped, tag = 'internal scratch']
  %s0 = inlined_call_operand.vmem [shape: bf16[64,16], index: 0, kind: input, shape index: {}]
  %s1 = inlined_call_operand.vmem [shape: bf16[16,64], index: 1, kind: input, shape index: {}]
  %s2 = inlined_call_operand.vmem [shape: bf16[64,192], index: 2, kind: input, shape index: {}]
  %s3 = inlined_call_operand.vmem [shape: f32[1,192], index: 3, kind: input, shape index: {}]
  %s4 = inlined_call_operand.vmem [shape: bf16[64,64], index: 4, kind: input, shape index: {}]
  %s5 = inlined_call_operand.vmem [shape: bf16[64,2048], index: 5, kind: input, shape index: {}]
  %s6 = inlined_call_operand.vmem [shape: f32[1,2048], index: 6, kind: input, shape index: {}]
  %s7 = inlined_call_operand.vmem [shape: bf16[2048,64], index: 7, kind: input, shape index: {}]
  %s8 = inlined_call_operand.vmem [shape: bf16[64,128], index: 8, kind: input, shape index: {}]
  %s9 = inlined_call_operand.vmem [shape: f32[1,128], index: 9, kind: input, shape index: {}]
  %s10 = inlined_call_operand.vmem [shape: f32[8,64], index: 10, kind: input, shape index: {}]
  %s11 = inlined_call_operand.hbm [shape: f32[8,128], index: 11, kind: output, shape index: {}]
  %s12 = sld [smem:[#allocation0]]
  $region54: #{tpu_custom_call.1} parent=0
    _
  %s14 = ssub.s32 1, %s12
  %s15 = scalar_select 0, %s14, %s12
  $region1: #{tpu_custom_call.1} parent=0
    #allocation2 [shape = 'u8[4096]{0}', space=vmem, size = 0x1000, scoped, tag = 'output window, operand 0, single buffered']
    #allocation3 [shape = 's32[1]{0}', space=sflag, size = 0x4, scoped, tag = 'scoped memory for tpu_custom_call.1']
    %16 = vsyncpa [#allocation3], 0
    // Predicated region
    $region2: #{tpu_custom_call.1} parent=1 // pred_check
      _
    $region3: #{tpu_custom_call.1} parent=1 // pred_check_branch
      %18 = sbr.rel (0) target = $region5
    $region4: #{tpu_custom_call.1} parent=1 // pred_region
      _
    $region5: #{tpu_custom_call.1} parent=1 // pred_fallthru
      _
    // Predicated region
    $region6: #{tpu_custom_call.1} parent=1 // pred_check
      _
    $region7: #{tpu_custom_call.1} parent=1 // pred_check_branch
      %20 = sbr.rel (0) target = $region9
    $region8: #{tpu_custom_call.1} parent=1 // pred_region
      _
    $region9: #{tpu_custom_call.1} parent=1 // pred_fallthru
      _
    // Predicated region
    $region10: #{tpu_custom_call.1} parent=1 // pred_check
      _
    $region11: #{tpu_custom_call.1} parent=1 // pred_check_branch
      %22 = sbr.rel (0) target = $region13
    $region12: #{tpu_custom_call.1} parent=1 // pred_region
      _
    $region13: #{tpu_custom_call.1} parent=1 // pred_fallthru
      _
    // Predicated region
    $region14: #{tpu_custom_call.1} parent=1 // pred_check
      _
    $region15: #{tpu_custom_call.1} parent=1 // pred_check_branch
      %24 = sbr.rel (0) target = $region17
    $region16: #{tpu_custom_call.1} parent=1 // pred_region
      _
    $region17: #{tpu_custom_call.1} parent=1 // pred_fallthru
      _
    // Predicated region
    $region18: #{tpu_custom_call.1} parent=1 // pred_check
      _
    $region19: #{tpu_custom_call.1} parent=1 // pred_check_branch
      %26 = sbr.rel (0) target = $region21
    $region20: #{tpu_custom_call.1} parent=1 // pred_region
      _
    $region21: #{tpu_custom_call.1} parent=1 // pred_fallthru
      _
    // Predicated region
    $region22: #{tpu_custom_call.1} parent=1 // pred_check
      _
    $region23: #{tpu_custom_call.1} parent=1 // pred_check_branch
      %28 = sbr.rel (0) target = $region25
    $region24: #{tpu_custom_call.1} parent=1 // pred_region
      _
    $region25: #{tpu_custom_call.1} parent=1 // pred_fallthru
      _
    // Predicated region
    $region26: #{tpu_custom_call.1} parent=1 // pred_check
      _
    $region27: #{tpu_custom_call.1} parent=1 // pred_check_branch
      %30 = sbr.rel (0) target = $region29
    $region28: #{tpu_custom_call.1} parent=1 // pred_region
      _
    $region29: #{tpu_custom_call.1} parent=1 // pred_fallthru
      _
    // Predicated region
    $region30: #{tpu_custom_call.1} parent=1 // pred_check
      _
    $region31: #{tpu_custom_call.1} parent=1 // pred_check_branch
      %32 = sbr.rel (0) target = $region33
    $region32: #{tpu_custom_call.1} parent=1 // pred_region
      _
    $region33: #{tpu_custom_call.1} parent=1 // pred_fallthru
      _
    // Predicated region
    $region34: #{tpu_custom_call.1} parent=1 // pred_check
      _
    $region35: #{tpu_custom_call.1} parent=1 // pred_check_branch
      %34 = sbr.rel (0) target = $region37
    $region36: #{tpu_custom_call.1} parent=1 // pred_region
      _
    $region37: #{tpu_custom_call.1} parent=1 // pred_fallthru
      _
    // Predicated region
    $region38: #{tpu_custom_call.1} parent=1 // pred_check
      _
    $region39: #{tpu_custom_call.1} parent=1 // pred_check_branch
      %36 = sbr.rel (0) target = $region41
    $region40: #{tpu_custom_call.1} parent=1 // pred_region
      _
    $region41: #{tpu_custom_call.1} parent=1 // pred_fallthru
      _
    // Predicated region
    $region42: #{tpu_custom_call.1} parent=1 // pred_check
      _
    $region43: #{tpu_custom_call.1} parent=1 // pred_check_branch
      %38 = sbr.rel (0) target = $region45
    $region44: #{tpu_custom_call.1} parent=1 // pred_region
      _
    $region45: #{tpu_custom_call.1} parent=1 // pred_fallthru
      _
    %v40 = vld [vmem:[%s10] sm:$0xff]
    %v41 = vld [vmem:[%s0] sm:$0xf]
    %v42 = vld [vmem:[%s0 + $0x4] sm:$0xf]
    %v43 = vld [vmem:[%s0 + $0x8] sm:$0xf]
    %v44 = vld [vmem:[%s0 + $0xc] sm:$0xf]
    %v45 = vld [vmem:[%s0 + $0x10] sm:$0xf]
    %v46 = vld [vmem:[%s0 + $0x14] sm:$0xf]
    %v47 = vld [vmem:[%s0 + $0x18] sm:$0xf]
    %v48 = vld [vmem:[%s0 + $0x1c] sm:$0xf]
    %v49 = vld [vmem:[%s1] sm:$0xf]
    %v50 = vld [vmem:[%s1 + $0x4] sm:$0xf]
    %v51 = vlaneseq
    %v52 = vshrl.u32 %v51, 7
    %v53 = vsub.s32 0, %v52
    %v54 = vrot.slane %v40, %v53
    %v63 = vunpack.c.l.b16 %v41
    %v64 = vunpack.c.l.b16 %v42
    %v65 = vunpack.c.l.b16 %v43
    %v66 = vunpack.c.l.b16 %v44
    %v67 = vunpack.c.l.b16 %v45
    %v68 = vunpack.c.l.b16 %v46
    %v69 = vunpack.c.l.b16 %v47
    %v70 = vunpack.c.l.b16 %v48
    %v71 = vpack.c.b16 %v64, %v63
    %v72 = vpack.c.b16 %v66, %v65
    %v73 = vpack.c.b16 %v68, %v67
    %v74 = vpack.c.b16 %v70, %v69
    %v77 = vunpack.c.l.b16 %v49
    %v78 = vunpack.c.l.b16 %v50
    %v79 = vpack.c.b16 %v78, %v77
    %vm81 = vcmask 130048
    %v83 = vsel %vm81, %v71, 0
    %v86 = vsel %vm81, %v72, 0
    %v89 = vsel %vm81, %v73, 0
    %v92 = vsel %vm81, %v74, 0
    %94 = vmatprep.subr.bf16.mxu0 0
    %95 = vmatpush1.bf16.msra.mxu0 0
    %96 = vmatprep.subr.bf16.mxu0 0
    %97 = vmatpush1.bf16.msra.mxu0 0
    %98 = vmatprep.subr.bf16.mxu0 0
    %99 = vmatpush1.bf16.msra.mxu0 0
    %100 = vmatprep.subr.bf16.mxu0 0
    %101 = vmatpush1.bf16.msra.mxu0 0
    %102 = vmatprep.subr.bf16.mxu0 0
    %103 = vmatpush1.bf16.msra.mxu0 0
    %104 = vmatprep.subr.bf16.mxu0 0
    %105 = vmatpush1.bf16.msra.mxu0 0
    %106 = vmatprep.subr.bf16.mxu0 0
    %107 = vmatpush1.bf16.msra.mxu0 0
    %108 = vmatprep.subr.bf16.mxu0 0
    %109 = vmatpush1.bf16.msra.mxu0 %v79
    %110 = vmatprep.subr.bf16.mxu0 0
    %111 = vmatpush2.bf16.msra.mxu0 0
    %112 = vmatprep.subr.bf16.mxu0 0
    %113 = vmatpush2.bf16.msra.mxu0 0
    %114 = vmatprep.subr.bf16.mxu0 0
    %115 = vmatpush2.bf16.msra.mxu0 0
    %116 = vmatprep.subr.bf16.mxu0 0
    %117 = vmatpush2.bf16.msra.mxu0 0
    %118 = vmatprep.subr.bf16.mxu0 0
    %119 = vmatpush2.bf16.msra.mxu0 0
    %120 = vmatprep.subr.bf16.mxu0 0
    %121 = vmatpush2.bf16.msra.mxu0 0
    %122 = vmatprep.subr.bf16.mxu0 0
    %123 = vmatpush2.bf16.msra.mxu0 0
    %124 = vmatprep.subr.bf16.mxu0 0
    %125 = vmatpush2.bf16.msra.mxu0 0
    %126 = vmatprep.mubr.bf16.mxu0 0
    %127 = vmatmul.mubr.bf16.gmra.mxu0 %v83
    %v128 = vpop.f32.mrf.mxu0
    %v129 = vadd.f32 %v54, %v128
    %v130 = vpop.f32.mrf.mxu0
    %v131 = vpop.f32.mrf.mxu0
    %v132 = vadd.f32 %v54, %v131
    %v133 = vpop.f32.mrf.mxu0
    %134 = vmatprep.mubr.bf16.mxu0 0
    %135 = vmatmul.mubr.bf16.gmra.mxu0 %v86
    %v136 = vpop.f32.mrf.mxu0
    %v137 = vadd.f32 %v54, %v136
    %v138 = vpop.f32.mrf.mxu0
    %v139 = vpop.f32.mrf.mxu0
    %v140 = vadd.f32 %v54, %v139
    %v141 = vpop.f32.mrf.mxu0
    %142 = vmatprep.mubr.bf16.mxu0 0
    %143 = vmatmul.mubr.bf16.gmra.mxu0 %v89
    %v144 = vpop.f32.mrf.mxu0
    %v145 = vadd.f32 %v54, %v144
    %v146 = vpop.f32.mrf.mxu0
    %v147 = vpop.f32.mrf.mxu0
    %v148 = vadd.f32 %v54, %v147
    %v149 = vpop.f32.mrf.mxu0
    %150 = vmatprep.mubr.bf16.mxu0 0
    %151 = vmatmul.mubr.bf16.gmra.mxu0 %v92
    %v152 = vpop.f32.mrf.mxu0
    %v153 = vadd.f32 %v54, %v152
    %v154 = vpop.f32.mrf.mxu0
    %v155 = vpop.f32.mrf.mxu0
    %v156 = vadd.f32 %v54, %v155
    %v157 = vpop.f32.mrf.mxu0
    %158 = vdwg.mxu0
    %v159 = vpack.c.bf16 %v132, %v129
    %v160 = vpack.c.bf16 %v140, %v137
    %v161 = vpack.c.bf16 %v148, %v145
    %v162 = vpack.c.bf16 %v156, %v153
    %v163 = vld [vmem:[%s2] sm:$0xff]
    %v164 = vld [vmem:[%s2 + $0x8] sm:$0xff]
    %v165 = vld [vmem:[%s2 + $0x10] sm:$0xff]
    %v166 = vld [vmem:[%s2 + $0x18] sm:$0xff]
    %v167 = vld [vmem:[%s2 + $0x20] sm:$0xff]
    %v168 = vld [vmem:[%s2 + $0x28] sm:$0xff]
    %v169 = vld [vmem:[%s2 + $0x30] sm:$0xff]
    %v170 = vld [vmem:[%s2 + $0x38] sm:$0xff]
    %v171 = vld [vmem:[%s3] sm:$0x3]
    %v173 = vlaneseq
    %v174 = vshrl.u32 %v173, 7
    %v175 = vsub.s32 0, %v174
    %v176 = vrot.slane %v171, %v175
    %v177 = vlaneseq
    %v178 = vshrl.u32 %v177, 7
    %v179 = vsub.s32 1, %v178
    %v180 = vrot.slane %v171, %v179
    %v191 = vunpack.c.l.b16 %v163
    %v192 = vunpack.c.h.b16 %v163
    %v193 = vunpack.c.l.b16 %v164
    %v194 = vunpack.c.h.b16 %v164
    %v195 = vunpack.c.l.b16 %v165
    %v196 = vunpack.c.h.b16 %v165
    %v197 = vunpack.c.l.b16 %v166
    %v198 = vunpack.c.h.b16 %v166
    %v199 = vunpack.c.l.b16 %v167
    %v200 = vunpack.c.h.b16 %v167
    %v201 = vunpack.c.l.b16 %v168
    %v202 = vunpack.c.h.b16 %v168
    %v203 = vunpack.c.l.b16 %v169
    %v204 = vunpack.c.h.b16 %v169
    %v205 = vunpack.c.l.b16 %v170
    %v206 = vunpack.c.h.b16 %v170
    %v207 = vpack.c.b16 %v193, %v191
    %v208 = vpack.c.b16 %v194, %v192
    %v209 = vpack.c.b16 %v197, %v195
    %v210 = vpack.c.b16 %v198, %v196
    %v211 = vpack.c.b16 %v201, %v199
    %v212 = vpack.c.b16 %v202, %v200
    %v213 = vpack.c.b16 %v205, %v203
    %v214 = vpack.c.b16 %v206, %v204
    %vm223 = vcmask 523264
    %v225 = vsel %vm223, %v159, 0
    %v228 = vsel %vm223, %v160, 0
    %v231 = vsel %vm223, %v161, 0
    %v234 = vsel %vm223, %v162, 0
    %236 = vmatprep.subr.bf16.mxu0 0
    %237 = vmatpush1.bf16.msra.mxu0 0
    %238 = vmatprep.subr.bf16.mxu0 0
    %239 = vmatpush1.bf16.msra.mxu0 0
    %240 = vmatprep.subr.bf16.mxu0 0
    %241 = vmatpush1.bf16.msra.mxu0 0
    %242 = vmatprep.subr.bf16.mxu0 0
    %243 = vmatpush1.bf16.msra.mxu0 0
    %244 = vmatprep.subr.bf16.mxu0 %v214
    %245 = vmatpush1.bf16.msra.mxu0 %v213
    %246 = vmatprep.subr.bf16.mxu0 %v212
    %247 = vmatpush1.bf16.msra.mxu0 %v211
    %248 = vmatprep.subr.bf16.mxu0 %v210
    %249 = vmatpush1.bf16.msra.mxu0 %v209
    %250 = vmatprep.subr.bf16.mxu0 %v208
    %251 = vmatpush1.bf16.msra.mxu0 %v207
    %252 = vmatprep.subr.bf16.mxu0 0
    %253 = vmatpush2.bf16.msra.mxu0 0
    %254 = vmatprep.subr.bf16.mxu0 0
    %255 = vmatpush2.bf16.msra.mxu0 0
    %256 = vmatprep.subr.bf16.mxu0 0
    %257 = vmatpush2.bf16.msra.mxu0 0
    %258 = vmatprep.subr.bf16.mxu0 0
    %259 = vmatpush2.bf16.msra.mxu0 0
    %260 = vmatprep.subr.bf16.mxu0 0
    %261 = vmatpush2.bf16.msra.mxu0 0
    %262 = vmatprep.subr.bf16.mxu0 0
    %263 = vmatpush2.bf16.msra.mxu0 0
    %264 = vmatprep.subr.bf16.mxu0 0
    %265 = vmatpush2.bf16.msra.mxu0 0
    %266 = vmatprep.subr.bf16.mxu0 0
    %267 = vmatpush2.bf16.msra.mxu0 0
    %268 = vmatprep.mubr.bf16.mxu0 0
    %269 = vmatmul.mubr.bf16.gmra.mxu0 %v225
    %v270 = vpop.f32.mrf.mxu0
    %v271 = vadd.f32 %v176, %v270
    %v272 = vpop.f32.mrf.mxu0
    %v273 = vadd.f32 %v180, %v272
    %v274 = vpop.f32.mrf.mxu0
    %v275 = vadd.f32 %v176, %v274
    %v276 = vpop.f32.mrf.mxu0
    %v277 = vadd.f32 %v180, %v276
    %278 = vmatprep.mubr.bf16.mxu0 0
    %279 = vmatmul.mubr.bf16.gmra.mxu0 %v228
    %v280 = vpop.f32.mrf.mxu0
    %v281 = vadd.f32 %v176, %v280
    %v282 = vpop.f32.mrf.mxu0
    %v283 = vadd.f32 %v180, %v282
    %v284 = vpop.f32.mrf.mxu0
    %v285 = vadd.f32 %v176, %v284
    %v286 = vpop.f32.mrf.mxu0
    %v287 = vadd.f32 %v180, %v286
    %288 = vmatprep.mubr.bf16.mxu0 0
    %289 = vmatmul.mubr.bf16.gmra.mxu0 %v231
    %v290 = vpop.f32.mrf.mxu0
    %v291 = vadd.f32 %v176, %v290
    %v292 = vpop.f32.mrf.mxu0
    %v293 = vadd.f32 %v180, %v292
    %v294 = vpop.f32.mrf.mxu0
    %v295 = vadd.f32 %v176, %v294
    %v296 = vpop.f32.mrf.mxu0
    %v297 = vadd.f32 %v180, %v296
    %298 = vmatprep.mubr.bf16.mxu0 0
    %299 = vmatmul.mubr.bf16.gmra.mxu0 %v234
    %v300 = vpop.f32.mrf.mxu0
    %v301 = vadd.f32 %v176, %v300
    %v302 = vpop.f32.mrf.mxu0
    %v303 = vadd.f32 %v180, %v302
    %v304 = vpop.f32.mrf.mxu0
    %v305 = vadd.f32 %v176, %v304
    %v306 = vpop.f32.mrf.mxu0
    %v307 = vadd.f32 %v180, %v306
    %308 = vdwg.mxu0
    %v309 = vpack.c.bf16 %v271, %v271
    %v310 = vpack.c.bf16 %v275, %v275
    %v311 = vpack.c.bf16 %v281, %v281
    %v312 = vpack.c.bf16 %v285, %v285
    %v313 = vpack.c.bf16 %v291, %v291
    %v314 = vpack.c.bf16 %v295, %v295
    %v315 = vpack.c.bf16 %v301, %v301
    %v316 = vpack.c.bf16 %v305, %v305
    %v317 = vpack.c.bf16 %v273, %v273
    %v318 = vpack.c.bf16 %v277, %v277
    %v319 = vpack.c.bf16 %v283, %v283
    %v320 = vpack.c.bf16 %v287, %v287
    %v321 = vpack.c.bf16 %v293, %v293
    %v322 = vpack.c.bf16 %v297, %v297
    %v323 = vpack.c.bf16 %v303, %v303
    %v324 = vpack.c.bf16 %v307, %v307
    %326 = vrot.lane.b32.xlu0 %v309, 64
    %v327 = vpop.permute.xlu0 %326
    %vm328 = vcmask 261120
    %v330 = vsel %vm328, %v309, 0
    %v333 = vsel %vm328, %v327, 0
    %335 = vmatprep.subr.bf16.mxu0 0
    %336 = vmatpush1.bf16.xpose.msra.mxu0 0
    %337 = vmatprep.subr.bf16.mxu0 0
    %338 = vmatpush1.bf16.xpose.msra.mxu0 0
    %339 = vmatprep.subr.bf16.mxu0 0
    %340 = vmatpush1.bf16.xpose.msra.mxu0 0
    %341 = vmatprep.subr.bf16.mxu0 0
    %342 = vmatpush1.bf16.xpose.msra.mxu0 0
    %343 = vmatprep.subr.bf16.mxu0 0
    %344 = vmatpush1.bf16.xpose.msra.mxu0 0
    %345 = vmatprep.subr.bf16.mxu0 0
    %346 = vmatpush1.bf16.xpose.msra.mxu0 0
    %347 = vmatprep.subr.bf16.mxu0 0
    %348 = vmatpush1.bf16.xpose.msra.mxu0 0
    %349 = vmatprep.subr.bf16.mxu0 0
    %350 = vmatpush1.bf16.xpose.msra.mxu0 %v333
    %351 = vmatprep.subr.bf16.mxu0 0
    %352 = vmatpush2.bf16.xpose.msra.mxu0 0
    %353 = vmatprep.subr.bf16.mxu0 0
    %354 = vmatpush2.bf16.xpose.msra.mxu0 0
    %355 = vmatprep.subr.bf16.mxu0 0
    %356 = vmatpush2.bf16.xpose.msra.mxu0 0
    %357 = vmatprep.subr.bf16.mxu0 0
    %358 = vmatpush2.bf16.xpose.msra.mxu0 0
    %359 = vmatprep.subr.bf16.mxu0 0
    %360 = vmatpush2.bf16.xpose.msra.mxu0 0
    %361 = vmatprep.subr.bf16.mxu0 0
    %362 = vmatpush2.bf16.xpose.msra.mxu0 0
    %363 = vmatprep.subr.bf16.mxu0 0
    %364 = vmatpush2.bf16.xpose.msra.mxu0 0
    %365 = vmatprep.subr.bf16.mxu0 0
    %366 = vmatpush2.bf16.xpose.msra.mxu0 0
    %367 = vmatprep.mubr.bf16.mxu0 0
    %368 = vmatmul.mubr.bf16.gmra.mxu0 %v330
    %v369 = vpop.f32.mrf.mxu0
    %v370 = vadd.f32 0.0, %v369
    %v371 = vpop.f32.mrf.mxu0
    %v372 = vpop.f32.mrf.mxu0
    %v373 = vpop.f32.mrf.mxu0
    %374 = vdwg.mxu0
    %376 = vrot.lane.b32.xlu0 %v310, 64
    %v377 = vpop.permute.xlu0 %376
    %v379 = vsel %vm328, %v310, 0
    %v382 = vsel %vm328, %v377, 0
    %384 = vmatprep.subr.bf16.mxu0 0
    %385 = vmatpush1.bf16.xpose.msra.mxu0 0
    %386 = vmatprep.subr.bf16.mxu0 0
    %387 = vmatpush1.bf16.xpose.msra.mxu0 0
    %388 = vmatprep.subr.bf16.mxu0 0
    %389 = vmatpush1.bf16.xpose.msra.mxu0 0
    %390 = vmatprep.subr.bf16.mxu0 0
    %391 = vmatpush1.bf16.xpose.msra.mxu0 0
    %392 = vmatprep.subr.bf16.mxu0 0
    %393 = vmatpush1.bf16.xpose.msra.mxu0 0
    %394 = vmatprep.subr.bf16.mxu0 0
    %395 = vmatpush1.bf16.xpose.msra.mxu0 0
    %396 = vmatprep.subr.bf16.mxu0 0
    %397 = vmatpush1.bf16.xpose.msra.mxu0 0
    %398 = vmatprep.subr.bf16.mxu0 0
    %399 = vmatpush1.bf16.xpose.msra.mxu0 %v382
    %400 = vmatprep.subr.bf16.mxu0 0
    %401 = vmatpush2.bf16.xpose.msra.mxu0 0
    %402 = vmatprep.subr.bf16.mxu0 0
    %403 = vmatpush2.bf16.xpose.msra.mxu0 0
    %404 = vmatprep.subr.bf16.mxu0 0
    %405 = vmatpush2.bf16.xpose.msra.mxu0 0
    %406 = vmatprep.subr.bf16.mxu0 0
    %407 = vmatpush2.bf16.xpose.msra.mxu0 0
    %408 = vmatprep.subr.bf16.mxu0 0
    %409 = vmatpush2.bf16.xpose.msra.mxu0 0
    %410 = vmatprep.subr.bf16.mxu0 0
    %411 = vmatpush2.bf16.xpose.msra.mxu0 0
    %412 = vmatprep.subr.bf16.mxu0 0
    %413 = vmatpush2.bf16.xpose.msra.mxu0 0
    %414 = vmatprep.subr.bf16.mxu0 0
    %415 = vmatpush2.bf16.xpose.msra.mxu0 0
    %416 = vmatprep.mubr.bf16.mxu0 0
    %417 = vmatmul.mubr.bf16.gmra.mxu0 %v379
    %v418 = vpop.f32.mrf.mxu0
    %v419 = vadd.f32 0.0, %v418
    %v420 = vpop.f32.mrf.mxu0
    %v421 = vpop.f32.mrf.mxu0
    %v422 = vpop.f32.mrf.mxu0
    %423 = vdwg.mxu0
    %425 = vrot.lane.b32.xlu0 %v311, 64
    %v426 = vpop.permute.xlu0 %425
    %v428 = vsel %vm328, %v311, 0
    %v431 = vsel %vm328, %v426, 0
    %433 = vmatprep.subr.bf16.mxu0 0
    %434 = vmatpush1.bf16.xpose.msra.mxu0 0
    %435 = vmatprep.subr.bf16.mxu0 0
    %436 = vmatpush1.bf16.xpose.msra.mxu0 0
    %437 = vmatprep.subr.bf16.mxu0 0
    %438 = vmatpush1.bf16.xpose.msra.mxu0 0
    %439 = vmatprep.subr.bf16.mxu0 0
    %440 = vmatpush1.bf16.xpose.msra.mxu0 0
    %441 = vmatprep.subr.bf16.mxu0 0
    %442 = vmatpush1.bf16.xpose.msra.mxu0 0
    %443 = vmatprep.subr.bf16.mxu0 0
    %444 = vmatpush1.bf16.xpose.msra.mxu0 0
    %445 = vmatprep.subr.bf16.mxu0 0
    %446 = vmatpush1.bf16.xpose.msra.mxu0 0
    %447 = vmatprep.subr.bf16.mxu0 0
    %448 = vmatpush1.bf16.xpose.msra.mxu0 %v431
    %449 = vmatprep.subr.bf16.mxu0 0
    %450 = vmatpush2.bf16.xpose.msra.mxu0 0
    %451 = vmatprep.subr.bf16.mxu0 0
    %452 = vmatpush2.bf16.xpose.msra.mxu0 0
    %453 = vmatprep.subr.bf16.mxu0 0
    %454 = vmatpush2.bf16.xpose.msra.mxu0 0
    %455 = vmatprep.subr.bf16.mxu0 0
    %456 = vmatpush2.bf16.xpose.msra.mxu0 0
    %457 = vmatprep.subr.bf16.mxu0 0
    %458 = vmatpush2.bf16.xpose.msra.mxu0 0
    %459 = vmatprep.subr.bf16.mxu0 0
    %460 = vmatpush2.bf16.xpose.msra.mxu0 0
    %461 = vmatprep.subr.bf16.mxu0 0
    %462 = vmatpush2.bf16.xpose.msra.mxu0 0
    %463 = vmatprep.subr.bf16.mxu0 0
    %464 = vmatpush2.bf16.xpose.msra.mxu0 0
    %465 = vmatprep.mubr.bf16.mxu0 0
    %466 = vmatmul.mubr.bf16.gmra.mxu0 %v428
    %v467 = vpop.f32.mrf.mxu0
    %v468 = vadd.f32 0.0, %v467
    %v469 = vpop.f32.mrf.mxu0
    %v470 = vpop.f32.mrf.mxu0
    %v471 = vpop.f32.mrf.mxu0
    %472 = vdwg.mxu0
    %474 = vrot.lane.b32.xlu0 %v312, 64
    %v475 = vpop.permute.xlu0 %474
    %v477 = vsel %vm328, %v312, 0
    %v480 = vsel %vm328, %v475, 0
    %482 = vmatprep.subr.bf16.mxu0 0
    %483 = vmatpush1.bf16.xpose.msra.mxu0 0
    %484 = vmatprep.subr.bf16.mxu0 0
    %485 = vmatpush1.bf16.xpose.msra.mxu0 0
    %486 = vmatprep.subr.bf16.mxu0 0
    %487 = vmatpush1.bf16.xpose.msra.mxu0 0
    %488 = vmatprep.subr.bf16.mxu0 0
    %489 = vmatpush1.bf16.xpose.msra.mxu0 0
    %490 = vmatprep.subr.bf16.mxu0 0
    %491 = vmatpush1.bf16.xpose.msra.mxu0 0
    %492 = vmatprep.subr.bf16.mxu0 0
    %493 = vmatpush1.bf16.xpose.msra.mxu0 0
    %494 = vmatprep.subr.bf16.mxu0 0
    %495 = vmatpush1.bf16.xpose.msra.mxu0 0
    %496 = vmatprep.subr.bf16.mxu0 0
    %497 = vmatpush1.bf16.xpose.msra.mxu0 %v480
    %498 = vmatprep.subr.bf16.mxu0 0
    %499 = vmatpush2.bf16.xpose.msra.mxu0 0
    %500 = vmatprep.subr.bf16.mxu0 0
    %501 = vmatpush2.bf16.xpose.msra.mxu0 0
    %502 = vmatprep.subr.bf16.mxu0 0
    %503 = vmatpush2.bf16.xpose.msra.mxu0 0
    %504 = vmatprep.subr.bf16.mxu0 0
    %505 = vmatpush2.bf16.xpose.msra.mxu0 0
    %506 = vmatprep.subr.bf16.mxu0 0
    %507 = vmatpush2.bf16.xpose.msra.mxu0 0
    %508 = vmatprep.subr.bf16.mxu0 0
    %509 = vmatpush2.bf16.xpose.msra.mxu0 0
    %510 = vmatprep.subr.bf16.mxu0 0
    %511 = vmatpush2.bf16.xpose.msra.mxu0 0
    %512 = vmatprep.subr.bf16.mxu0 0
    %513 = vmatpush2.bf16.xpose.msra.mxu0 0
    %514 = vmatprep.mubr.bf16.mxu0 0
    %515 = vmatmul.mubr.bf16.gmra.mxu0 %v477
    %v516 = vpop.f32.mrf.mxu0
    %v517 = vadd.f32 0.0, %v516
    %v518 = vpop.f32.mrf.mxu0
    %v519 = vpop.f32.mrf.mxu0
    %v520 = vpop.f32.mrf.mxu0
    %521 = vdwg.mxu0
    %523 = vrot.lane.b32.xlu0 %v313, 64
    %v524 = vpop.permute.xlu0 %523
    %v526 = vsel %vm328, %v313, 0
    %v529 = vsel %vm328, %v524, 0
    %531 = vmatprep.subr.bf16.mxu0 0
    %532 = vmatpush1.bf16.xpose.msra.mxu0 0
    %533 = vmatprep.subr.bf16.mxu0 0
    %534 = vmatpush1.bf16.xpose.msra.mxu0 0
    %535 = vmatprep.subr.bf16.mxu0 0
    %536 = vmatpush1.bf16.xpose.msra.mxu0 0
    %537 = vmatprep.subr.bf16.mxu0 0
    %538 = vmatpush1.bf16.xpose.msra.mxu0 0
    %539 = vmatprep.subr.bf16.mxu0 0
    %540 = vmatpush1.bf16.xpose.msra.mxu0 0
    %541 = vmatprep.subr.bf16.mxu0 0
    %542 = vmatpush1.bf16.xpose.msra.mxu0 0
    %543 = vmatprep.subr.bf16.mxu0 0
    %544 = vmatpush1.bf16.xpose.msra.mxu0 0
    %545 = vmatprep.subr.bf16.mxu0 0
    %546 = vmatpush1.bf16.xpose.msra.mxu0 %v529
    %547 = vmatprep.subr.bf16.mxu0 0
    %548 = vmatpush2.bf16.xpose.msra.mxu0 0
    %549 = vmatprep.subr.bf16.mxu0 0
    %550 = vmatpush2.bf16.xpose.msra.mxu0 0
    %551 = vmatprep.subr.bf16.mxu0 0
    %552 = vmatpush2.bf16.xpose.msra.mxu0 0
    %553 = vmatprep.subr.bf16.mxu0 0
    %554 = vmatpush2.bf16.xpose.msra.mxu0 0
    %555 = vmatprep.subr.bf16.mxu0 0
    %556 = vmatpush2.bf16.xpose.msra.mxu0 0
    %557 = vmatprep.subr.bf16.mxu0 0
    %558 = vmatpush2.bf16.xpose.msra.mxu0 0
    %559 = vmatprep.subr.bf16.mxu0 0
    %560 = vmatpush2.bf16.xpose.msra.mxu0 0
    %561 = vmatprep.subr.bf16.mxu0 0
    %562 = vmatpush2.bf16.xpose.msra.mxu0 0
    %563 = vmatprep.mubr.bf16.mxu0 0
    %564 = vmatmul.mubr.bf16.gmra.mxu0 %v526
    %v565 = vpop.f32.mrf.mxu0
    %v566 = vadd.f32 0.0, %v565
    %v567 = vpop.f32.mrf.mxu0
    %v568 = vpop.f32.mrf.mxu0
    %v569 = vpop.f32.mrf.mxu0
    %570 = vdwg.mxu0
    %572 = vrot.lane.b32.xlu0 %v314, 64
    %v573 = vpop.permute.xlu0 %572
    %v575 = vsel %vm328, %v314, 0
    %v578 = vsel %vm328, %v573, 0
    %580 = vmatprep.subr.bf16.mxu0 0
    %581 = vmatpush1.bf16.xpose.msra.mxu0 0
    %582 = vmatprep.subr.bf16.mxu0 0
    %583 = vmatpush1.bf16.xpose.msra.mxu0 0
    %584 = vmatprep.subr.bf16.mxu0 0
    %585 = vmatpush1.bf16.xpose.msra.mxu0 0
    %586 = vmatprep.subr.bf16.mxu0 0
    %587 = vmatpush1.bf16.xpose.msra.mxu0 0
    %588 = vmatprep.subr.bf16.mxu0 0
    %589 = vmatpush1.bf16.xpose.msra.mxu0 0
    %590 = vmatprep.subr.bf16.mxu0 0
    %591 = vmatpush1.bf16.xpose.msra.mxu0 0
    %592 = vmatprep.subr.bf16.mxu0 0
    %593 = vmatpush1.bf16.xpose.msra.mxu0 0
    %594 = vmatprep.subr.bf16.mxu0 0
    %595 = vmatpush1.bf16.xpose.msra.mxu0 %v578
    %596 = vmatprep.subr.bf16.mxu0 0
    %597 = vmatpush2.bf16.xpose.msra.mxu0 0
    %598 = vmatprep.subr.bf16.mxu0 0
    %599 = vmatpush2.bf16.xpose.msra.mxu0 0
    %600 = vmatprep.subr.bf16.mxu0 0
    %601 = vmatpush2.bf16.xpose.msra.mxu0 0
    %602 = vmatprep.subr.bf16.mxu0 0
    %603 = vmatpush2.bf16.xpose.msra.mxu0 0
    %604 = vmatprep.subr.bf16.mxu0 0
    %605 = vmatpush2.bf16.xpose.msra.mxu0 0
    %606 = vmatprep.subr.bf16.mxu0 0
    %607 = vmatpush2.bf16.xpose.msra.mxu0 0
    %608 = vmatprep.subr.bf16.mxu0 0
    %609 = vmatpush2.bf16.xpose.msra.mxu0 0
    %610 = vmatprep.subr.bf16.mxu0 0
    %611 = vmatpush2.bf16.xpose.msra.mxu0 0
    %612 = vmatprep.mubr.bf16.mxu0 0
    %613 = vmatmul.mubr.bf16.gmra.mxu0 %v575
    %v614 = vpop.f32.mrf.mxu0
    %v615 = vadd.f32 0.0, %v614
    %v616 = vpop.f32.mrf.mxu0
    %v617 = vpop.f32.mrf.mxu0
    %v618 = vpop.f32.mrf.mxu0
    %619 = vdwg.mxu0
    %621 = vrot.lane.b32.xlu0 %v315, 64
    %v622 = vpop.permute.xlu0 %621
    %v624 = vsel %vm328, %v315, 0
    %v627 = vsel %vm328, %v622, 0
    %629 = vmatprep.subr.bf16.mxu0 0
    %630 = vmatpush1.bf16.xpose.msra.mxu0 0
    %631 = vmatprep.subr.bf16.mxu0 0
    %632 = vmatpush1.bf16.xpose.msra.mxu0 0
    %633 = vmatprep.subr.bf16.mxu0 0
    %634 = vmatpush1.bf16.xpose.msra.mxu0 0
    %635 = vmatprep.subr.bf16.mxu0 0
    %636 = vmatpush1.bf16.xpose.msra.mxu0 0
    %637 = vmatprep.subr.bf16.mxu0 0
    %638 = vmatpush1.bf16.xpose.msra.mxu0 0
    %639 = vmatprep.subr.bf16.mxu0 0
    %640 = vmatpush1.bf16.xpose.msra.mxu0 0
    %641 = vmatprep.subr.bf16.mxu0 0
    %642 = vmatpush1.bf16.xpose.msra.mxu0 0
    %643 = vmatprep.subr.bf16.mxu0 0
    %644 = vmatpush1.bf16.xpose.msra.mxu0 %v627
    %645 = vmatprep.subr.bf16.mxu0 0
    %646 = vmatpush2.bf16.xpose.msra.mxu0 0
    %647 = vmatprep.subr.bf16.mxu0 0
    %648 = vmatpush2.bf16.xpose.msra.mxu0 0
    %649 = vmatprep.subr.bf16.mxu0 0
    %650 = vmatpush2.bf16.xpose.msra.mxu0 0
    %651 = vmatprep.subr.bf16.mxu0 0
    %652 = vmatpush2.bf16.xpose.msra.mxu0 0
    %653 = vmatprep.subr.bf16.mxu0 0
    %654 = vmatpush2.bf16.xpose.msra.mxu0 0
    %655 = vmatprep.subr.bf16.mxu0 0
    %656 = vmatpush2.bf16.xpose.msra.mxu0 0
    %657 = vmatprep.subr.bf16.mxu0 0
    %658 = vmatpush2.bf16.xpose.msra.mxu0 0
    %659 = vmatprep.subr.bf16.mxu0 0
    %660 = vmatpush2.bf16.xpose.msra.mxu0 0
    %661 = vmatprep.mubr.bf16.mxu0 0
    %662 = vmatmul.mubr.bf16.gmra.mxu0 %v624
    %v663 = vpop.f32.mrf.mxu0
    %v664 = vadd.f32 0.0, %v663
    %v665 = vpop.f32.mrf.mxu0
    %v666 = vpop.f32.mrf.mxu0
    %v667 = vpop.f32.mrf.mxu0
    %668 = vdwg.mxu0
    %670 = vrot.lane.b32.xlu0 %v316, 64
    %v671 = vpop.permute.xlu0 %670
    %v673 = vsel %vm328, %v316, 0
    %v676 = vsel %vm328, %v671, 0
    %678 = vmatprep.subr.bf16.mxu0 0
    %679 = vmatpush1.bf16.xpose.msra.mxu0 0
    %680 = vmatprep.subr.bf16.mxu0 0
    %681 = vmatpush1.bf16.xpose.msra.mxu0 0
    %682 = vmatprep.subr.bf16.mxu0 0
    %683 = vmatpush1.bf16.xpose.msra.mxu0 0
    %684 = vmatprep.subr.bf16.mxu0 0
    %685 = vmatpush1.bf16.xpose.msra.mxu0 0
    %686 = vmatprep.subr.bf16.mxu0 0
    %687 = vmatpush1.bf16.xpose.msra.mxu0 0
    %688 = vmatprep.subr.bf16.mxu0 0
    %689 = vmatpush1.bf16.xpose.msra.mxu0 0
    %690 = vmatprep.subr.bf16.mxu0 0
    %691 = vmatpush1.bf16.xpose.msra.mxu0 0
    %692 = vmatprep.subr.bf16.mxu0 0
    %693 = vmatpush1.bf16.xpose.msra.mxu0 %v676
    %694 = vmatprep.subr.bf16.mxu0 0
    %695 = vmatpush2.bf16.xpose.msra.mxu0 0
    %696 = vmatprep.subr.bf16.mxu0 0
    %697 = vmatpush2.bf16.xpose.msra.mxu0 0
    %698 = vmatprep.subr.bf16.mxu0 0
    %699 = vmatpush2.bf16.xpose.msra.mxu0 0
    %700 = vmatprep.subr.bf16.mxu0 0
    %701 = vmatpush2.bf16.xpose.msra.mxu0 0
    %702 = vmatprep.subr.bf16.mxu0 0
    %703 = vmatpush2.bf16.xpose.msra.mxu0 0
    %704 = vmatprep.subr.bf16.mxu0 0
    %705 = vmatpush2.bf16.xpose.msra.mxu0 0
    %706 = vmatprep.subr.bf16.mxu0 0
    %707 = vmatpush2.bf16.xpose.msra.mxu0 0
    %708 = vmatprep.subr.bf16.mxu0 0
    %709 = vmatpush2.bf16.xpose.msra.mxu0 0
    %710 = vmatprep.mubr.bf16.mxu0 0
    %711 = vmatmul.mubr.bf16.gmra.mxu0 %v673
    %v712 = vpop.f32.mrf.mxu0
    %v713 = vadd.f32 0.0, %v712
    %v714 = vpop.f32.mrf.mxu0
    %v715 = vpop.f32.mrf.mxu0
    %v716 = vpop.f32.mrf.mxu0
    %717 = vdwg.mxu0
    %vm718 = vcmask 64512
    %v719 = vsel %vm718, %v370, -inf
    %720 = vmax.xlane.f32.xlu0 %v719
    %v721 = vpop.xlane.xlu0 %720
    %v722 = vsel %vm718, %v419, -inf
    %723 = vmax.xlane.f32.xlu0 %v722
    %v724 = vpop.xlane.xlu0 %723
    %v725 = vsel %vm718, %v468, -inf
    %726 = vmax.xlane.f32.xlu0 %v725
    %v727 = vpop.xlane.xlu0 %726
    %v728 = vsel %vm718, %v517, -inf
    %729 = vmax.xlane.f32.xlu0 %v728
    %v730 = vpop.xlane.xlu0 %729
    %v731 = vsel %vm718, %v566, -inf
    %732 = vmax.xlane.f32.xlu0 %v731
    %v733 = vpop.xlane.xlu0 %732
    %v734 = vsel %vm718, %v615, -inf
    %735 = vmax.xlane.f32.xlu0 %v734
    %v736 = vpop.xlane.xlu0 %735
    %v737 = vsel %vm718, %v664, -inf
    %738 = vmax.xlane.f32.xlu0 %v737
    %v739 = vpop.xlane.xlu0 %738
    %v740 = vsel %vm718, %v713, -inf
    %741 = vmax.xlane.f32.xlu0 %v740
    %v742 = vpop.xlane.xlu0 %741
    %v743 = vsub.f32 %v370, %v721
    %v744 = vsub.f32 %v419, %v724
    %v745 = vsub.f32 %v468, %v727
    %v746 = vsub.f32 %v517, %v730
    %v747 = vsub.f32 %v566, %v733
    %v748 = vsub.f32 %v615, %v736
    %v749 = vsub.f32 %v664, %v739
    %v750 = vsub.f32 %v713, %v742
    %v751 = vmul.f32 %v743, 1.442695
    %v752 = vpow.pop %v751
    %v753 = vmul.f32 %v744, 1.442695
    %v754 = vpow.pop %v753
    %v755 = vmul.f32 %v745, 1.442695
    %v756 = vpow.pop %v755
    %v757 = vmul.f32 %v746, 1.442695
    %v758 = vpow.pop %v757
    %v759 = vmul.f32 %v747, 1.442695
    %v760 = vpow.pop %v759
    %v761 = vmul.f32 %v748, 1.442695
    %v762 = vpow.pop %v761
    %v763 = vmul.f32 %v749, 1.442695
    %v764 = vpow.pop %v763
    %v765 = vmul.f32 %v750, 1.442695
    %v766 = vpow.pop %v765
    %v767 = vsel %vm718, %v752, 0.0
    %768 = vadd.xlane.f32.xlu0 %v767
    %v769 = vpop.xlane.xlu0 %768
    %v770 = vsel %vm718, %v754, 0.0
    %771 = vadd.xlane.f32.xlu0 %v770
    %v772 = vpop.xlane.xlu0 %771
    %v773 = vsel %vm718, %v756, 0.0
    %774 = vadd.xlane.f32.xlu0 %v773
    %v775 = vpop.xlane.xlu0 %774
    %v776 = vsel %vm718, %v758, 0.0
    %777 = vadd.xlane.f32.xlu0 %v776
    %v778 = vpop.xlane.xlu0 %777
    %v779 = vsel %vm718, %v760, 0.0
    %780 = vadd.xlane.f32.xlu0 %v779
    %v781 = vpop.xlane.xlu0 %780
    %v782 = vsel %vm718, %v762, 0.0
    %783 = vadd.xlane.f32.xlu0 %v782
    %v784 = vpop.xlane.xlu0 %783
    %v785 = vsel %vm718, %v764, 0.0
    %786 = vadd.xlane.f32.xlu0 %v785
    %v787 = vpop.xlane.xlu0 %786
    %v788 = vsel %vm718, %v766, 0.0
    %789 = vadd.xlane.f32.xlu0 %v788
    %v790 = vpop.xlane.xlu0 %789
    %v791 = vrcp.pop %v769
    %v792 = vrcp.pop %v772
    %v793 = vrcp.pop %v775
    %v794 = vrcp.pop %v778
    %v795 = vrcp.pop %v781
    %v796 = vrcp.pop %v784
    %v797 = vrcp.pop %v787
    %v798 = vrcp.pop %v790
    %v799 = vmul.f32 %v752, %v791
    %v800 = vmul.f32 %v754, %v792
    %v801 = vmul.f32 %v756, %v793
    %v802 = vmul.f32 %v758, %v794
    %v803 = vmul.f32 %v760, %v795
    %v804 = vmul.f32 %v762, %v796
    %v805 = vmul.f32 %v764, %v797
    %v806 = vmul.f32 %v766, %v798
    %v807 = vpack.c.bf16 %v799, %v799
    %v808 = vpack.c.bf16 %v800, %v800
    %v809 = vpack.c.bf16 %v801, %v801
    %v810 = vpack.c.bf16 %v802, %v802
    %v811 = vpack.c.bf16 %v803, %v803
    %v812 = vpack.c.bf16 %v804, %v804
    %v813 = vpack.c.bf16 %v805, %v805
    %v814 = vpack.c.bf16 %v806, %v806
    %v816 = vsel %vm718, %v807, 0
    %vm818 = vcmask 1043456
    %v820 = vsel %vm818, %v317, 0
    %822 = vmatprep.subr.bf16.mxu0 0
    %823 = vmatpush1.bf16.msra.mxu0 0
    %824 = vmatprep.subr.bf16.mxu0 0
    %825 = vmatpush1.bf16.msra.mxu0 0
    %826 = vmatprep.subr.bf16.mxu0 0
    %827 = vmatpush1.bf16.msra.mxu0 0
    %828 = vmatprep.subr.bf16.mxu0 0
    %829 = vmatpush1.bf16.msra.mxu0 0
    %830 = vmatprep.subr.bf16.mxu0 0
    %831 = vmatpush1.bf16.msra.mxu0 0
    %832 = vmatprep.subr.bf16.mxu0 0
    %833 = vmatpush1.bf16.msra.mxu0 0
    %834 = vmatprep.subr.bf16.mxu0 0
    %835 = vmatpush1.bf16.msra.mxu0 0
    %836 = vmatprep.subr.bf16.mxu0 0
    %837 = vmatpush1.bf16.msra.mxu0 %v820
    %838 = vmatprep.subr.bf16.mxu0 0
    %839 = vmatpush2.bf16.msra.mxu0 0
    %840 = vmatprep.subr.bf16.mxu0 0
    %841 = vmatpush2.bf16.msra.mxu0 0
    %842 = vmatprep.subr.bf16.mxu0 0
    %843 = vmatpush2.bf16.msra.mxu0 0
    %844 = vmatprep.subr.bf16.mxu0 0
    %845 = vmatpush2.bf16.msra.mxu0 0
    %846 = vmatprep.subr.bf16.mxu0 0
    %847 = vmatpush2.bf16.msra.mxu0 0
    %848 = vmatprep.subr.bf16.mxu0 0
    %849 = vmatpush2.bf16.msra.mxu0 0
    %850 = vmatprep.subr.bf16.mxu0 0
    %851 = vmatpush2.bf16.msra.mxu0 0
    %852 = vmatprep.subr.bf16.mxu0 0
    %853 = vmatpush2.bf16.msra.mxu0 0
    %854 = vmatprep.mubr.bf16.mxu0 0
    %855 = vmatmul.mubr.bf16.gmra.mxu0 %v816
    %v856 = vpop.f32.mrf.mxu0
    %v857 = vadd.f32 0.0, %v856
    %v858 = vpop.f32.mrf.mxu0
    %v859 = vpop.f32.mrf.mxu0
    %v860 = vpop.f32.mrf.mxu0
    %861 = vdwg.mxu0
    %v863 = vsel %vm718, %v808, 0
    %v866 = vsel %vm818, %v318, 0
    %868 = vmatprep.subr.bf16.mxu0 0
    %869 = vmatpush1.bf16.msra.mxu0 0
    %870 = vmatprep.subr.bf16.mxu0 0
    %871 = vmatpush1.bf16.msra.mxu0 0
    %872 = vmatprep.subr.bf16.mxu0 0
    %873 = vmatpush1.bf16.msra.mxu0 0
    %874 = vmatprep.subr.bf16.mxu0 0
    %875 = vmatpush1.bf16.msra.mxu0 0
    %876 = vmatprep.subr.bf16.mxu0 0
    %877 = vmatpush1.bf16.msra.mxu0 0
    %878 = vmatprep.subr.bf16.mxu0 0
    %879 = vmatpush1.bf16.msra.mxu0 0
    %880 = vmatprep.subr.bf16.mxu0 0
    %881 = vmatpush1.bf16.msra.mxu0 0
    %882 = vmatprep.subr.bf16.mxu0 0
    %883 = vmatpush1.bf16.msra.mxu0 %v866
    %884 = vmatprep.subr.bf16.mxu0 0
    %885 = vmatpush2.bf16.msra.mxu0 0
    %886 = vmatprep.subr.bf16.mxu0 0
    %887 = vmatpush2.bf16.msra.mxu0 0
    %888 = vmatprep.subr.bf16.mxu0 0
    %889 = vmatpush2.bf16.msra.mxu0 0
    %890 = vmatprep.subr.bf16.mxu0 0
    %891 = vmatpush2.bf16.msra.mxu0 0
    %892 = vmatprep.subr.bf16.mxu0 0
    %893 = vmatpush2.bf16.msra.mxu0 0
    %894 = vmatprep.subr.bf16.mxu0 0
    %895 = vmatpush2.bf16.msra.mxu0 0
    %896 = vmatprep.subr.bf16.mxu0 0
    %897 = vmatpush2.bf16.msra.mxu0 0
    %898 = vmatprep.subr.bf16.mxu0 0
    %899 = vmatpush2.bf16.msra.mxu0 0
    %900 = vmatprep.mubr.bf16.mxu0 0
    %901 = vmatmul.mubr.bf16.gmra.mxu0 %v863
    %v902 = vpop.f32.mrf.mxu0
    %v903 = vadd.f32 0.0, %v902
    %v904 = vpop.f32.mrf.mxu0
    %v905 = vpop.f32.mrf.mxu0
    %v906 = vpop.f32.mrf.mxu0
    %907 = vdwg.mxu0
    %v909 = vsel %vm718, %v809, 0
    %v912 = vsel %vm818, %v319, 0
    %914 = vmatprep.subr.bf16.mxu0 0
    %915 = vmatpush1.bf16.msra.mxu0 0
    %916 = vmatprep.subr.bf16.mxu0 0
    %917 = vmatpush1.bf16.msra.mxu0 0
    %918 = vmatprep.subr.bf16.mxu0 0
    %919 = vmatpush1.bf16.msra.mxu0 0
    %920 = vmatprep.subr.bf16.mxu0 0
    %921 = vmatpush1.bf16.msra.mxu0 0
    %922 = vmatprep.subr.bf16.mxu0 0
    %923 = vmatpush1.bf16.msra.mxu0 0
    %924 = vmatprep.subr.bf16.mxu0 0
    %925 = vmatpush1.bf16.msra.mxu0 0
    %926 = vmatprep.subr.bf16.mxu0 0
    %927 = vmatpush1.bf16.msra.mxu0 0
    %928 = vmatprep.subr.bf16.mxu0 0
    %929 = vmatpush1.bf16.msra.mxu0 %v912
    %930 = vmatprep.subr.bf16.mxu0 0
    %931 = vmatpush2.bf16.msra.mxu0 0
    %932 = vmatprep.subr.bf16.mxu0 0
    %933 = vmatpush2.bf16.msra.mxu0 0
    %934 = vmatprep.subr.bf16.mxu0 0
    %935 = vmatpush2.bf16.msra.mxu0 0
    %936 = vmatprep.subr.bf16.mxu0 0
    %937 = vmatpush2.bf16.msra.mxu0 0
    %938 = vmatprep.subr.bf16.mxu0 0
    %939 = vmatpush2.bf16.msra.mxu0 0
    %940 = vmatprep.subr.bf16.mxu0 0
    %941 = vmatpush2.bf16.msra.mxu0 0
    %942 = vmatprep.subr.bf16.mxu0 0
    %943 = vmatpush2.bf16.msra.mxu0 0
    %944 = vmatprep.subr.bf16.mxu0 0
    %945 = vmatpush2.bf16.msra.mxu0 0
    %946 = vmatprep.mubr.bf16.mxu0 0
    %947 = vmatmul.mubr.bf16.gmra.mxu0 %v909
    %v948 = vpop.f32.mrf.mxu0
    %v949 = vadd.f32 0.0, %v948
    %v950 = vpop.f32.mrf.mxu0
    %v951 = vpop.f32.mrf.mxu0
    %v952 = vpop.f32.mrf.mxu0
    %953 = vdwg.mxu0
    %v955 = vsel %vm718, %v810, 0
    %v958 = vsel %vm818, %v320, 0
    %960 = vmatprep.subr.bf16.mxu0 0
    %961 = vmatpush1.bf16.msra.mxu0 0
    %962 = vmatprep.subr.bf16.mxu0 0
    %963 = vmatpush1.bf16.msra.mxu0 0
    %964 = vmatprep.subr.bf16.mxu0 0
    %965 = vmatpush1.bf16.msra.mxu0 0
    %966 = vmatprep.subr.bf16.mxu0 0
    %967 = vmatpush1.bf16.msra.mxu0 0
    %968 = vmatprep.subr.bf16.mxu0 0
    %969 = vmatpush1.bf16.msra.mxu0 0
    %970 = vmatprep.subr.bf16.mxu0 0
    %971 = vmatpush1.bf16.msra.mxu0 0
    %972 = vmatprep.subr.bf16.mxu0 0
    %973 = vmatpush1.bf16.msra.mxu0 0
    %974 = vmatprep.subr.bf16.mxu0 0
    %975 = vmatpush1.bf16.msra.mxu0 %v958
    %976 = vmatprep.subr.bf16.mxu0 0
    %977 = vmatpush2.bf16.msra.mxu0 0
    %978 = vmatprep.subr.bf16.mxu0 0
    %979 = vmatpush2.bf16.msra.mxu0 0
    %980 = vmatprep.subr.bf16.mxu0 0
    %981 = vmatpush2.bf16.msra.mxu0 0
    %982 = vmatprep.subr.bf16.mxu0 0
    %983 = vmatpush2.bf16.msra.mxu0 0
    %984 = vmatprep.subr.bf16.mxu0 0
    %985 = vmatpush2.bf16.msra.mxu0 0
    %986 = vmatprep.subr.bf16.mxu0 0
    %987 = vmatpush2.bf16.msra.mxu0 0
    %988 = vmatprep.subr.bf16.mxu0 0
    %989 = vmatpush2.bf16.msra.mxu0 0
    %990 = vmatprep.subr.bf16.mxu0 0
    %991 = vmatpush2.bf16.msra.mxu0 0
    %992 = vmatprep.mubr.bf16.mxu0 0
    %993 = vmatmul.mubr.bf16.gmra.mxu0 %v955
    %v994 = vpop.f32.mrf.mxu0
    %v995 = vadd.f32 0.0, %v994
    %v996 = vpop.f32.mrf.mxu0
    %v997 = vpop.f32.mrf.mxu0
    %v998 = vpop.f32.mrf.mxu0
    %999 = vdwg.mxu0
    %v1001 = vsel %vm718, %v811, 0
    %v1004 = vsel %vm818, %v321, 0
    %1006 = vmatprep.subr.bf16.mxu0 0
    %1007 = vmatpush1.bf16.msra.mxu0 0
    %1008 = vmatprep.subr.bf16.mxu0 0
    %1009 = vmatpush1.bf16.msra.mxu0 0
    %1010 = vmatprep.subr.bf16.mxu0 0
    %1011 = vmatpush1.bf16.msra.mxu0 0
    %1012 = vmatprep.subr.bf16.mxu0 0
    %1013 = vmatpush1.bf16.msra.mxu0 0
    %1014 = vmatprep.subr.bf16.mxu0 0
    %1015 = vmatpush1.bf16.msra.mxu0 0
    %1016 = vmatprep.subr.bf16.mxu0 0
    %1017 = vmatpush1.bf16.msra.mxu0 0
    %1018 = vmatprep.subr.bf16.mxu0 0
    %1019 = vmatpush1.bf16.msra.mxu0 0
    %1020 = vmatprep.subr.bf16.mxu0 0
    %1021 = vmatpush1.bf16.msra.mxu0 %v1004
    %1022 = vmatprep.subr.bf16.mxu0 0
    %1023 = vmatpush2.bf16.msra.mxu0 0
    %1024 = vmatprep.subr.bf16.mxu0 0
    %1025 = vmatpush2.bf16.msra.mxu0 0
    %1026 = vmatprep.subr.bf16.mxu0 0
    %1027 = vmatpush2.bf16.msra.mxu0 0
    %1028 = vmatprep.subr.bf16.mxu0 0
    %1029 = vmatpush2.bf16.msra.mxu0 0
    %1030 = vmatprep.subr.bf16.mxu0 0
    %1031 = vmatpush2.bf16.msra.mxu0 0
    %1032 = vmatprep.subr.bf16.mxu0 0
    %1033 = vmatpush2.bf16.msra.mxu0 0
    %1034 = vmatprep.subr.bf16.mxu0 0
    %1035 = vmatpush2.bf16.msra.mxu0 0
    %1036 = vmatprep.subr.bf16.mxu0 0
    %1037 = vmatpush2.bf16.msra.mxu0 0
    %1038 = vmatprep.mubr.bf16.mxu0 0
    %1039 = vmatmul.mubr.bf16.gmra.mxu0 %v1001
    %v1040 = vpop.f32.mrf.mxu0
    %v1041 = vadd.f32 0.0, %v1040
    %v1042 = vpop.f32.mrf.mxu0
    %v1043 = vpop.f32.mrf.mxu0
    %v1044 = vpop.f32.mrf.mxu0
    %1045 = vdwg.mxu0
    %v1047 = vsel %vm718, %v812, 0
    %v1050 = vsel %vm818, %v322, 0
    %1052 = vmatprep.subr.bf16.mxu0 0
    %1053 = vmatpush1.bf16.msra.mxu0 0
    %1054 = vmatprep.subr.bf16.mxu0 0
    %1055 = vmatpush1.bf16.msra.mxu0 0
    %1056 = vmatprep.subr.bf16.mxu0 0
    %1057 = vmatpush1.bf16.msra.mxu0 0
    %1058 = vmatprep.subr.bf16.mxu0 0
    %1059 = vmatpush1.bf16.msra.mxu0 0
    %1060 = vmatprep.subr.bf16.mxu0 0
    %1061 = vmatpush1.bf16.msra.mxu0 0
    %1062 = vmatprep.subr.bf16.mxu0 0
    %1063 = vmatpush1.bf16.msra.mxu0 0
    %1064 = vmatprep.subr.bf16.mxu0 0
    %1065 = vmatpush1.bf16.msra.mxu0 0
    %1066 = vmatprep.subr.bf16.mxu0 0
    %1067 = vmatpush1.bf16.msra.mxu0 %v1050
    %1068 = vmatprep.subr.bf16.mxu0 0
    %1069 = vmatpush2.bf16.msra.mxu0 0
    %1070 = vmatprep.subr.bf16.mxu0 0
    %1071 = vmatpush2.bf16.msra.mxu0 0
    %1072 = vmatprep.subr.bf16.mxu0 0
    %1073 = vmatpush2.bf16.msra.mxu0 0
    %1074 = vmatprep.subr.bf16.mxu0 0
    %1075 = vmatpush2.bf16.msra.mxu0 0
    %1076 = vmatprep.subr.bf16.mxu0 0
    %1077 = vmatpush2.bf16.msra.mxu0 0
    %1078 = vmatprep.subr.bf16.mxu0 0
    %1079 = vmatpush2.bf16.msra.mxu0 0
    %1080 = vmatprep.subr.bf16.mxu0 0
    %1081 = vmatpush2.bf16.msra.mxu0 0
    %1082 = vmatprep.subr.bf16.mxu0 0
    %1083 = vmatpush2.bf16.msra.mxu0 0
    %1084 = vmatprep.mubr.bf16.mxu0 0
    %1085 = vmatmul.mubr.bf16.gmra.mxu0 %v1047
    %v1086 = vpop.f32.mrf.mxu0
    %v1087 = vadd.f32 0.0, %v1086
    %v1088 = vpop.f32.mrf.mxu0
    %v1089 = vpop.f32.mrf.mxu0
    %v1090 = vpop.f32.mrf.mxu0
    %1091 = vdwg.mxu0
    %v1093 = vsel %vm718, %v813, 0
    %v1096 = vsel %vm818, %v323, 0
    %1098 = vmatprep.subr.bf16.mxu0 0
    %1099 = vmatpush1.bf16.msra.mxu0 0
    %1100 = vmatprep.subr.bf16.mxu0 0
    %1101 = vmatpush1.bf16.msra.mxu0 0
    %1102 = vmatprep.subr.bf16.mxu0 0
    %1103 = vmatpush1.bf16.msra.mxu0 0
    %1104 = vmatprep.subr.bf16.mxu0 0
    %1105 = vmatpush1.bf16.msra.mxu0 0
    %1106 = vmatprep.subr.bf16.mxu0 0
    %1107 = vmatpush1.bf16.msra.mxu0 0
    %1108 = vmatprep.subr.bf16.mxu0 0
    %1109 = vmatpush1.bf16.msra.mxu0 0
    %1110 = vmatprep.subr.bf16.mxu0 0
    %1111 = vmatpush1.bf16.msra.mxu0 0
    %1112 = vmatprep.subr.bf16.mxu0 0
    %1113 = vmatpush1.bf16.msra.mxu0 %v1096
    %1114 = vmatprep.subr.bf16.mxu0 0
    %1115 = vmatpush2.bf16.msra.mxu0 0
    %1116 = vmatprep.subr.bf16.mxu0 0
    %1117 = vmatpush2.bf16.msra.mxu0 0
    %1118 = vmatprep.subr.bf16.mxu0 0
    %1119 = vmatpush2.bf16.msra.mxu0 0
    %1120 = vmatprep.subr.bf16.mxu0 0
    %1121 = vmatpush2.bf16.msra.mxu0 0
    %1122 = vmatprep.subr.bf16.mxu0 0
    %1123 = vmatpush2.bf16.msra.mxu0 0
    %1124 = vmatprep.subr.bf16.mxu0 0
    %1125 = vmatpush2.bf16.msra.mxu0 0
    %1126 = vmatprep.subr.bf16.mxu0 0
    %1127 = vmatpush2.bf16.msra.mxu0 0
    %1128 = vmatprep.subr.bf16.mxu0 0
    %1129 = vmatpush2.bf16.msra.mxu0 0
    %1130 = vmatprep.mubr.bf16.mxu0 0
    %1131 = vmatmul.mubr.bf16.gmra.mxu0 %v1093
    %v1132 = vpop.f32.mrf.mxu0
    %v1133 = vadd.f32 0.0, %v1132
    %v1134 = vpop.f32.mrf.mxu0
    %v1135 = vpop.f32.mrf.mxu0
    %v1136 = vpop.f32.mrf.mxu0
    %1137 = vdwg.mxu0
    %v1139 = vsel %vm718, %v814, 0
    %v1142 = vsel %vm818, %v324, 0
    %1144 = vmatprep.subr.bf16.mxu0 0
    %1145 = vmatpush1.bf16.msra.mxu0 0
    %1146 = vmatprep.subr.bf16.mxu0 0
    %1147 = vmatpush1.bf16.msra.mxu0 0
    %1148 = vmatprep.subr.bf16.mxu0 0
    %1149 = vmatpush1.bf16.msra.mxu0 0
    %1150 = vmatprep.subr.bf16.mxu0 0
    %1151 = vmatpush1.bf16.msra.mxu0 0
    %1152 = vmatprep.subr.bf16.mxu0 0
    %1153 = vmatpush1.bf16.msra.mxu0 0
    %1154 = vmatprep.subr.bf16.mxu0 0
    %1155 = vmatpush1.bf16.msra.mxu0 0
    %1156 = vmatprep.subr.bf16.mxu0 0
    %1157 = vmatpush1.bf16.msra.mxu0 0
    %1158 = vmatprep.subr.bf16.mxu0 0
    %1159 = vmatpush1.bf16.msra.mxu0 %v1142
    %1160 = vmatprep.subr.bf16.mxu0 0
    %1161 = vmatpush2.bf16.msra.mxu0 0
    %1162 = vmatprep.subr.bf16.mxu0 0
    %1163 = vmatpush2.bf16.msra.mxu0 0
    %1164 = vmatprep.subr.bf16.mxu0 0
    %1165 = vmatpush2.bf16.msra.mxu0 0
    %1166 = vmatprep.subr.bf16.mxu0 0
    %1167 = vmatpush2.bf16.msra.mxu0 0
    %1168 = vmatprep.subr.bf16.mxu0 0
    %1169 = vmatpush2.bf16.msra.mxu0 0
    %1170 = vmatprep.subr.bf16.mxu0 0
    %1171 = vmatpush2.bf16.msra.mxu0 0
    %1172 = vmatprep.subr.bf16.mxu0 0
    %1173 = vmatpush2.bf16.msra.mxu0 0
    %1174 = vmatprep.subr.bf16.mxu0 0
    %1175 = vmatpush2.bf16.msra.mxu0 0
    %1176 = vmatprep.mubr.bf16.mxu0 0
    %1177 = vmatmul.mubr.bf16.gmra.mxu0 %v1139
    %v1178 = vpop.f32.mrf.mxu0
    %v1179 = vadd.f32 0.0, %v1178
    %v1180 = vpop.f32.mrf.mxu0
    %v1181 = vpop.f32.mrf.mxu0
    %v1182 = vpop.f32.mrf.mxu0
    %1183 = vdwg.mxu0
    %1184 = vrot.lane.b32.xlu0 %v309, 96
    %v1185 = vpop.permute.xlu0 %1184
    %1186 = vrot.lane.b32.xlu0 %v309, 32
    %v1187 = vpop.permute.xlu0 %1186
    %v1189 = vsel %vm328, %v1185, 0
    %v1192 = vsel %vm328, %v1187, 0
    %1194 = vmatprep.subr.bf16.mxu0 0
    %1195 = vmatpush1.bf16.xpose.msra.mxu0 0
    %1196 = vmatprep.subr.bf16.mxu0 0
    %1197 = vmatpush1.bf16.xpose.msra.mxu0 0
    %1198 = vmatprep.subr.bf16.mxu0 0
    %1199 = vmatpush1.bf16.xpose.msra.mxu0 0
    %1200 = vmatprep.subr.bf16.mxu0 0
    %1201 = vmatpush1.bf16.xpose.msra.mxu0 0
    %1202 = vmatprep.subr.bf16.mxu0 0
    %1203 = vmatpush1.bf16.xpose.msra.mxu0 0
    %1204 = vmatprep.subr.bf16.mxu0 0
    %1205 = vmatpush1.bf16.xpose.msra.mxu0 0
    %1206 = vmatprep.subr.bf16.mxu0 0
    %1207 = vmatpush1.bf16.xpose.msra.mxu0 0
    %1208 = vmatprep.subr.bf16.mxu0 0
    %1209 = vmatpush1.bf16.xpose.msra.mxu0 %v1192
    %1210 = vmatprep.subr.bf16.mxu0 0
    %1211 = vmatpush2.bf16.xpose.msra.mxu0 0
    %1212 = vmatprep.subr.bf16.mxu0 0
    %1213 = vmatpush2.bf16.xpose.msra.mxu0 0
    %1214 = vmatprep.subr.bf16.mxu0 0
    %1215 = vmatpush2.bf16.xpose.msra.mxu0 0
    %1216 = vmatprep.subr.bf16.mxu0 0
    %1217 = vmatpush2.bf16.xpose.msra.mxu0 0
    %1218 = vmatprep.subr.bf16.mxu0 0
    %1219 = vmatpush2.bf16.xpose.msra.mxu0 0
    %1220 = vmatprep.subr.bf16.mxu0 0
    %1221 = vmatpush2.bf16.xpose.msra.mxu0 0
    %1222 = vmatprep.subr.bf16.mxu0 0
    %1223 = vmatpush2.bf16.xpose.msra.mxu0 0
    %1224 = vmatprep.subr.bf16.mxu0 0
    %1225 = vmatpush2.bf16.xpose.msra.mxu0 0
    %1226 = vmatprep.mubr.bf16.mxu0 0
    %1227 = vmatmul.mubr.bf16.gmra.mxu0 %v1189
    %v1228 = vpop.f32.mrf.mxu0
    %v1229 = vadd.f32 0.0, %v1228
    %v1230 = vpop.f32.mrf.mxu0
    %v1231 = vpop.f32.mrf.mxu0
    %v1232 = vpop.f32.mrf.mxu0
    %1233 = vdwg.mxu0
    %1234 = vrot.lane.b32.xlu0 %v310, 96
    %v1235 = vpop.permute.xlu0 %1234
    %1236 = vrot.lane.b32.xlu0 %v310, 32
    %v1237 = vpop.permute.xlu0 %1236
    %v1239 = vsel %vm328, %v1235, 0
    %v1242 = vsel %vm328, %v1237, 0
    %1244 = vmatprep.subr.bf16.mxu0 0
    %1245 = vmatpush1.bf16.xpose.msra.mxu0 0
    %1246 = vmatprep.subr.bf16.mxu0 0
    %1247 = vmatpush1.bf16.xpose.msra.mxu0 0
    %1248 = vmatprep.subr.bf16.mxu0 0
    %1249 = vmatpush1.bf16.xpose.msra.mxu0 0
    %1250 = vmatprep.subr.bf16.mxu0 0
    %1251 = vmatpush1.bf16.xpose.msra.mxu0 0
    %1252 = vmatprep.subr.bf16.mxu0 0
    %1253 = vmatpush1.bf16.xpose.msra.mxu0 0
    %1254 = vmatprep.subr.bf16.mxu0 0
    %1255 = vmatpush1.bf16.xpose.msra.mxu0 0
    %1256 = vmatprep.subr.bf16.mxu0 0
    %1257 = vmatpush1.bf16.xpose.msra.mxu0 0
    %1258 = vmatprep.subr.bf16.mxu0 0
    %1259 = vmatpush1.bf16.xpose.msra.mxu0 %v1242
    %1260 = vmatprep.subr.bf16.mxu0 0
    %1261 = vmatpush2.bf16.xpose.msra.mxu0 0
    %1262 = vmatprep.subr.bf16.mxu0 0
    %1263 = vmatpush2.bf16.xpose.msra.mxu0 0
    %1264 = vmatprep.subr.bf16.mxu0 0
    %1265 = vmatpush2.bf16.xpose.msra.mxu0 0
    %1266 = vmatprep.subr.bf16.mxu0 0
    %1267 = vmatpush2.bf16.xpose.msra.mxu0 0
    %1268 = vmatprep.subr.bf16.mxu0 0
    %1269 = vmatpush2.bf16.xpose.msra.mxu0 0
    %1270 = vmatprep.subr.bf16.mxu0 0
    %1271 = vmatpush2.bf16.xpose.msra.mxu0 0
    %1272 = vmatprep.subr.bf16.mxu0 0
    %1273 = vmatpush2.bf16.xpose.msra.mxu0 0
    %1274 = vmatprep.subr.bf16.mxu0 0
    %1275 = vmatpush2.bf16.xpose.msra.mxu0 0
    %1276 = vmatprep.mubr.bf16.mxu0 0
    %1277 = vmatmul.mubr.bf16.gmra.mxu0 %v1239
    %v1278 = vpop.f32.mrf.mxu0
    %v1279 = vadd.f32 0.0, %v1278
    %v1280 = vpop.f32.mrf.mxu0
    %v1281 = vpop.f32.mrf.mxu0
    %v1282 = vpop.f32.mrf.mxu0
    %1283 = vdwg.mxu0
    %1284 = vrot.lane.b32.xlu0 %v311, 96
    %v1285 = vpop.permute.xlu0 %1284
    %1286 = vrot.lane.b32.xlu0 %v311, 32
    %v1287 = vpop.permute.xlu0 %1286
    %v1289 = vsel %vm328, %v1285, 0
    %v1292 = vsel %vm328, %v1287, 0
    %1294 = vmatprep.subr.bf16.mxu0 0
    %1295 = vmatpush1.bf16.xpose.msra.mxu0 0
    %1296 = vmatprep.subr.bf16.mxu0 0
    %1297 = vmatpush1.bf16.xpose.msra.mxu0 0
    %1298 = vmatprep.subr.bf16.mxu0 0
    %1299 = vmatpush1.bf16.xpose.msra.mxu0 0
    %1300 = vmatprep.subr.bf16.mxu0 0
    %1301 = vmatpush1.bf16.xpose.msra.mxu0 0
    %1302 = vmatprep.subr.bf16.mxu0 0
    %1303 = vmatpush1.bf16.xpose.msra.mxu0 0
    %1304 = vmatprep.subr.bf16.mxu0 0
    %1305 = vmatpush1.bf16.xpose.msra.mxu0 0
    %1306 = vmatprep.subr.bf16.mxu0 0
    %1307 = vmatpush1.bf16.xpose.msra.mxu0 0
    %1308 = vmatprep.subr.bf16.mxu0 0
    %1309 = vmatpush1.bf16.xpose.msra.mxu0 %v1292
    %1310 = vmatprep.subr.bf16.mxu0 0
    %1311 = vmatpush2.bf16.xpose.msra.mxu0 0
    %1312 = vmatprep.subr.bf16.mxu0 0
    %1313 = vmatpush2.bf16.xpose.msra.mxu0 0
    %1314 = vmatprep.subr.bf16.mxu0 0
    %1315 = vmatpush2.bf16.xpose.msra.mxu0 0
    %1316 = vmatprep.subr.bf16.mxu0 0
    %1317 = vmatpush2.bf16.xpose.msra.mxu0 0
    %1318 = vmatprep.subr.bf16.mxu0 0
    %1319 = vmatpush2.bf16.xpose.msra.mxu0 0
    %1320 = vmatprep.subr.bf16.mxu0 0
    %1321 = vmatpush2.bf16.xpose.msra.mxu0 0
    %1322 = vmatprep.subr.bf16.mxu0 0
    %1323 = vmatpush2.bf16.xpose.msra.mxu0 0
    %1324 = vmatprep.subr.bf16.mxu0 0
    %1325 = vmatpush2.bf16.xpose.msra.mxu0 0
    %1326 = vmatprep.mubr.bf16.mxu0 0
    %1327 = vmatmul.mubr.bf16.gmra.mxu0 %v1289
    %v1328 = vpop.f32.mrf.mxu0
    %v1329 = vadd.f32 0.0, %v1328
    %v1330 = vpop.f32.mrf.mxu0
    %v1331 = vpop.f32.mrf.mxu0
    %v1332 = vpop.f32.mrf.mxu0
    %1333 = vdwg.mxu0
    %1334 = vrot.lane.b32.xlu0 %v312, 96
    %v1335 = vpop.permute.xlu0 %1334
    %1336 = vrot.lane.b32.xlu0 %v312, 32
    %v1337 = vpop.permute.xlu0 %1336
    %v1339 = vsel %vm328, %v1335, 0
    %v1342 = vsel %vm328, %v1337, 0
    %1344 = vmatprep.subr.bf16.mxu0 0
    %1345 = vmatpush1.bf16.xpose.msra.mxu0 0
    %1346 = vmatprep.subr.bf16.mxu0 0
    %1347 = vmatpush1.bf16.xpose.msra.mxu0 0
    %1348 = vmatprep.subr.bf16.mxu0 0
    %1349 = vmatpush1.bf16.xpose.msra.mxu0 0
    %1350 = vmatprep.subr.bf16.mxu0 0
    %1351 = vmatpush1.bf16.xpose.msra.mxu0 0
    %1352 = vmatprep.subr.bf16.mxu0 0
    %1353 = vmatpush1.bf16.xpose.msra.mxu0 0
    %1354 = vmatprep.subr.bf16.mxu0 0
    %1355 = vmatpush1.bf16.xpose.msra.mxu0 0
    %1356 = vmatprep.subr.bf16.mxu0 0
    %1357 = vmatpush1.bf16.xpose.msra.mxu0 0
    %1358 = vmatprep.subr.bf16.mxu0 0
    %1359 = vmatpush1.bf16.xpose.msra.mxu0 %v1342
    %1360 = vmatprep.subr.bf16.mxu0 0
    %1361 = vmatpush2.bf16.xpose.msra.mxu0 0
    %1362 = vmatprep.subr.bf16.mxu0 0
    %1363 = vmatpush2.bf16.xpose.msra.mxu0 0
    %1364 = vmatprep.subr.bf16.mxu0 0
    %1365 = vmatpush2.bf16.xpose.msra.mxu0 0
    %1366 = vmatprep.subr.bf16.mxu0 0
    %1367 = vmatpush2.bf16.xpose.msra.mxu0 0
    %1368 = vmatprep.subr.bf16.mxu0 0
    %1369 = vmatpush2.bf16.xpose.msra.mxu0 0
    %1370 = vmatprep.subr.bf16.mxu0 0
    %1371 = vmatpush2.bf16.xpose.msra.mxu0 0
    %1372 = vmatprep.subr.bf16.mxu0 0
    %1373 = vmatpush2.bf16.xpose.msra.mxu0 0
    %1374 = vmatprep.subr.bf16.mxu0 0
    %1375 = vmatpush2.bf16.xpose.msra.mxu0 0
    %1376 = vmatprep.mubr.bf16.mxu0 0
    %1377 = vmatmul.mubr.bf16.gmra.mxu0 %v1339
    %v1378 = vpop.f32.mrf.mxu0
    %v1379 = vadd.f32 0.0, %v1378
    %v1380 = vpop.f32.mrf.mxu0
    %v1381 = vpop.f32.mrf.mxu0
    %v1382 = vpop.f32.mrf.mxu0
    %1383 = vdwg.mxu0
    %1384 = vrot.lane.b32.xlu0 %v313, 96
    %v1385 = vpop.permute.xlu0 %1384
    %1386 = vrot.lane.b32.xlu0 %v313, 32
    %v1387 = vpop.permute.xlu0 %1386
    %v1389 = vsel %vm328, %v1385, 0
    %v1392 = vsel %vm328, %v1387, 0
    %1394 = vmatprep.subr.bf16.mxu0 0
    %1395 = vmatpush1.bf16.xpose.msra.mxu0 0
    %1396 = vmatprep.subr.bf16.mxu0 0
    %1397 = vmatpush1.bf16.xpose.msra.mxu0 0
    %1398 = vmatprep.subr.bf16.mxu0 0
    %1399 = vmatpush1.bf16.xpose.msra.mxu0 0
    %1400 = vmatprep.subr.bf16.mxu0 0
    %1401 = vmatpush1.bf16.xpose.msra.mxu0 0
    %1402 = vmatprep.subr.bf16.mxu0 0
    %1403 = vmatpush1.bf16.xpose.msra.mxu0 0
    %1404 = vmatprep.subr.bf16.mxu0 0
    %1405 = vmatpush1.bf16.xpose.msra.mxu0 0
    %1406 = vmatprep.subr.bf16.mxu0 0
    %1407 = vmatpush1.bf16.xpose.msra.mxu0 0
    %1408 = vmatprep.subr.bf16.mxu0 0
    %1409 = vmatpush1.bf16.xpose.msra.mxu0 %v1392
    %1410 = vmatprep.subr.bf16.mxu0 0
    %1411 = vmatpush2.bf16.xpose.msra.mxu0 0
    %1412 = vmatprep.subr.bf16.mxu0 0
    %1413 = vmatpush2.bf16.xpose.msra.mxu0 0
    %1414 = vmatprep.subr.bf16.mxu0 0
    %1415 = vmatpush2.bf16.xpose.msra.mxu0 0
    %1416 = vmatprep.subr.bf16.mxu0 0
    %1417 = vmatpush2.bf16.xpose.msra.mxu0 0
    %1418 = vmatprep.subr.bf16.mxu0 0
    %1419 = vmatpush2.bf16.xpose.msra.mxu0 0
    %1420 = vmatprep.subr.bf16.mxu0 0
    %1421 = vmatpush2.bf16.xpose.msra.mxu0 0
    %1422 = vmatprep.subr.bf16.mxu0 0
    %1423 = vmatpush2.bf16.xpose.msra.mxu0 0
    %1424 = vmatprep.subr.bf16.mxu0 0
    %1425 = vmatpush2.bf16.xpose.msra.mxu0 0
    %1426 = vmatprep.mubr.bf16.mxu0 0
    %1427 = vmatmul.mubr.bf16.gmra.mxu0 %v1389
    %v1428 = vpop.f32.mrf.mxu0
    %v1429 = vadd.f32 0.0, %v1428
    %v1430 = vpop.f32.mrf.mxu0
    %v1431 = vpop.f32.mrf.mxu0
    %v1432 = vpop.f32.mrf.mxu0
    %1433 = vdwg.mxu0
    %1434 = vrot.lane.b32.xlu0 %v314, 96
    %v1435 = vpop.permute.xlu0 %1434
    %1436 = vrot.lane.b32.xlu0 %v314, 32
    %v1437 = vpop.permute.xlu0 %1436
    %v1439 = vsel %vm328, %v1435, 0
    %v1442 = vsel %vm328, %v1437, 0
    %1444 = vmatprep.subr.bf16.mxu0 0
    %1445 = vmatpush1.bf16.xpose.msra.mxu0 0
    %1446 = vmatprep.subr.bf16.mxu0 0
    %1447 = vmatpush1.bf16.xpose.msra.mxu0 0
    %1448 = vmatprep.subr.bf16.mxu0 0
    %1449 = vmatpush1.bf16.xpose.msra.mxu0 0
    %1450 = vmatprep.subr.bf16.mxu0 0
    %1451 = vmatpush1.bf16.xpose.msra.mxu0 0
    %1452 = vmatprep.subr.bf16.mxu0 0
    %1453 = vmatpush1.bf16.xpose.msra.mxu0 0
    %1454 = vmatprep.subr.bf16.mxu0 0
    %1455 = vmatpush1.bf16.xpose.msra.mxu0 0
    %1456 = vmatprep.subr.bf16.mxu0 0
    %1457 = vmatpush1.bf16.xpose.msra.mxu0 0
    %1458 = vmatprep.subr.bf16.mxu0 0
    %1459 = vmatpush1.bf16.xpose.msra.mxu0 %v1442
    %1460 = vmatprep.subr.bf16.mxu0 0
    %1461 = vmatpush2.bf16.xpose.msra.mxu0 0
    %1462 = vmatprep.subr.bf16.mxu0 0
    %1463 = vmatpush2.bf16.xpose.msra.mxu0 0
    %1464 = vmatprep.subr.bf16.mxu0 0
    %1465 = vmatpush2.bf16.xpose.msra.mxu0 0
    %1466 = vmatprep.subr.bf16.mxu0 0
    %1467 = vmatpush2.bf16.xpose.msra.mxu0 0
    %1468 = vmatprep.subr.bf16.mxu0 0
    %1469 = vmatpush2.bf16.xpose.msra.mxu0 0
    %1470 = vmatprep.subr.bf16.mxu0 0
    %1471 = vmatpush2.bf16.xpose.msra.mxu0 0
    %1472 = vmatprep.subr.bf16.mxu0 0
    %1473 = vmatpush2.bf16.xpose.msra.mxu0 0
    %1474 = vmatprep.subr.bf16.mxu0 0
    %1475 = vmatpush2.bf16.xpose.msra.mxu0 0
    %1476 = vmatprep.mubr.bf16.mxu0 0
    %1477 = vmatmul.mubr.bf16.gmra.mxu0 %v1439
    %v1478 = vpop.f32.mrf.mxu0
    %v1479 = vadd.f32 0.0, %v1478
    %v1480 = vpop.f32.mrf.mxu0
    %v1481 = vpop.f32.mrf.mxu0
    %v1482 = vpop.f32.mrf.mxu0
    %1483 = vdwg.mxu0
    %1484 = vrot.lane.b32.xlu0 %v315, 96
    %v1485 = vpop.permute.xlu0 %1484
    %1486 = vrot.lane.b32.xlu0 %v315, 32
    %v1487 = vpop.permute.xlu0 %1486
    %v1489 = vsel %vm328, %v1485, 0
    %v1492 = vsel %vm328, %v1487, 0
    %1494 = vmatprep.subr.bf16.mxu0 0
    %1495 = vmatpush1.bf16.xpose.msra.mxu0 0
    %1496 = vmatprep.subr.bf16.mxu0 0
    %1497 = vmatpush1.bf16.xpose.msra.mxu0 0
    %1498 = vmatprep.subr.bf16.mxu0 0
    %1499 = vmatpush1.bf16.xpose.msra.mxu0 0
    %1500 = vmatprep.subr.bf16.mxu0 0
    %1501 = vmatpush1.bf16.xpose.msra.mxu0 0
    %1502 = vmatprep.subr.bf16.mxu0 0
    %1503 = vmatpush1.bf16.xpose.msra.mxu0 0
    %1504 = vmatprep.subr.bf16.mxu0 0
    %1505 = vmatpush1.bf16.xpose.msra.mxu0 0
    %1506 = vmatprep.subr.bf16.mxu0 0
    %1507 = vmatpush1.bf16.xpose.msra.mxu0 0
    %1508 = vmatprep.subr.bf16.mxu0 0
    %1509 = vmatpush1.bf16.xpose.msra.mxu0 %v1492
    %1510 = vmatprep.subr.bf16.mxu0 0
    %1511 = vmatpush2.bf16.xpose.msra.mxu0 0
    %1512 = vmatprep.subr.bf16.mxu0 0
    %1513 = vmatpush2.bf16.xpose.msra.mxu0 0
    %1514 = vmatprep.subr.bf16.mxu0 0
    %1515 = vmatpush2.bf16.xpose.msra.mxu0 0
    %1516 = vmatprep.subr.bf16.mxu0 0
    %1517 = vmatpush2.bf16.xpose.msra.mxu0 0
    %1518 = vmatprep.subr.bf16.mxu0 0
    %1519 = vmatpush2.bf16.xpose.msra.mxu0 0
    %1520 = vmatprep.subr.bf16.mxu0 0
    %1521 = vmatpush2.bf16.xpose.msra.mxu0 0
    %1522 = vmatprep.subr.bf16.mxu0 0
    %1523 = vmatpush2.bf16.xpose.msra.mxu0 0
    %1524 = vmatprep.subr.bf16.mxu0 0
    %1525 = vmatpush2.bf16.xpose.msra.mxu0 0
    %1526 = vmatprep.mubr.bf16.mxu0 0
    %1527 = vmatmul.mubr.bf16.gmra.mxu0 %v1489
    %v1528 = vpop.f32.mrf.mxu0
    %v1529 = vadd.f32 0.0, %v1528
    %v1530 = vpop.f32.mrf.mxu0
    %v1531 = vpop.f32.mrf.mxu0
    %v1532 = vpop.f32.mrf.mxu0
    %1533 = vdwg.mxu0
    %1534 = vrot.lane.b32.xlu0 %v316, 96
    %v1535 = vpop.permute.xlu0 %1534
    %1536 = vrot.lane.b32.xlu0 %v316, 32
    %v1537 = vpop.permute.xlu0 %1536
    %v1539 = vsel %vm328, %v1535, 0
    %v1542 = vsel %vm328, %v1537, 0
    %1544 = vmatprep.subr.bf16.mxu0 0
    %1545 = vmatpush1.bf16.xpose.msra.mxu0 0
    %1546 = vmatprep.subr.bf16.mxu0 0
    %1547 = vmatpush1.bf16.xpose.msra.mxu0 0
    %1548 = vmatprep.subr.bf16.mxu0 0
    %1549 = vmatpush1.bf16.xpose.msra.mxu0 0
    %1550 = vmatprep.subr.bf16.mxu0 0
    %1551 = vmatpush1.bf16.xpose.msra.mxu0 0
    %1552 = vmatprep.subr.bf16.mxu0 0
    %1553 = vmatpush1.bf16.xpose.msra.mxu0 0
    %1554 = vmatprep.subr.bf16.mxu0 0
    %1555 = vmatpush1.bf16.xpose.msra.mxu0 0
    %1556 = vmatprep.subr.bf16.mxu0 0
    %1557 = vmatpush1.bf16.xpose.msra.mxu0 0
    %1558 = vmatprep.subr.bf16.mxu0 0
    %1559 = vmatpush1.bf16.xpose.msra.mxu0 %v1542
    %1560 = vmatprep.subr.bf16.mxu0 0
    %1561 = vmatpush2.bf16.xpose.msra.mxu0 0
    %1562 = vmatprep.subr.bf16.mxu0 0
    %1563 = vmatpush2.bf16.xpose.msra.mxu0 0
    %1564 = vmatprep.subr.bf16.mxu0 0
    %1565 = vmatpush2.bf16.xpose.msra.mxu0 0
    %1566 = vmatprep.subr.bf16.mxu0 0
    %1567 = vmatpush2.bf16.xpose.msra.mxu0 0
    %1568 = vmatprep.subr.bf16.mxu0 0
    %1569 = vmatpush2.bf16.xpose.msra.mxu0 0
    %1570 = vmatprep.subr.bf16.mxu0 0
    %1571 = vmatpush2.bf16.xpose.msra.mxu0 0
    %1572 = vmatprep.subr.bf16.mxu0 0
    %1573 = vmatpush2.bf16.xpose.msra.mxu0 0
    %1574 = vmatprep.subr.bf16.mxu0 0
    %1575 = vmatpush2.bf16.xpose.msra.mxu0 0
    %1576 = vmatprep.mubr.bf16.mxu0 0
    %1577 = vmatmul.mubr.bf16.gmra.mxu0 %v1539
    %v1578 = vpop.f32.mrf.mxu0
    %v1579 = vadd.f32 0.0, %v1578
    %v1580 = vpop.f32.mrf.mxu0
    %v1581 = vpop.f32.mrf.mxu0
    %v1582 = vpop.f32.mrf.mxu0
    %1583 = vdwg.mxu0
    %v1584 = vsel %vm718, %v1229, -inf
    %1585 = vmax.xlane.f32.xlu0 %v1584
    %v1586 = vpop.xlane.xlu0 %1585
    %v1587 = vsel %vm718, %v1279, -inf
    %1588 = vmax.xlane.f32.xlu0 %v1587
    %v1589 = vpop.xlane.xlu0 %1588
    %v1590 = vsel %vm718, %v1329, -inf
    %1591 = vmax.xlane.f32.xlu0 %v1590
    %v1592 = vpop.xlane.xlu0 %1591
    %v1593 = vsel %vm718, %v1379, -inf
    %1594 = vmax.xlane.f32.xlu0 %v1593
    %v1595 = vpop.xlane.xlu0 %1594
    %v1596 = vsel %vm718, %v1429, -inf
    %1597 = vmax.xlane.f32.xlu0 %v1596
    %v1598 = vpop.xlane.xlu0 %1597
    %v1599 = vsel %vm718, %v1479, -inf
    %1600 = vmax.xlane.f32.xlu0 %v1599
    %v1601 = vpop.xlane.xlu0 %1600
    %v1602 = vsel %vm718, %v1529, -inf
    %1603 = vmax.xlane.f32.xlu0 %v1602
    %v1604 = vpop.xlane.xlu0 %1603
    %v1605 = vsel %vm718, %v1579, -inf
    %1606 = vmax.xlane.f32.xlu0 %v1605
    %v1607 = vpop.xlane.xlu0 %1606
    %v1608 = vsub.f32 %v1229, %v1586
    %v1609 = vsub.f32 %v1279, %v1589
    %v1610 = vsub.f32 %v1329, %v1592
    %v1611 = vsub.f32 %v1379, %v1595
    %v1612 = vsub.f32 %v1429, %v1598
    %v1613 = vsub.f32 %v1479, %v1601
    %v1614 = vsub.f32 %v1529, %v1604
    %v1615 = vsub.f32 %v1579, %v1607
    %v1616 = vmul.f32 %v1608, 1.442695
    %v1617 = vpow.pop %v1616
    %v1618 = vmul.f32 %v1609, 1.442695
    %v1619 = vpow.pop %v1618
    %v1620 = vmul.f32 %v1610, 1.442695
    %v1621 = vpow.pop %v1620
    %v1622 = vmul.f32 %v1611, 1.442695
    %v1623 = vpow.pop %v1622
    %v1624 = vmul.f32 %v1612, 1.442695
    %v1625 = vpow.pop %v1624
    %v1626 = vmul.f32 %v1613, 1.442695
    %v1627 = vpow.pop %v1626
    %v1628 = vmul.f32 %v1614, 1.442695
    %v1629 = vpow.pop %v1628
    %v1630 = vmul.f32 %v1615, 1.442695
    %v1631 = vpow.pop %v1630
    %v1632 = vsel %vm718, %v1617, 0.0
    %1633 = vadd.xlane.f32.xlu0 %v1632
    %v1634 = vpop.xlane.xlu0 %1633
    %v1635 = vsel %vm718, %v1619, 0.0
    %1636 = vadd.xlane.f32.xlu0 %v1635
    %v1637 = vpop.xlane.xlu0 %1636
    %v1638 = vsel %vm718, %v1621, 0.0
    %1639 = vadd.xlane.f32.xlu0 %v1638
    %v1640 = vpop.xlane.xlu0 %1639
    %v1641 = vsel %vm718, %v1623, 0.0
    %1642 = vadd.xlane.f32.xlu0 %v1641
    %v1643 = vpop.xlane.xlu0 %1642
    %v1644 = vsel %vm718, %v1625, 0.0
    %1645 = vadd.xlane.f32.xlu0 %v1644
    %v1646 = vpop.xlane.xlu0 %1645
    %v1647 = vsel %vm718, %v1627, 0.0
    %1648 = vadd.xlane.f32.xlu0 %v1647
    %v1649 = vpop.xlane.xlu0 %1648
    %v1650 = vsel %vm718, %v1629, 0.0
    %1651 = vadd.xlane.f32.xlu0 %v1650
    %v1652 = vpop.xlane.xlu0 %1651
    %v1653 = vsel %vm718, %v1631, 0.0
    %1654 = vadd.xlane.f32.xlu0 %v1653
    %v1655 = vpop.xlane.xlu0 %1654
    %v1656 = vrcp.pop %v1634
    %v1657 = vrcp.pop %v1637
    %v1658 = vrcp.pop %v1640
    %v1659 = vrcp.pop %v1643
    %v1660 = vrcp.pop %v1646
    %v1661 = vrcp.pop %v1649
    %v1662 = vrcp.pop %v1652
    %v1663 = vrcp.pop %v1655
    %v1664 = vmul.f32 %v1617, %v1656
    %v1665 = vmul.f32 %v1619, %v1657
    %v1666 = vmul.f32 %v1621, %v1658
    %v1667 = vmul.f32 %v1623, %v1659
    %v1668 = vmul.f32 %v1625, %v1660
    %v1669 = vmul.f32 %v1627, %v1661
    %v1670 = vmul.f32 %v1629, %v1662
    %v1671 = vmul.f32 %v1631, %v1663
    %v1672 = vpack.c.bf16 %v1664, %v1664
    %v1673 = vpack.c.bf16 %v1665, %v1665
    %v1674 = vpack.c.bf16 %v1666, %v1666
    %v1675 = vpack.c.bf16 %v1667, %v1667
    %v1676 = vpack.c.bf16 %v1668, %v1668
    %v1677 = vpack.c.bf16 %v1669, %v1669
    %v1678 = vpack.c.bf16 %v1670, %v1670
    %v1679 = vpack.c.bf16 %v1671, %v1671
    %1681 = vrot.lane.b32.xlu0 %v317, 96
    %v1682 = vpop.permute.xlu0 %1681
    %v1684 = vsel %vm718, %v1672, 0
    %v1687 = vsel %vm818, %v1682, 0
    %1689 = vmatprep.subr.bf16.mxu0 0
    %1690 = vmatpush1.bf16.msra.mxu0 0
    %1691 = vmatprep.subr.bf16.mxu0 0
    %1692 = vmatpush1.bf16.msra.mxu0 0
    %1693 = vmatprep.subr.bf16.mxu0 0
    %1694 = vmatpush1.bf16.msra.mxu0 0
    %1695 = vmatprep.subr.bf16.mxu0 0
    %1696 = vmatpush1.bf16.msra.mxu0 0
    %1697 = vmatprep.subr.bf16.mxu0 0
    %1698 = vmatpush1.bf16.msra.mxu0 0
    %1699 = vmatprep.subr.bf16.mxu0 0
    %1700 = vmatpush1.bf16.msra.mxu0 0
    %1701 = vmatprep.subr.bf16.mxu0 0
    %1702 = vmatpush1.bf16.msra.mxu0 0
    %1703 = vmatprep.subr.bf16.mxu0 0
    %1704 = vmatpush1.bf16.msra.mxu0 %v1687
    %1705 = vmatprep.subr.bf16.mxu0 0
    %1706 = vmatpush2.bf16.msra.mxu0 0
    %1707 = vmatprep.subr.bf16.mxu0 0
    %1708 = vmatpush2.bf16.msra.mxu0 0
    %1709 = vmatprep.subr.bf16.mxu0 0
    %1710 = vmatpush2.bf16.msra.mxu0 0
    %1711 = vmatprep.subr.bf16.mxu0 0
    %1712 = vmatpush2.bf16.msra.mxu0 0
    %1713 = vmatprep.subr.bf16.mxu0 0
    %1714 = vmatpush2.bf16.msra.mxu0 0
    %1715 = vmatprep.subr.bf16.mxu0 0
    %1716 = vmatpush2.bf16.msra.mxu0 0
    %1717 = vmatprep.subr.bf16.mxu0 0
    %1718 = vmatpush2.bf16.msra.mxu0 0
    %1719 = vmatprep.subr.bf16.mxu0 0
    %1720 = vmatpush2.bf16.msra.mxu0 0
    %1721 = vmatprep.mubr.bf16.mxu0 0
    %1722 = vmatmul.mubr.bf16.gmra.mxu0 %v1684
    %v1723 = vpop.f32.mrf.mxu0
    %v1724 = vadd.f32 0.0, %v1723
    %v1725 = vpop.f32.mrf.mxu0
    %v1726 = vpop.f32.mrf.mxu0
    %v1727 = vpop.f32.mrf.mxu0
    %1728 = vdwg.mxu0
    %1730 = vrot.lane.b32.xlu0 %v318, 96
    %v1731 = vpop.permute.xlu0 %1730
    %v1733 = vsel %vm718, %v1673, 0
    %v1736 = vsel %vm818, %v1731, 0
    %1738 = vmatprep.subr.bf16.mxu0 0
    %1739 = vmatpush1.bf16.msra.mxu0 0
    %1740 = vmatprep.subr.bf16.mxu0 0
    %1741 = vmatpush1.bf16.msra.mxu0 0
    %1742 = vmatprep.subr.bf16.mxu0 0
    %1743 = vmatpush1.bf16.msra.mxu0 0
    %1744 = vmatprep.subr.bf16.mxu0 0
    %1745 = vmatpush1.bf16.msra.mxu0 0
    %1746 = vmatprep.subr.bf16.mxu0 0
    %1747 = vmatpush1.bf16.msra.mxu0 0
    %1748 = vmatprep.subr.bf16.mxu0 0
    %1749 = vmatpush1.bf16.msra.mxu0 0
    %1750 = vmatprep.subr.bf16.mxu0 0
    %1751 = vmatpush1.bf16.msra.mxu0 0
    %1752 = vmatprep.subr.bf16.mxu0 0
    %1753 = vmatpush1.bf16.msra.mxu0 %v1736
    %1754 = vmatprep.subr.bf16.mxu0 0
    %1755 = vmatpush2.bf16.msra.mxu0 0
    %1756 = vmatprep.subr.bf16.mxu0 0
    %1757 = vmatpush2.bf16.msra.mxu0 0
    %1758 = vmatprep.subr.bf16.mxu0 0
    %1759 = vmatpush2.bf16.msra.mxu0 0
    %1760 = vmatprep.subr.bf16.mxu0 0
    %1761 = vmatpush2.bf16.msra.mxu0 0
    %1762 = vmatprep.subr.bf16.mxu0 0
    %1763 = vmatpush2.bf16.msra.mxu0 0
    %1764 = vmatprep.subr.bf16.mxu0 0
    %1765 = vmatpush2.bf16.msra.mxu0 0
    %1766 = vmatprep.subr.bf16.mxu0 0
    %1767 = vmatpush2.bf16.msra.mxu0 0
    %1768 = vmatprep.subr.bf16.mxu0 0
    %1769 = vmatpush2.bf16.msra.mxu0 0
    %1770 = vmatprep.mubr.bf16.mxu0 0
    %1771 = vmatmul.mubr.bf16.gmra.mxu0 %v1733
    %v1772 = vpop.f32.mrf.mxu0
    %v1773 = vadd.f32 0.0, %v1772
    %v1774 = vpop.f32.mrf.mxu0
    %v1775 = vpop.f32.mrf.mxu0
    %v1776 = vpop.f32.mrf.mxu0
    %1777 = vdwg.mxu0
    %1779 = vrot.lane.b32.xlu0 %v319, 96
    %v1780 = vpop.permute.xlu0 %1779
    %v1782 = vsel %vm718, %v1674, 0
    %v1785 = vsel %vm818, %v1780, 0
    %1787 = vmatprep.subr.bf16.mxu0 0
    %1788 = vmatpush1.bf16.msra.mxu0 0
    %1789 = vmatprep.subr.bf16.mxu0 0
    %1790 = vmatpush1.bf16.msra.mxu0 0
    %1791 = vmatprep.subr.bf16.mxu0 0
    %1792 = vmatpush1.bf16.msra.mxu0 0
    %1793 = vmatprep.subr.bf16.mxu0 0
    %1794 = vmatpush1.bf16.msra.mxu0 0
    %1795 = vmatprep.subr.bf16.mxu0 0
    %1796 = vmatpush1.bf16.msra.mxu0 0
    %1797 = vmatprep.subr.bf16.mxu0 0
    %1798 = vmatpush1.bf16.msra.mxu0 0
    %1799 = vmatprep.subr.bf16.mxu0 0
    %1800 = vmatpush1.bf16.msra.mxu0 0
    %1801 = vmatprep.subr.bf16.mxu0 0
    %1802 = vmatpush1.bf16.msra.mxu0 %v1785
    %1803 = vmatprep.subr.bf16.mxu0 0
    %1804 = vmatpush2.bf16.msra.mxu0 0
    %1805 = vmatprep.subr.bf16.mxu0 0
    %1806 = vmatpush2.bf16.msra.mxu0 0
    %1807 = vmatprep.subr.bf16.mxu0 0
    %1808 = vmatpush2.bf16.msra.mxu0 0
    %1809 = vmatprep.subr.bf16.mxu0 0
    %1810 = vmatpush2.bf16.msra.mxu0 0
    %1811 = vmatprep.subr.bf16.mxu0 0
    %1812 = vmatpush2.bf16.msra.mxu0 0
    %1813 = vmatprep.subr.bf16.mxu0 0
    %1814 = vmatpush2.bf16.msra.mxu0 0
    %1815 = vmatprep.subr.bf16.mxu0 0
    %1816 = vmatpush2.bf16.msra.mxu0 0
    %1817 = vmatprep.subr.bf16.mxu0 0
    %1818 = vmatpush2.bf16.msra.mxu0 0
    %1819 = vmatprep.mubr.bf16.mxu0 0
    %1820 = vmatmul.mubr.bf16.gmra.mxu0 %v1782
    %v1821 = vpop.f32.mrf.mxu0
    %v1822 = vadd.f32 0.0, %v1821
    %v1823 = vpop.f32.mrf.mxu0
    %v1824 = vpop.f32.mrf.mxu0
    %v1825 = vpop.f32.mrf.mxu0
    %1826 = vdwg.mxu0
    %1828 = vrot.lane.b32.xlu0 %v320, 96
    %v1829 = vpop.permute.xlu0 %1828
    %v1831 = vsel %vm718, %v1675, 0
    %v1834 = vsel %vm818, %v1829, 0
    %1836 = vmatprep.subr.bf16.mxu0 0
    %1837 = vmatpush1.bf16.msra.mxu0 0
    %1838 = vmatprep.subr.bf16.mxu0 0
    %1839 = vmatpush1.bf16.msra.mxu0 0
    %1840 = vmatprep.subr.bf16.mxu0 0
    %1841 = vmatpush1.bf16.msra.mxu0 0
    %1842 = vmatprep.subr.bf16.mxu0 0
    %1843 = vmatpush1.bf16.msra.mxu0 0
    %1844 = vmatprep.subr.bf16.mxu0 0
    %1845 = vmatpush1.bf16.msra.mxu0 0
    %1846 = vmatprep.subr.bf16.mxu0 0
    %1847 = vmatpush1.bf16.msra.mxu0 0
    %1848 = vmatprep.subr.bf16.mxu0 0
    %1849 = vmatpush1.bf16.msra.mxu0 0
    %1850 = vmatprep.subr.bf16.mxu0 0
    %1851 = vmatpush1.bf16.msra.mxu0 %v1834
    %1852 = vmatprep.subr.bf16.mxu0 0
    %1853 = vmatpush2.bf16.msra.mxu0 0
    %1854 = vmatprep.subr.bf16.mxu0 0
    %1855 = vmatpush2.bf16.msra.mxu0 0
    %1856 = vmatprep.subr.bf16.mxu0 0
    %1857 = vmatpush2.bf16.msra.mxu0 0
    %1858 = vmatprep.subr.bf16.mxu0 0
    %1859 = vmatpush2.bf16.msra.mxu0 0
    %1860 = vmatprep.subr.bf16.mxu0 0
    %1861 = vmatpush2.bf16.msra.mxu0 0
    %1862 = vmatprep.subr.bf16.mxu0 0
    %1863 = vmatpush2.bf16.msra.mxu0 0
    %1864 = vmatprep.subr.bf16.mxu0 0
    %1865 = vmatpush2.bf16.msra.mxu0 0
    %1866 = vmatprep.subr.bf16.mxu0 0
    %1867 = vmatpush2.bf16.msra.mxu0 0
    %1868 = vmatprep.mubr.bf16.mxu0 0
    %1869 = vmatmul.mubr.bf16.gmra.mxu0 %v1831
    %v1870 = vpop.f32.mrf.mxu0
    %v1871 = vadd.f32 0.0, %v1870
    %v1872 = vpop.f32.mrf.mxu0
    %v1873 = vpop.f32.mrf.mxu0
    %v1874 = vpop.f32.mrf.mxu0
    %1875 = vdwg.mxu0
    %1877 = vrot.lane.b32.xlu0 %v321, 96
    %v1878 = vpop.permute.xlu0 %1877
    %v1880 = vsel %vm718, %v1676, 0
    %v1883 = vsel %vm818, %v1878, 0
    %1885 = vmatprep.subr.bf16.mxu0 0
    %1886 = vmatpush1.bf16.msra.mxu0 0
    %1887 = vmatprep.subr.bf16.mxu0 0
    %1888 = vmatpush1.bf16.msra.mxu0 0
    %1889 = vmatprep.subr.bf16.mxu0 0
    %1890 = vmatpush1.bf16.msra.mxu0 0
    %1891 = vmatprep.subr.bf16.mxu0 0
    %1892 = vmatpush1.bf16.msra.mxu0 0
    %1893 = vmatprep.subr.bf16.mxu0 0
    %1894 = vmatpush1.bf16.msra.mxu0 0
    %1895 = vmatprep.subr.bf16.mxu0 0
    %1896 = vmatpush1.bf16.msra.mxu0 0
    %1897 = vmatprep.subr.bf16.mxu0 0
    %1898 = vmatpush1.bf16.msra.mxu0 0
    %1899 = vmatprep.subr.bf16.mxu0 0
    %1900 = vmatpush1.bf16.msra.mxu0 %v1883
    %1901 = vmatprep.subr.bf16.mxu0 0
    %1902 = vmatpush2.bf16.msra.mxu0 0
    %1903 = vmatprep.subr.bf16.mxu0 0
    %1904 = vmatpush2.bf16.msra.mxu0 0
    %1905 = vmatprep.subr.bf16.mxu0 0
    %1906 = vmatpush2.bf16.msra.mxu0 0
    %1907 = vmatprep.subr.bf16.mxu0 0
    %1908 = vmatpush2.bf16.msra.mxu0 0
    %1909 = vmatprep.subr.bf16.mxu0 0
    %1910 = vmatpush2.bf16.msra.mxu0 0
    %1911 = vmatprep.subr.bf16.mxu0 0
    %1912 = vmatpush2.bf16.msra.mxu0 0
    %1913 = vmatprep.subr.bf16.mxu0 0
    %1914 = vmatpush2.bf16.msra.mxu0 0
    %1915 = vmatprep.subr.bf16.mxu0 0
    %1916 = vmatpush2.bf16.msra.mxu0 0
    %1917 = vmatprep.mubr.bf16.mxu0 0
    %1918 = vmatmul.mubr.bf16.gmra.mxu0 %v1880
    %v1919 = vpop.f32.mrf.mxu0
    %v1920 = vadd.f32 0.0, %v1919
    %v1921 = vpop.f32.mrf.mxu0
    %v1922 = vpop.f32.mrf.mxu0
    %v1923 = vpop.f32.mrf.mxu0
    %1924 = vdwg.mxu0
    %1926 = vrot.lane.b32.xlu0 %v322, 96
    %v1927 = vpop.permute.xlu0 %1926
    %v1929 = vsel %vm718, %v1677, 0
    %v1932 = vsel %vm818, %v1927, 0
    %1934 = vmatprep.subr.bf16.mxu0 0
    %1935 = vmatpush1.bf16.msra.mxu0 0
    %1936 = vmatprep.subr.bf16.mxu0 0
    %1937 = vmatpush1.bf16.msra.mxu0 0
    %1938 = vmatprep.subr.bf16.mxu0 0
    %1939 = vmatpush1.bf16.msra.mxu0 0
    %1940 = vmatprep.subr.bf16.mxu0 0
    %1941 = vmatpush1.bf16.msra.mxu0 0
    %1942 = vmatprep.subr.bf16.mxu0 0
    %1943 = vmatpush1.bf16.msra.mxu0 0
    %1944 = vmatprep.subr.bf16.mxu0 0
    %1945 = vmatpush1.bf16.msra.mxu0 0
    %1946 = vmatprep.subr.bf16.mxu0 0
    %1947 = vmatpush1.bf16.msra.mxu0 0
    %1948 = vmatprep.subr.bf16.mxu0 0
    %1949 = vmatpush1.bf16.msra.mxu0 %v1932
    %1950 = vmatprep.subr.bf16.mxu0 0
    %1951 = vmatpush2.bf16.msra.mxu0 0
    %1952 = vmatprep.subr.bf16.mxu0 0
    %1953 = vmatpush2.bf16.msra.mxu0 0
    %1954 = vmatprep.subr.bf16.mxu0 0
    %1955 = vmatpush2.bf16.msra.mxu0 0
    %1956 = vmatprep.subr.bf16.mxu0 0
    %1957 = vmatpush2.bf16.msra.mxu0 0
    %1958 = vmatprep.subr.bf16.mxu0 0
    %1959 = vmatpush2.bf16.msra.mxu0 0
    %1960 = vmatprep.subr.bf16.mxu0 0
    %1961 = vmatpush2.bf16.msra.mxu0 0
    %1962 = vmatprep.subr.bf16.mxu0 0
    %1963 = vmatpush2.bf16.msra.mxu0 0
    %1964 = vmatprep.subr.bf16.mxu0 0
    %1965 = vmatpush2.bf16.msra.mxu0 0
    %1966 = vmatprep.mubr.bf16.mxu0 0
    %1967 = vmatmul.mubr.bf16.gmra.mxu0 %v1929
    %v1968 = vpop.f32.mrf.mxu0
    %v1969 = vadd.f32 0.0, %v1968
    %v1970 = vpop.f32.mrf.mxu0
    %v1971 = vpop.f32.mrf.mxu0
    %v1972 = vpop.f32.mrf.mxu0
    %1973 = vdwg.mxu0
    %1975 = vrot.lane.b32.xlu0 %v323, 96
    %v1976 = vpop.permute.xlu0 %1975
    %v1978 = vsel %vm718, %v1678, 0
    %v1981 = vsel %vm818, %v1976, 0
    %1983 = vmatprep.subr.bf16.mxu0 0
    %1984 = vmatpush1.bf16.msra.mxu0 0
    %1985 = vmatprep.subr.bf16.mxu0 0
    %1986 = vmatpush1.bf16.msra.mxu0 0
    %1987 = vmatprep.subr.bf16.mxu0 0
    %1988 = vmatpush1.bf16.msra.mxu0 0
    %1989 = vmatprep.subr.bf16.mxu0 0
    %1990 = vmatpush1.bf16.msra.mxu0 0
    %1991 = vmatprep.subr.bf16.mxu0 0
    %1992 = vmatpush1.bf16.msra.mxu0 0
    %1993 = vmatprep.subr.bf16.mxu0 0
    %1994 = vmatpush1.bf16.msra.mxu0 0
    %1995 = vmatprep.subr.bf16.mxu0 0
    %1996 = vmatpush1.bf16.msra.mxu0 0
    %1997 = vmatprep.subr.bf16.mxu0 0
    %1998 = vmatpush1.bf16.msra.mxu0 %v1981
    %1999 = vmatprep.subr.bf16.mxu0 0
    %2000 = vmatpush2.bf16.msra.mxu0 0
    %2001 = vmatprep.subr.bf16.mxu0 0
    %2002 = vmatpush2.bf16.msra.mxu0 0
    %2003 = vmatprep.subr.bf16.mxu0 0
    %2004 = vmatpush2.bf16.msra.mxu0 0
    %2005 = vmatprep.subr.bf16.mxu0 0
    %2006 = vmatpush2.bf16.msra.mxu0 0
    %2007 = vmatprep.subr.bf16.mxu0 0
    %2008 = vmatpush2.bf16.msra.mxu0 0
    %2009 = vmatprep.subr.bf16.mxu0 0
    %2010 = vmatpush2.bf16.msra.mxu0 0
    %2011 = vmatprep.subr.bf16.mxu0 0
    %2012 = vmatpush2.bf16.msra.mxu0 0
    %2013 = vmatprep.subr.bf16.mxu0 0
    %2014 = vmatpush2.bf16.msra.mxu0 0
    %2015 = vmatprep.mubr.bf16.mxu0 0
    %2016 = vmatmul.mubr.bf16.gmra.mxu0 %v1978
    %v2017 = vpop.f32.mrf.mxu0
    %v2018 = vadd.f32 0.0, %v2017
    %v2019 = vpop.f32.mrf.mxu0
    %v2020 = vpop.f32.mrf.mxu0
    %v2021 = vpop.f32.mrf.mxu0
    %2022 = vdwg.mxu0
    %2024 = vrot.lane.b32.xlu0 %v324, 96
    %v2025 = vpop.permute.xlu0 %2024
    %v2027 = vsel %vm718, %v1679, 0
    %v2030 = vsel %vm818, %v2025, 0
    %2032 = vmatprep.subr.bf16.mxu0 0
    %2033 = vmatpush1.bf16.msra.mxu0 0
    %2034 = vmatprep.subr.bf16.mxu0 0
    %2035 = vmatpush1.bf16.msra.mxu0 0
    %2036 = vmatprep.subr.bf16.mxu0 0
    %2037 = vmatpush1.bf16.msra.mxu0 0
    %2038 = vmatprep.subr.bf16.mxu0 0
    %2039 = vmatpush1.bf16.msra.mxu0 0
    %2040 = vmatprep.subr.bf16.mxu0 0
    %2041 = vmatpush1.bf16.msra.mxu0 0
    %2042 = vmatprep.subr.bf16.mxu0 0
    %2043 = vmatpush1.bf16.msra.mxu0 0
    %2044 = vmatprep.subr.bf16.mxu0 0
    %2045 = vmatpush1.bf16.msra.mxu0 0
    %2046 = vmatprep.subr.bf16.mxu0 0
    %2047 = vmatpush1.bf16.msra.mxu0 %v2030
    %2048 = vmatprep.subr.bf16.mxu0 0
    %2049 = vmatpush2.bf16.msra.mxu0 0
    %2050 = vmatprep.subr.bf16.mxu0 0
    %2051 = vmatpush2.bf16.msra.mxu0 0
    %2052 = vmatprep.subr.bf16.mxu0 0
    %2053 = vmatpush2.bf16.msra.mxu0 0
    %2054 = vmatprep.subr.bf16.mxu0 0
    %2055 = vmatpush2.bf16.msra.mxu0 0
    %2056 = vmatprep.subr.bf16.mxu0 0
    %2057 = vmatpush2.bf16.msra.mxu0 0
    %2058 = vmatprep.subr.bf16.mxu0 0
    %2059 = vmatpush2.bf16.msra.mxu0 0
    %2060 = vmatprep.subr.bf16.mxu0 0
    %2061 = vmatpush2.bf16.msra.mxu0 0
    %2062 = vmatprep.subr.bf16.mxu0 0
    %2063 = vmatpush2.bf16.msra.mxu0 0
    %2064 = vmatprep.mubr.bf16.mxu0 0
    %2065 = vmatmul.mubr.bf16.gmra.mxu0 %v2027
    %v2066 = vpop.f32.mrf.mxu0
    %v2067 = vadd.f32 0.0, %v2066
    %v2068 = vpop.f32.mrf.mxu0
    %v2069 = vpop.f32.mrf.mxu0
    %v2070 = vpop.f32.mrf.mxu0
    %2071 = vdwg.mxu0
    %2080 = vrot.lane.b32.xlu0 %v1724, 32
    %v2081 = vpop.permute.xlu0 %2080
    %2082 = vrot.lane.b32.xlu0 %v1773, 32
    %v2083 = vpop.permute.xlu0 %2082
    %2084 = vrot.lane.b32.xlu0 %v1822, 32
    %v2085 = vpop.permute.xlu0 %2084
    %2086 = vrot.lane.b32.xlu0 %v1871, 32
    %v2087 = vpop.permute.xlu0 %2086
    %2088 = vrot.lane.b32.xlu0 %v1920, 32
    %v2089 = vpop.permute.xlu0 %2088
    %2090 = vrot.lane.b32.xlu0 %v1969, 32
    %v2091 = vpop.permute.xlu0 %2090
    %2092 = vrot.lane.b32.xlu0 %v2018, 32
    %v2093 = vpop.permute.xlu0 %2092
    %2094 = vrot.lane.b32.xlu0 %v2067, 32
    %v2095 = vpop.permute.xlu0 %2094
    %v2104 = vsel %vm328, %v857, %v2081
    %v2105 = vsel %vm328, %v903, %v2083
    %v2106 = vsel %vm328, %v949, %v2085
    %v2107 = vsel %vm328, %v995, %v2087
    %v2108 = vsel %vm328, %v1041, %v2089
    %v2109 = vsel %vm328, %v1087, %v2091
    %v2110 = vsel %vm328, %v1133, %v2093
    %v2111 = vsel %vm328, %v1179, %v2095
    %v2112 = vpack.c.bf16 %v2105, %v2104
    %v2113 = vpack.c.bf16 %v2107, %v2106
    %v2114 = vpack.c.bf16 %v2109, %v2108
    %v2115 = vpack.c.bf16 %v2111, %v2110
    %v2116 = vld [vmem:[%s4] sm:$0xf]
    %v2117 = vld [vmem:[%s4 + $0x4] sm:$0xf]
    %v2118 = vld [vmem:[%s4 + $0x8] sm:$0xf]
    %v2119 = vld [vmem:[%s4 + $0xc] sm:$0xf]
    %v2120 = vld [vmem:[%s4 + $0x10] sm:$0xf]
    %v2121 = vld [vmem:[%s4 + $0x14] sm:$0xf]
    %v2122 = vld [vmem:[%s4 + $0x18] sm:$0xf]
    %v2123 = vld [vmem:[%s4 + $0x1c] sm:$0xf]
    %v2124 = vlaneseq
    %v2125 = vshrl.u32 %v2124, 7
    %v2126 = vsub.s32 1, %v2125
    %v2127 = vrot.slane %v40, %v2126
    %v2136 = vunpack.c.l.b16 %v2116
    %v2137 = vunpack.c.l.b16 %v2117
    %v2138 = vunpack.c.l.b16 %v2118
    %v2139 = vunpack.c.l.b16 %v2119
    %v2140 = vunpack.c.l.b16 %v2120
    %v2141 = vunpack.c.l.b16 %v2121
    %v2142 = vunpack.c.l.b16 %v2122
    %v2143 = vunpack.c.l.b16 %v2123
    %v2144 = vpack.c.b16 %v2137, %v2136
    %v2145 = vpack.c.b16 %v2139, %v2138
    %v2146 = vpack.c.b16 %v2141, %v2140
    %v2147 = vpack.c.b16 %v2143, %v2142
    %v2153 = vsel %vm223, %v2112, 0
    %v2156 = vsel %vm223, %v2113, 0
    %v2159 = vsel %vm223, %v2114, 0
    %v2162 = vsel %vm223, %v2115, 0
    %2164 = vmatprep.subr.bf16.mxu0 0
    %2165 = vmatpush1.bf16.msra.mxu0 0
    %2166 = vmatprep.subr.bf16.mxu0 0
    %2167 = vmatpush1.bf16.msra.mxu0 0
    %2168 = vmatprep.subr.bf16.mxu0 0
    %2169 = vmatpush1.bf16.msra.mxu0 0
    %2170 = vmatprep.subr.bf16.mxu0 0
    %2171 = vmatpush1.bf16.msra.mxu0 0
    %2172 = vmatprep.subr.bf16.mxu0 0
    %2173 = vmatpush1.bf16.msra.mxu0 %v2147
    %2174 = vmatprep.subr.bf16.mxu0 0
    %2175 = vmatpush1.bf16.msra.mxu0 %v2146
    %2176 = vmatprep.subr.bf16.mxu0 0
    %2177 = vmatpush1.bf16.msra.mxu0 %v2145
    %2178 = vmatprep.subr.bf16.mxu0 0
    %2179 = vmatpush1.bf16.msra.mxu0 %v2144
    %2180 = vmatprep.subr.bf16.mxu0 0
    %2181 = vmatpush2.bf16.msra.mxu0 0
    %2182 = vmatprep.subr.bf16.mxu0 0
    %2183 = vmatpush2.bf16.msra.mxu0 0
    %2184 = vmatprep.subr.bf16.mxu0 0
    %2185 = vmatpush2.bf16.msra.mxu0 0
    %2186 = vmatprep.subr.bf16.mxu0 0
    %2187 = vmatpush2.bf16.msra.mxu0 0
    %2188 = vmatprep.subr.bf16.mxu0 0
    %2189 = vmatpush2.bf16.msra.mxu0 0
    %2190 = vmatprep.subr.bf16.mxu0 0
    %2191 = vmatpush2.bf16.msra.mxu0 0
    %2192 = vmatprep.subr.bf16.mxu0 0
    %2193 = vmatpush2.bf16.msra.mxu0 0
    %2194 = vmatprep.subr.bf16.mxu0 0
    %2195 = vmatpush2.bf16.msra.mxu0 0
    %2196 = vmatprep.mubr.bf16.mxu0 0
    %2197 = vmatmul.mubr.bf16.gmra.mxu0 %v2153
    %v2198 = vpop.f32.mrf.mxu0
    %v2199 = vadd.f32 %v2127, %v2198
    %v2200 = vpop.f32.mrf.mxu0
    %v2201 = vpop.f32.mrf.mxu0
    %v2202 = vadd.f32 %v2127, %v2201
    %v2203 = vpop.f32.mrf.mxu0
    %2204 = vmatprep.mubr.bf16.mxu0 0
    %2205 = vmatmul.mubr.bf16.gmra.mxu0 %v2156
    %v2206 = vpop.f32.mrf.mxu0
    %v2207 = vadd.f32 %v2127, %v2206
    %v2208 = vpop.f32.mrf.mxu0
    %v2209 = vpop.f32.mrf.mxu0
    %v2210 = vadd.f32 %v2127, %v2209
    %v2211 = vpop.f32.mrf.mxu0
    %2212 = vmatprep.mubr.bf16.mxu0 0
    %2213 = vmatmul.mubr.bf16.gmra.mxu0 %v2159
    %v2214 = vpop.f32.mrf.mxu0
    %v2215 = vadd.f32 %v2127, %v2214
    %v2216 = vpop.f32.mrf.mxu0
    %v2217 = vpop.f32.mrf.mxu0
    %v2218 = vadd.f32 %v2127, %v2217
    %v2219 = vpop.f32.mrf.mxu0
    %2220 = vmatprep.mubr.bf16.mxu0 0
    %2221 = vmatmul.mubr.bf16.gmra.mxu0 %v2162
    %v2222 = vpop.f32.mrf.mxu0
    %v2223 = vadd.f32 %v2127, %v2222
    %v2224 = vpop.f32.mrf.mxu0
    %v2225 = vpop.f32.mrf.mxu0
    %v2226 = vadd.f32 %v2127, %v2225
    %v2227 = vpop.f32.mrf.mxu0
    %2228 = vdwg.mxu0
    %v2229 = vadd.f32 %v129, %v2199
    %v2230 = vadd.f32 %v132, %v2202
    %v2231 = vadd.f32 %v137, %v2207
    %v2232 = vadd.f32 %v140, %v2210
    %v2233 = vadd.f32 %v145, %v2215
    %v2234 = vadd.f32 %v148, %v2218
    %v2235 = vadd.f32 %v153, %v2223
    %v2236 = vadd.f32 %v156, %v2226
    %v2237 = vsel %vm223, %v2229, 0.0
    %2238 = vadd.xlane.f32.xlu0 %v2237
    %v2239 = vpop.xlane.xlu0 %2238
    %v2240 = vsel %vm223, %v2230, 0.0
    %2241 = vadd.xlane.f32.xlu0 %v2240
    %v2242 = vpop.xlane.xlu0 %2241
    %v2243 = vsel %vm223, %v2231, 0.0
    %2244 = vadd.xlane.f32.xlu0 %v2243
    %v2245 = vpop.xlane.xlu0 %2244
    %v2246 = vsel %vm223, %v2232, 0.0
    %2247 = vadd.xlane.f32.xlu0 %v2246
    %v2248 = vpop.xlane.xlu0 %2247
    %v2249 = vsel %vm223, %v2233, 0.0
    %2250 = vadd.xlane.f32.xlu0 %v2249
    %v2251 = vpop.xlane.xlu0 %2250
    %v2252 = vsel %vm223, %v2234, 0.0
    %2253 = vadd.xlane.f32.xlu0 %v2252
    %v2254 = vpop.xlane.xlu0 %2253
    %v2255 = vsel %vm223, %v2235, 0.0
    %2256 = vadd.xlane.f32.xlu0 %v2255
    %v2257 = vpop.xlane.xlu0 %2256
    %v2258 = vsel %vm223, %v2236, 0.0
    %2259 = vadd.xlane.f32.xlu0 %v2258
    %v2260 = vpop.xlane.xlu0 %2259
    %v2261 = vrcp.pop 64.0
    %v2262 = vmul.f32 %v2239, %v2261
    %v2263 = vmul.f32 %v2242, %v2261
    %v2264 = vmul.f32 %v2245, %v2261
    %v2265 = vmul.f32 %v2248, %v2261
    %v2266 = vmul.f32 %v2251, %v2261
    %v2267 = vmul.f32 %v2254, %v2261
    %v2268 = vmul.f32 %v2257, %v2261
    %v2269 = vmul.f32 %v2260, %v2261
    %v2270 = vsub.f32 %v2229, %v2262
    %v2271 = vsub.f32 %v2230, %v2263
    %v2272 = vsub.f32 %v2231, %v2264
    %v2273 = vsub.f32 %v2232, %v2265
    %v2274 = vsub.f32 %v2233, %v2266
    %v2275 = vsub.f32 %v2234, %v2267
    %v2276 = vsub.f32 %v2235, %v2268
    %v2277 = vsub.f32 %v2236, %v2269
    %v2278 = vmul.f32 %v2270, %v2270
    %v2279 = vmul.f32 %v2271, %v2271
    %v2280 = vmul.f32 %v2272, %v2272
    %v2281 = vmul.f32 %v2273, %v2273
    %v2282 = vmul.f32 %v2274, %v2274
    %v2283 = vmul.f32 %v2275, %v2275
    %v2284 = vmul.f32 %v2276, %v2276
    %v2285 = vmul.f32 %v2277, %v2277
    %v2286 = vsel %vm223, %v2278, 0.0
    %2287 = vadd.xlane.f32.xlu0 %v2286
    %v2288 = vpop.xlane.xlu0 %2287
    %v2289 = vsel %vm223, %v2279, 0.0
    %2290 = vadd.xlane.f32.xlu0 %v2289
    %v2291 = vpop.xlane.xlu0 %2290
    %v2292 = vsel %vm223, %v2280, 0.0
    %2293 = vadd.xlane.f32.xlu0 %v2292
    %v2294 = vpop.xlane.xlu0 %2293
    %v2295 = vsel %vm223, %v2281, 0.0
    %2296 = vadd.xlane.f32.xlu0 %v2295
    %v2297 = vpop.xlane.xlu0 %2296
    %v2298 = vsel %vm223, %v2282, 0.0
    %2299 = vadd.xlane.f32.xlu0 %v2298
    %v2300 = vpop.xlane.xlu0 %2299
    %v2301 = vsel %vm223, %v2283, 0.0
    %2302 = vadd.xlane.f32.xlu0 %v2301
    %v2303 = vpop.xlane.xlu0 %2302
    %v2304 = vsel %vm223, %v2284, 0.0
    %2305 = vadd.xlane.f32.xlu0 %v2304
    %v2306 = vpop.xlane.xlu0 %2305
    %v2307 = vsel %vm223, %v2285, 0.0
    %2308 = vadd.xlane.f32.xlu0 %v2307
    %v2309 = vpop.xlane.xlu0 %2308
    %v2310 = vmul.f32 %v2288, %v2261
    %v2311 = vmul.f32 %v2291, %v2261
    %v2312 = vmul.f32 %v2294, %v2261
    %v2313 = vmul.f32 %v2297, %v2261
    %v2314 = vmul.f32 %v2300, %v2261
    %v2315 = vmul.f32 %v2303, %v2261
    %v2316 = vmul.f32 %v2306, %v2261
    %v2317 = vmul.f32 %v2309, %v2261
    %v2318 = vadd.f32 %v2310, 1e-05
    %v2319 = vadd.f32 %v2311, 1e-05
    %v2320 = vadd.f32 %v2312, 1e-05
    %v2321 = vadd.f32 %v2313, 1e-05
    %v2322 = vadd.f32 %v2314, 1e-05
    %v2323 = vadd.f32 %v2315, 1e-05
    %v2324 = vadd.f32 %v2316, 1e-05
    %v2325 = vadd.f32 %v2317, 1e-05
    %v2326 = vrsqrt.pop %v2318
    %v2327 = vrsqrt.pop %v2319
    %v2328 = vrsqrt.pop %v2320
    %v2329 = vrsqrt.pop %v2321
    %v2330 = vrsqrt.pop %v2322
    %v2331 = vrsqrt.pop %v2323
    %v2332 = vrsqrt.pop %v2324
    %v2333 = vrsqrt.pop %v2325
    %v2334 = vmul.f32 %v2270, %v2326
    %v2335 = vmul.f32 %v2271, %v2327
    %v2336 = vmul.f32 %v2272, %v2328
    %v2337 = vmul.f32 %v2273, %v2329
    %v2338 = vmul.f32 %v2274, %v2330
    %v2339 = vmul.f32 %v2275, %v2331
    %v2340 = vmul.f32 %v2276, %v2332
    %v2341 = vmul.f32 %v2277, %v2333
    %v2342 = vlaneseq
    %v2343 = vshrl.u32 %v2342, 7
    %v2344 = vsub.s32 2, %v2343
    %v2345 = vrot.slane %v40, %v2344
    %v2346 = vmul.f32 %v2334, %v2345
    %v2347 = vmul.f32 %v2335, %v2345
    %v2348 = vmul.f32 %v2336, %v2345
    %v2349 = vmul.f32 %v2337, %v2345
    %v2350 = vmul.f32 %v2338, %v2345
    %v2351 = vmul.f32 %v2339, %v2345
    %v2352 = vmul.f32 %v2340, %v2345
    %v2353 = vmul.f32 %v2341, %v2345
    %v2354 = vlaneseq
    %v2355 = vshrl.u32 %v2354, 7
    %v2356 = vsub.s32 3, %v2355
    %v2357 = vrot.slane %v40, %v2356
    %v2358 = vadd.f32 %v2346, %v2357
    %v2359 = vadd.f32 %v2347, %v2357
    %v2360 = vadd.f32 %v2348, %v2357
    %v2361 = vadd.f32 %v2349, %v2357
    %v2362 = vadd.f32 %v2350, %v2357
    %v2363 = vadd.f32 %v2351, %v2357
    %v2364 = vadd.f32 %v2352, %v2357
    %v2365 = vadd.f32 %v2353, %v2357
    %v2366 = vpack.c.bf16 %v2359, %v2358
    %v2367 = vpack.c.bf16 %v2361, %v2360
    %v2368 = vpack.c.bf16 %v2363, %v2362
    %v2369 = vpack.c.bf16 %v2365, %v2364
    %v2370 = vld [vmem:[%s5] sm:$0xff]
    %v2371 = vld [vmem:[%s5 + $0x8] sm:$0xff]
    %v2372 = vld [vmem:[%s5 + $0x40] sm:$0xff]
    %v2373 = vld [vmem:[%s5 + $0x48] sm:$0xff]
    %v2374 = vld [vmem:[%s5 + $0x80] sm:$0xff]
    %v2375 = vld [vmem:[%s5 + $0x88] sm:$0xff]
    %v2376 = vld [vmem:[%s5 + $0xc0] sm:$0xff]
    %v2377 = vld [vmem:[%s5 + $0xc8] sm:$0xff]
    %v2378 = vld [vmem:[%s5 + $0x100] sm:$0xff]
    %v2379 = vld [vmem:[%s5 + $0x108] sm:$0xff]
    %v2380 = vld [vmem:[%s5 + $0x140] sm:$0xff]
    %v2381 = vld [vmem:[%s5 + $0x148] sm:$0xff]
    %v2382 = vld [vmem:[%s5 + $0x180] sm:$0xff]
    %v2383 = vld [vmem:[%s5 + $0x188] sm:$0xff]
    %v2384 = vld [vmem:[%s5 + $0x1c0] sm:$0xff]
    %v2385 = vld [vmem:[%s5 + $0x1c8] sm:$0xff]
    %v2386 = vld [vmem:[%s6] sm:$0xf]
    %v2388 = vlaneseq
    %v2389 = vshrl.u32 %v2388, 7
    %v2390 = vsub.s32 0, %v2389
    %v2391 = vrot.slane %v2386, %v2390
    %v2392 = vlaneseq
    %v2393 = vshrl.u32 %v2392, 7
    %v2394 = vsub.s32 1, %v2393
    %v2395 = vrot.slane %v2386, %v2394
    %v2396 = vlaneseq
    %v2397 = vshrl.u32 %v2396, 7
    %v2398 = vsub.s32 2, %v2397
    %v2399 = vrot.slane %v2386, %v2398
    %v2400 = vlaneseq
    %v2401 = vshrl.u32 %v2400, 7
    %v2402 = vsub.s32 3, %v2401
    %v2403 = vrot.slane %v2386, %v2402
    %v2424 = vunpack.c.l.b16 %v2370
    %v2425 = vunpack.c.h.b16 %v2370
    %v2426 = vunpack.c.l.b16 %v2371
    %v2427 = vunpack.c.h.b16 %v2371
    %v2428 = vunpack.c.l.b16 %v2372
    %v2429 = vunpack.c.h.b16 %v2372
    %v2430 = vunpack.c.l.b16 %v2373
    %v2431 = vunpack.c.h.b16 %v2373
    %v2432 = vunpack.c.l.b16 %v2374
    %v2433 = vunpack.c.h.b16 %v2374
    %v2434 = vunpack.c.l.b16 %v2375
    %v2435 = vunpack.c.h.b16 %v2375
    %v2436 = vunpack.c.l.b16 %v2376
    %v2437 = vunpack.c.h.b16 %v2376
    %v2438 = vunpack.c.l.b16 %v2377
    %v2439 = vunpack.c.h.b16 %v2377
    %v2440 = vunpack.c.l.b16 %v2378
    %v2441 = vunpack.c.h.b16 %v2378
    %v2442 = vunpack.c.l.b16 %v2379
    %v2443 = vunpack.c.h.b16 %v2379
    %v2444 = vunpack.c.l.b16 %v2380
    %v2445 = vunpack.c.h.b16 %v2380
    %v2446 = vunpack.c.l.b16 %v2381
    %v2447 = vunpack.c.h.b16 %v2381
    %v2448 = vunpack.c.l.b16 %v2382
    %v2449 = vunpack.c.h.b16 %v2382
    %v2450 = vunpack.c.l.b16 %v2383
    %v2451 = vunpack.c.h.b16 %v2383
    %v2452 = vunpack.c.l.b16 %v2384
    %v2453 = vunpack.c.h.b16 %v2384
    %v2454 = vunpack.c.l.b16 %v2385
    %v2455 = vunpack.c.h.b16 %v2385
    %v2456 = vpack.c.b16 %v2428, %v2424
    %v2457 = vpack.c.b16 %v2429, %v2425
    %v2458 = vpack.c.b16 %v2430, %v2426
    %v2459 = vpack.c.b16 %v2431, %v2427
    %v2460 = vpack.c.b16 %v2436, %v2432
    %v2461 = vpack.c.b16 %v2437, %v2433
    %v2462 = vpack.c.b16 %v2438, %v2434
    %v2463 = vpack.c.b16 %v2439, %v2435
    %v2464 = vpack.c.b16 %v2444, %v2440
    %v2465 = vpack.c.b16 %v2445, %v2441
    %v2466 = vpack.c.b16 %v2446, %v2442
    %v2467 = vpack.c.b16 %v2447, %v2443
    %v2468 = vpack.c.b16 %v2452, %v2448
    %v2469 = vpack.c.b16 %v2453, %v2449
    %v2470 = vpack.c.b16 %v2454, %v2450
    %v2471 = vpack.c.b16 %v2455, %v2451
    %v2489 = vsel %vm223, %v2366, 0
    %v2492 = vsel %vm223, %v2367, 0
    %v2495 = vsel %vm223, %v2368, 0
    %v2498 = vsel %vm223, %v2369, 0
    %2500 = vmatprep.subr.bf16.mxu0 0
    %2501 = vmatpush1.bf16.msra.mxu0 0
    %2502 = vmatprep.subr.bf16.mxu0 0
    %2503 = vmatpush1.bf16.msra.mxu0 0
    %2504 = vmatprep.subr.bf16.mxu0 0
    %2505 = vmatpush1.bf16.msra.mxu0 0
    %2506 = vmatprep.subr.bf16.mxu0 0
    %2507 = vmatpush1.bf16.msra.mxu0 0
    %2508 = vmatprep.subr.bf16.mxu0 %v2469
    %2509 = vmatpush1.bf16.msra.mxu0 %v2468
    %2510 = vmatprep.subr.bf16.mxu0 %v2465
    %2511 = vmatpush1.bf16.msra.mxu0 %v2464
    %2512 = vmatprep.subr.bf16.mxu0 %v2461
    %2513 = vmatpush1.bf16.msra.mxu0 %v2460
    %2514 = vmatprep.subr.bf16.mxu0 %v2457
    %2515 = vmatpush1.bf16.msra.mxu0 %v2456
    %2516 = vmatprep.subr.bf16.mxu0 0
    %2517 = vmatpush2.bf16.msra.mxu0 0
    %2518 = vmatprep.subr.bf16.mxu0 0
    %2519 = vmatpush2.bf16.msra.mxu0 0
    %2520 = vmatprep.subr.bf16.mxu0 0
    %2521 = vmatpush2.bf16.msra.mxu0 0
    %2522 = vmatprep.subr.bf16.mxu0 0
    %2523 = vmatpush2.bf16.msra.mxu0 0
    %2524 = vmatprep.subr.bf16.mxu0 0
    %2525 = vmatpush2.bf16.msra.mxu0 0
    %2526 = vmatprep.subr.bf16.mxu0 0
    %2527 = vmatpush2.bf16.msra.mxu0 0
    %2528 = vmatprep.subr.bf16.mxu0 0
    %2529 = vmatpush2.bf16.msra.mxu0 0
    %2530 = vmatprep.subr.bf16.mxu0 0
    %2531 = vmatpush2.bf16.msra.mxu0 0
    %2532 = vmatprep.mubr.bf16.mxu0 0
    %2533 = vmatmul.mubr.bf16.gmra.mxu0 %v2489
    %v2534 = vpop.f32.mrf.mxu0
    %v2535 = vadd.f32 %v2391, %v2534
    %v2536 = vpop.f32.mrf.mxu0
    %v2537 = vadd.f32 %v2395, %v2536
    %v2538 = vpop.f32.mrf.mxu0
    %v2539 = vadd.f32 %v2391, %v2538
    %v2540 = vpop.f32.mrf.mxu0
    %v2541 = vadd.f32 %v2395, %v2540
    %2542 = vmatprep.mubr.bf16.mxu0 0
    %2543 = vmatmul.mubr.bf16.gmra.mxu0 %v2492
    %v2544 = vpop.f32.mrf.mxu0
    %v2545 = vadd.f32 %v2391, %v2544
    %v2546 = vpop.f32.mrf.mxu0
    %v2547 = vadd.f32 %v2395, %v2546
    %v2548 = vpop.f32.mrf.mxu0
    %v2549 = vadd.f32 %v2391, %v2548
    %v2550 = vpop.f32.mrf.mxu0
    %v2551 = vadd.f32 %v2395, %v2550
    %2552 = vmatprep.mubr.bf16.mxu0 0
    %2553 = vmatmul.mubr.bf16.gmra.mxu0 %v2495
    %v2554 = vpop.f32.mrf.mxu0
    %v2555 = vadd.f32 %v2391, %v2554
    %v2556 = vpop.f32.mrf.mxu0
    %v2557 = vadd.f32 %v2395, %v2556
    %v2558 = vpop.f32.mrf.mxu0
    %v2559 = vadd.f32 %v2391, %v2558
    %v2560 = vpop.f32.mrf.mxu0
    %v2561 = vadd.f32 %v2395, %v2560
    %2562 = vmatprep.mubr.bf16.mxu0 0
    %2563 = vmatmul.mubr.bf16.gmra.mxu0 %v2498
    %v2564 = vpop.f32.mrf.mxu0
    %v2565 = vadd.f32 %v2391, %v2564
    %v2566 = vpop.f32.mrf.mxu0
    %v2567 = vadd.f32 %v2395, %v2566
    %v2568 = vpop.f32.mrf.mxu0
    %v2569 = vadd.f32 %v2391, %v2568
    %v2570 = vpop.f32.mrf.mxu0
    %v2571 = vadd.f32 %v2395, %v2570
    %2572 = vdwg.mxu0
    %2573 = vmatprep.subr.bf16.mxu0 0
    %2574 = vmatpush1.bf16.msra.mxu0 0
    %2575 = vmatprep.subr.bf16.mxu0 0
    %2576 = vmatpush1.bf16.msra.mxu0 0
    %2577 = vmatprep.subr.bf16.mxu0 0
    %2578 = vmatpush1.bf16.msra.mxu0 0
    %2579 = vmatprep.subr.bf16.mxu0 0
    %2580 = vmatpush1.bf16.msra.mxu0 0
    %2581 = vmatprep.subr.bf16.mxu0 %v2471
    %2582 = vmatpush1.bf16.msra.mxu0 %v2470
    %2583 = vmatprep.subr.bf16.mxu0 %v2467
    %2584 = vmatpush1.bf16.msra.mxu0 %v2466
    %2585 = vmatprep.subr.bf16.mxu0 %v2463
    %2586 = vmatpush1.bf16.msra.mxu0 %v2462
    %2587 = vmatprep.subr.bf16.mxu0 %v2459
    %2588 = vmatpush1.bf16.msra.mxu0 %v2458
    %2589 = vmatprep.subr.bf16.mxu0 0
    %2590 = vmatpush2.bf16.msra.mxu0 0
    %2591 = vmatprep.subr.bf16.mxu0 0
    %2592 = vmatpush2.bf16.msra.mxu0 0
    %2593 = vmatprep.subr.bf16.mxu0 0
    %2594 = vmatpush2.bf16.msra.mxu0 0
    %2595 = vmatprep.subr.bf16.mxu0 0
    %2596 = vmatpush2.bf16.msra.mxu0 0
    %2597 = vmatprep.subr.bf16.mxu0 0
    %2598 = vmatpush2.bf16.msra.mxu0 0
    %2599 = vmatprep.subr.bf16.mxu0 0
    %2600 = vmatpush2.bf16.msra.mxu0 0
    %2601 = vmatprep.subr.bf16.mxu0 0
    %2602 = vmatpush2.bf16.msra.mxu0 0
    %2603 = vmatprep.subr.bf16.mxu0 0
    %2604 = vmatpush2.bf16.msra.mxu0 0
    %2605 = vmatprep.mubr.bf16.mxu0 0
    %2606 = vmatmul.mubr.bf16.gmra.mxu0 %v2489
    %v2607 = vpop.f32.mrf.mxu0
    %v2608 = vadd.f32 %v2399, %v2607
    %v2609 = vpop.f32.mrf.mxu0
    %v2610 = vadd.f32 %v2403, %v2609
    %v2611 = vpop.f32.mrf.mxu0
    %v2612 = vadd.f32 %v2399, %v2611
    %v2613 = vpop.f32.mrf.mxu0
    %v2614 = vadd.f32 %v2403, %v2613
    %2615 = vmatprep.mubr.bf16.mxu0 0
    %2616 = vmatmul.mubr.bf16.gmra.mxu0 %v2492
    %v2617 = vpop.f32.mrf.mxu0
    %v2618 = vadd.f32 %v2399, %v2617
    %v2619 = vpop.f32.mrf.mxu0
    %v2620 = vadd.f32 %v2403, %v2619
    %v2621 = vpop.f32.mrf.mxu0
    %v2622 = vadd.f32 %v2399, %v2621
    %v2623 = vpop.f32.mrf.mxu0
    %v2624 = vadd.f32 %v2403, %v2623
    %2625 = vmatprep.mubr.bf16.mxu0 0
    %2626 = vmatmul.mubr.bf16.gmra.mxu0 %v2495
    %v2627 = vpop.f32.mrf.mxu0
    %v2628 = vadd.f32 %v2399, %v2627
    %v2629 = vpop.f32.mrf.mxu0
    %v2630 = vadd.f32 %v2403, %v2629
    %v2631 = vpop.f32.mrf.mxu0
    %v2632 = vadd.f32 %v2399, %v2631
    %v2633 = vpop.f32.mrf.mxu0
    %v2634 = vadd.f32 %v2403, %v2633
    %2635 = vmatprep.mubr.bf16.mxu0 0
    %2636 = vmatmul.mubr.bf16.gmra.mxu0 %v2498
    %v2637 = vpop.f32.mrf.mxu0
    %v2638 = vadd.f32 %v2399, %v2637
    %v2639 = vpop.f32.mrf.mxu0
    %v2640 = vadd.f32 %v2403, %v2639
    %v2641 = vpop.f32.mrf.mxu0
    %v2642 = vadd.f32 %v2399, %v2641
    %v2643 = vpop.f32.mrf.mxu0
    %v2644 = vadd.f32 %v2403, %v2643
    %2645 = vdwg.mxu0
    %v2646 = vmax.f32 %v2535, 0.0
    %v2647 = vmax.f32 %v2537, 0.0
    %v2648 = vmax.f32 %v2608, 0.0
    %v2649 = vmax.f32 %v2610, 0.0
    %v2650 = vmax.f32 %v2539, 0.0
    %v2651 = vmax.f32 %v2541, 0.0
    %v2652 = vmax.f32 %v2612, 0.0
    %v2653 = vmax.f32 %v2614, 0.0
    %v2654 = vmax.f32 %v2545, 0.0
    %v2655 = vmax.f32 %v2547, 0.0
    %v2656 = vmax.f32 %v2618, 0.0
    %v2657 = vmax.f32 %v2620, 0.0
    %v2658 = vmax.f32 %v2549, 0.0
    %v2659 = vmax.f32 %v2551, 0.0
    %v2660 = vmax.f32 %v2622, 0.0
    %v2661 = vmax.f32 %v2624, 0.0
    %v2662 = vmax.f32 %v2555, 0.0
    %v2663 = vmax.f32 %v2557, 0.0
    %v2664 = vmax.f32 %v2628, 0.0
    %v2665 = vmax.f32 %v2630, 0.0
    %v2666 = vmax.f32 %v2559, 0.0
    %v2667 = vmax.f32 %v2561, 0.0
    %v2668 = vmax.f32 %v2632, 0.0
    %v2669 = vmax.f32 %v2634, 0.0
    %v2670 = vmax.f32 %v2565, 0.0
    %v2671 = vmax.f32 %v2567, 0.0
    %v2672 = vmax.f32 %v2638, 0.0
    %v2673 = vmax.f32 %v2640, 0.0
    %v2674 = vmax.f32 %v2569, 0.0
    %v2675 = vmax.f32 %v2571, 0.0
    %v2676 = vmax.f32 %v2642, 0.0
    %v2677 = vmax.f32 %v2644, 0.0
    %v2678 = vpack.c.bf16 %v2650, %v2646
    %v2679 = vpack.c.bf16 %v2651, %v2647
    %v2680 = vpack.c.bf16 %v2652, %v2648
    %v2681 = vpack.c.bf16 %v2653, %v2649
    %v2682 = vpack.c.bf16 %v2658, %v2654
    %v2683 = vpack.c.bf16 %v2659, %v2655
    %v2684 = vpack.c.bf16 %v2660, %v2656
    %v2685 = vpack.c.bf16 %v2661, %v2657
    %v2686 = vpack.c.bf16 %v2666, %v2662
    %v2687 = vpack.c.bf16 %v2667, %v2663
    %v2688 = vpack.c.bf16 %v2668, %v2664
    %v2689 = vpack.c.bf16 %v2669, %v2665
    %v2690 = vpack.c.bf16 %v2674, %v2670
    %v2691 = vpack.c.bf16 %v2675, %v2671
    %v2692 = vpack.c.bf16 %v2676, %v2672
    %v2693 = vpack.c.bf16 %v2677, %v2673
    %v2694 = vld [vmem:[%s7] sm:$0xf]
    %v2695 = vld [vmem:[%s7 + $0x4] sm:$0xf]
    %v2696 = vld [vmem:[%s7 + $0x8] sm:$0xf]
    %v2697 = vld [vmem:[%s7 + $0xc] sm:$0xf]
    %v2698 = vld [vmem:[%s7 + $0x10] sm:$0xf]
    %v2699 = vld [vmem:[%s7 + $0x14] sm:$0xf]
    %v2700 = vld [vmem:[%s7 + $0x18] sm:$0xf]
    %v2701 = vld [vmem:[%s7 + $0x1c] sm:$0xf]
    %v2702 = vld [vmem:[%s7 + $0x20] sm:$0xf]
    %v2703 = vld [vmem:[%s7 + $0x24] sm:$0xf]
    %v2704 = vld [vmem:[%s7 + $0x28] sm:$0xf]
    %v2705 = vld [vmem:[%s7 + $0x2c] sm:$0xf]
    %v2706 = vld [vmem:[%s7 + $0x30] sm:$0xf]
    %v2707 = vld [vmem:[%s7 + $0x34] sm:$0xf]
    %v2708 = vld [vmem:[%s7 + $0x38] sm:$0xf]
    %v2709 = vld [vmem:[%s7 + $0x3c] sm:$0xf]
    %v2710 = vld [vmem:[%s7 + $0x40] sm:$0xf]
    %v2711 = vld [vmem:[%s7 + $0x44] sm:$0xf]
    %v2712 = vld [vmem:[%s7 + $0x48] sm:$0xf]
    %v2713 = vld [vmem:[%s7 + $0x4c] sm:$0xf]
    %v2714 = vld [vmem:[%s7 + $0x50] sm:$0xf]
    %v2715 = vld [vmem:[%s7 + $0x54] sm:$0xf]
    %v2716 = vld [vmem:[%s7 + $0x58] sm:$0xf]
    %v2717 = vld [vmem:[%s7 + $0x5c] sm:$0xf]
    %v2718 = vld [vmem:[%s7 + $0x60] sm:$0xf]
    %v2719 = vld [vmem:[%s7 + $0x64] sm:$0xf]
    %v2720 = vld [vmem:[%s7 + $0x68] sm:$0xf]
    %v2721 = vld [vmem:[%s7 + $0x6c] sm:$0xf]
    %v2722 = vld [vmem:[%s7 + $0x70] sm:$0xf]
    %v2723 = vld [vmem:[%s7 + $0x74] sm:$0xf]
    %v2724 = vld [vmem:[%s7 + $0x78] sm:$0xf]
    %v2725 = vld [vmem:[%s7 + $0x7c] sm:$0xf]
    %v2726 = vld [vmem:[%s7 + $0x80] sm:$0xf]
    %v2727 = vld [vmem:[%s7 + $0x84] sm:$0xf]
    %v2728 = vld [vmem:[%s7 + $0x88] sm:$0xf]
    %v2729 = vld [vmem:[%s7 + $0x8c] sm:$0xf]
    %v2730 = vld [vmem:[%s7 + $0x90] sm:$0xf]
    %v2731 = vld [vmem:[%s7 + $0x94] sm:$0xf]
    %v2732 = vld [vmem:[%s7 + $0x98] sm:$0xf]
    %v2733 = vld [vmem:[%s7 + $0x9c] sm:$0xf]
    %v2734 = vld [vmem:[%s7 + $0xa0] sm:$0xf]
    %v2735 = vld [vmem:[%s7 + $0xa4] sm:$0xf]
    %v2736 = vld [vmem:[%s7 + $0xa8] sm:$0xf]
    %v2737 = vld [vmem:[%s7 + $0xac] sm:$0xf]
    %v2738 = vld [vmem:[%s7 + $0xb0] sm:$0xf]
    %v2739 = vld [vmem:[%s7 + $0xb4] sm:$0xf]
    %v2740 = vld [vmem:[%s7 + $0xb8] sm:$0xf]
    %v2741 = vld [vmem:[%s7 + $0xbc] sm:$0xf]
    %v2742 = vld [vmem:[%s7 + $0xc0] sm:$0xf]
    %v2743 = vld [vmem:[%s7 + $0xc4] sm:$0xf]
    %v2744 = vld [vmem:[%s7 + $0xc8] sm:$0xf]
    %v2745 = vld [vmem:[%s7 + $0xcc] sm:$0xf]
    %v2746 = vld [vmem:[%s7 + $0xd0] sm:$0xf]
    %v2747 = vld [vmem:[%s7 + $0xd4] sm:$0xf]
    %v2748 = vld [vmem:[%s7 + $0xd8] sm:$0xf]
    %v2749 = vld [vmem:[%s7 + $0xdc] sm:$0xf]
    %v2750 = vld [vmem:[%s7 + $0xe0] sm:$0xf]
    %v2751 = vld [vmem:[%s7 + $0xe4] sm:$0xf]
    %v2752 = vld [vmem:[%s7 + $0xe8] sm:$0xf]
    %v2753 = vld [vmem:[%s7 + $0xec] sm:$0xf]
    %v2754 = vld [vmem:[%s7 + $0xf0] sm:$0xf]
    %v2755 = vld [vmem:[%s7 + $0xf4] sm:$0xf]
    %v2756 = vld [vmem:[%s7 + $0xf8] sm:$0xf]
    %v2757 = vld [vmem:[%s7 + $0xfc] sm:$0xf]
    %v2758 = vld [vmem:[%s5 + $0x10] sm:$0xff]
    %v2759 = vld [vmem:[%s5 + $0x18] sm:$0xff]
    %v2760 = vld [vmem:[%s5 + $0x50] sm:$0xff]
    %v2761 = vld [vmem:[%s5 + $0x58] sm:$0xff]
    %v2762 = vld [vmem:[%s5 + $0x90] sm:$0xff]
    %v2763 = vld [vmem:[%s5 + $0x98] sm:$0xff]
    %v2764 = vld [vmem:[%s5 + $0xd0] sm:$0xff]
    %v2765 = vld [vmem:[%s5 + $0xd8] sm:$0xff]
    %v2766 = vld [vmem:[%s5 + $0x110] sm:$0xff]
    %v2767 = vld [vmem:[%s5 + $0x118] sm:$0xff]
    %v2768 = vld [vmem:[%s5 + $0x150] sm:$0xff]
    %v2769 = vld [vmem:[%s5 + $0x158] sm:$0xff]
    %v2770 = vld [vmem:[%s5 + $0x190] sm:$0xff]
    %v2771 = vld [vmem:[%s5 + $0x198] sm:$0xff]
    %v2772 = vld [vmem:[%s5 + $0x1d0] sm:$0xff]
    %v2773 = vld [vmem:[%s5 + $0x1d8] sm:$0xff]
    %v2774 = vld [vmem:[%s6 + $0x4] sm:$0xf]
    %v2776 = vlaneseq
    %v2777 = vshrl.u32 %v2776, 7
    %v2778 = vsub.s32 0, %v2777
    %v2779 = vrot.slane %v2774, %v2778
    %v2780 = vlaneseq
    %v2781 = vshrl.u32 %v2780, 7
    %v2782 = vsub.s32 1, %v2781
    %v2783 = vrot.slane %v2774, %v2782
    %v2784 = vlaneseq
    %v2785 = vshrl.u32 %v2784, 7
    %v2786 = vsub.s32 2, %v2785
    %v2787 = vrot.slane %v2774, %v2786
    %v2788 = vlaneseq
    %v2789 = vshrl.u32 %v2788, 7
    %v2790 = vsub.s32 3, %v2789
    %v2791 = vrot.slane %v2774, %v2790
    %v2812 = vunpack.c.l.b16 %v2758
    %v2813 = vunpack.c.h.b16 %v2758
    %v2814 = vunpack.c.l.b16 %v2759
    %v2815 = vunpack.c.h.b16 %v2759
    %v2816 = vunpack.c.l.b16 %v2760
    %v2817 = vunpack.c.h.b16 %v2760
    %v2818 = vunpack.c.l.b16 %v2761
    %v2819 = vunpack.c.h.b16 %v2761
    %v2820 = vunpack.c.l.b16 %v2762
    %v2821 = vunpack.c.h.b16 %v2762
    %v2822 = vunpack.c.l.b16 %v2763
    %v2823 = vunpack.c.h.b16 %v2763
    %v2824 = vunpack.c.l.b16 %v2764
    %v2825 = vunpack.c.h.b16 %v2764
    %v2826 = vunpack.c.l.b16 %v2765
    %v2827 = vunpack.c.h.b16 %v2765
    %v2828 = vunpack.c.l.b16 %v2766
    %v2829 = vunpack.c.h.b16 %v2766
    %v2830 = vunpack.c.l.b16 %v2767
    %v2831 = vunpack.c.h.b16 %v2767
    %v2832 = vunpack.c.l.b16 %v2768
    %v2833 = vunpack.c.h.b16 %v2768
    %v2834 = vunpack.c.l.b16 %v2769
    %v2835 = vunpack.c.h.b16 %v2769
    %v2836 = vunpack.c.l.b16 %v2770
    %v2837 = vunpack.c.h.b16 %v2770
    %v2838 = vunpack.c.l.b16 %v2771
    %v2839 = vunpack.c.h.b16 %v2771
    %v2840 = vunpack.c.l.b16 %v2772
    %v2841 = vunpack.c.h.b16 %v2772
    %v2842 = vunpack.c.l.b16 %v2773
    %v2843 = vunpack.c.h.b16 %v2773
    %v2844 = vpack.c.b16 %v2816, %v2812
    %v2845 = vpack.c.b16 %v2817, %v2813
    %v2846 = vpack.c.b16 %v2818, %v2814
    %v2847 = vpack.c.b16 %v2819, %v2815
    %v2848 = vpack.c.b16 %v2824, %v2820
    %v2849 = vpack.c.b16 %v2825, %v2821
    %v2850 = vpack.c.b16 %v2826, %v2822
    %v2851 = vpack.c.b16 %v2827, %v2823
    %v2852 = vpack.c.b16 %v2832, %v2828
    %v2853 = vpack.c.b16 %v2833, %v2829
    %v2854 = vpack.c.b16 %v2834, %v2830
    %v2855 = vpack.c.b16 %v2835, %v2831
    %v2856 = vpack.c.b16 %v2840, %v2836
    %v2857 = vpack.c.b16 %v2841, %v2837
    %v2858 = vpack.c.b16 %v2842, %v2838
    %v2859 = vpack.c.b16 %v2843, %v2839
    %2876 = vmatprep.subr.bf16.mxu0 0
    %2877 = vmatpush1.bf16.msra.mxu0 0
    %2878 = vmatprep.subr.bf16.mxu0 0
    %2879 = vmatpush1.bf16.msra.mxu0 0
    %2880 = vmatprep.subr.bf16.mxu0 0
    %2881 = vmatpush1.bf16.msra.mxu0 0
    %2882 = vmatprep.subr.bf16.mxu0 0
    %2883 = vmatpush1.bf16.msra.mxu0 0
    %2884 = vmatprep.subr.bf16.mxu0 %v2857
    %2885 = vmatpush1.bf16.msra.mxu0 %v2856
    %2886 = vmatprep.subr.bf16.mxu0 %v2853
    %2887 = vmatpush1.bf16.msra.mxu0 %v2852
    %2888 = vmatprep.subr.bf16.mxu0 %v2849
    %2889 = vmatpush1.bf16.msra.mxu0 %v2848
    %2890 = vmatprep.subr.bf16.mxu0 %v2845
    %2891 = vmatpush1.bf16.msra.mxu0 %v2844
    %2892 = vmatprep.subr.bf16.mxu0 0
    %2893 = vmatpush2.bf16.msra.mxu0 0
    %2894 = vmatprep.subr.bf16.mxu0 0
    %2895 = vmatpush2.bf16.msra.mxu0 0
    %2896 = vmatprep.subr.bf16.mxu0 0
    %2897 = vmatpush2.bf16.msra.mxu0 0
    %2898 = vmatprep.subr.bf16.mxu0 0
    %2899 = vmatpush2.bf16.msra.mxu0 0
    %2900 = vmatprep.subr.bf16.mxu0 0
    %2901 = vmatpush2.bf16.msra.mxu0 0
    %2902 = vmatprep.subr.bf16.mxu0 0
    %2903 = vmatpush2.bf16.msra.mxu0 0
    %2904 = vmatprep.subr.bf16.mxu0 0
    %2905 = vmatpush2.bf16.msra.mxu0 0
    %2906 = vmatprep.subr.bf16.mxu0 0
    %2907 = vmatpush2.bf16.msra.mxu0 0
    %2908 = vmatprep.mubr.bf16.mxu0 0
    %2909 = vmatmul.mubr.bf16.gmra.mxu0 %v2489
    %v2910 = vpop.f32.mrf.mxu0
    %v2911 = vadd.f32 %v2779, %v2910
    %v2912 = vpop.f32.mrf.mxu0
    %v2913 = vadd.f32 %v2783, %v2912
    %v2914 = vpop.f32.mrf.mxu0
    %v2915 = vadd.f32 %v2779, %v2914
    %v2916 = vpop.f32.mrf.mxu0
    %v2917 = vadd.f32 %v2783, %v2916
    %2918 = vmatprep.mubr.bf16.mxu0 0
    %2919 = vmatmul.mubr.bf16.gmra.mxu0 %v2492
    %v2920 = vpop.f32.mrf.mxu0
    %v2921 = vadd.f32 %v2779, %v2920
    %v2922 = vpop.f32.mrf.mxu0
    %v2923 = vadd.f32 %v2783, %v2922
    %v2924 = vpop.f32.mrf.mxu0
    %v2925 = vadd.f32 %v2779, %v2924
    %v2926 = vpop.f32.mrf.mxu0
    %v2927 = vadd.f32 %v2783, %v2926
    %2928 = vmatprep.mubr.bf16.mxu0 0
    %2929 = vmatmul.mubr.bf16.gmra.mxu0 %v2495
    %v2930 = vpop.f32.mrf.mxu0
    %v2931 = vadd.f32 %v2779, %v2930
    %v2932 = vpop.f32.mrf.mxu0
    %v2933 = vadd.f32 %v2783, %v2932
    %v2934 = vpop.f32.mrf.mxu0
    %v2935 = vadd.f32 %v2779, %v2934
    %v2936 = vpop.f32.mrf.mxu0
    %v2937 = vadd.f32 %v2783, %v2936
    %2938 = vmatprep.mubr.bf16.mxu0 0
    %2939 = vmatmul.mubr.bf16.gmra.mxu0 %v2498
    %v2940 = vpop.f32.mrf.mxu0
    %v2941 = vadd.f32 %v2779, %v2940
    %v2942 = vpop.f32.mrf.mxu0
    %v2943 = vadd.f32 %v2783, %v2942
    %v2944 = vpop.f32.mrf.mxu0
    %v2945 = vadd.f32 %v2779, %v2944
    %v2946 = vpop.f32.mrf.mxu0
    %v2947 = vadd.f32 %v2783, %v2946
    %2948 = vdwg.mxu0
    %2949 = vmatprep.subr.bf16.mxu0 0
    %2950 = vmatpush1.bf16.msra.mxu0 0
    %2951 = vmatprep.subr.bf16.mxu0 0
    %2952 = vmatpush1.bf16.msra.mxu0 0
    %2953 = vmatprep.subr.bf16.mxu0 0
    %2954 = vmatpush1.bf16.msra.mxu0 0
    %2955 = vmatprep.subr.bf16.mxu0 0
    %2956 = vmatpush1.bf16.msra.mxu0 0
    %2957 = vmatprep.subr.bf16.mxu0 %v2859
    %2958 = vmatpush1.bf16.msra.mxu0 %v2858
    %2959 = vmatprep.subr.bf16.mxu0 %v2855
    %2960 = vmatpush1.bf16.msra.mxu0 %v2854
    %2961 = vmatprep.subr.bf16.mxu0 %v2851
    %2962 = vmatpush1.bf16.msra.mxu0 %v2850
    %2963 = vmatprep.subr.bf16.mxu0 %v2847
    %2964 = vmatpush1.bf16.msra.mxu0 %v2846
    %2965 = vmatprep.subr.bf16.mxu0 0
    %2966 = vmatpush2.bf16.msra.mxu0 0
    %2967 = vmatprep.subr.bf16.mxu0 0
    %2968 = vmatpush2.bf16.msra.mxu0 0
    %2969 = vmatprep.subr.bf16.mxu0 0
    %2970 = vmatpush2.bf16.msra.mxu0 0
    %2971 = vmatprep.subr.bf16.mxu0 0
    %2972 = vmatpush2.bf16.msra.mxu0 0
    %2973 = vmatprep.subr.bf16.mxu0 0
    %2974 = vmatpush2.bf16.msra.mxu0 0
    %2975 = vmatprep.subr.bf16.mxu0 0
    %2976 = vmatpush2.bf16.msra.mxu0 0
    %2977 = vmatprep.subr.bf16.mxu0 0
    %2978 = vmatpush2.bf16.msra.mxu0 0
    %2979 = vmatprep.subr.bf16.mxu0 0
    %2980 = vmatpush2.bf16.msra.mxu0 0
    %2981 = vmatprep.mubr.bf16.mxu0 0
    %2982 = vmatmul.mubr.bf16.gmra.mxu0 %v2489
    %v2983 = vpop.f32.mrf.mxu0
    %v2984 = vadd.f32 %v2787, %v2983
    %v2985 = vpop.f32.mrf.mxu0
    %v2986 = vadd.f32 %v2791, %v2985
    %v2987 = vpop.f32.mrf.mxu0
    %v2988 = vadd.f32 %v2787, %v2987
    %v2989 = vpop.f32.mrf.mxu0
    %v2990 = vadd.f32 %v2791, %v2989
    %2991 = vmatprep.mubr.bf16.mxu0 0
    %2992 = vmatmul.mubr.bf16.gmra.mxu0 %v2492
    %v2993 = vpop.f32.mrf.mxu0
    %v2994 = vadd.f32 %v2787, %v2993
    %v2995 = vpop.f32.mrf.mxu0
    %v2996 = vadd.f32 %v2791, %v2995
    %v2997 = vpop.f32.mrf.mxu0
    %v2998 = vadd.f32 %v2787, %v2997
    %v2999 = vpop.f32.mrf.mxu0
    %v3000 = vadd.f32 %v2791, %v2999
    %3001 = vmatprep.mubr.bf16.mxu0 0
    %3002 = vmatmul.mubr.bf16.gmra.mxu0 %v2495
    %v3003 = vpop.f32.mrf.mxu0
    %v3004 = vadd.f32 %v2787, %v3003
    %v3005 = vpop.f32.mrf.mxu0
    %v3006 = vadd.f32 %v2791, %v3005
    %v3007 = vpop.f32.mrf.mxu0
    %v3008 = vadd.f32 %v2787, %v3007
    %v3009 = vpop.f32.mrf.mxu0
    %v3010 = vadd.f32 %v2791, %v3009
    %3011 = vmatprep.mubr.bf16.mxu0 0
    %3012 = vmatmul.mubr.bf16.gmra.mxu0 %v2498
    %v3013 = vpop.f32.mrf.mxu0
    %v3014 = vadd.f32 %v2787, %v3013
    %v3015 = vpop.f32.mrf.mxu0
    %v3016 = vadd.f32 %v2791, %v3015
    %v3017 = vpop.f32.mrf.mxu0
    %v3018 = vadd.f32 %v2787, %v3017
    %v3019 = vpop.f32.mrf.mxu0
    %v3020 = vadd.f32 %v2791, %v3019
    %3021 = vdwg.mxu0
    %v3022 = vmax.f32 %v2911, 0.0
    %v3023 = vmax.f32 %v2913, 0.0
    %v3024 = vmax.f32 %v2984, 0.0
    %v3025 = vmax.f32 %v2986, 0.0
    %v3026 = vmax.f32 %v2915, 0.0
    %v3027 = vmax.f32 %v2917, 0.0
    %v3028 = vmax.f32 %v2988, 0.0
    %v3029 = vmax.f32 %v2990, 0.0
    %v3030 = vmax.f32 %v2921, 0.0
    %v3031 = vmax.f32 %v2923, 0.0
    %v3032 = vmax.f32 %v2994, 0.0
    %v3033 = vmax.f32 %v2996, 0.0
    %v3034 = vmax.f32 %v2925, 0.0
    %v3035 = vmax.f32 %v2927, 0.0
    %v3036 = vmax.f32 %v2998, 0.0
    %v3037 = vmax.f32 %v3000, 0.0
    %v3038 = vmax.f32 %v2931, 0.0
    %v3039 = vmax.f32 %v2933, 0.0
    %v3040 = vmax.f32 %v3004, 0.0
    %v3041 = vmax.f32 %v3006, 0.0
    %v3042 = vmax.f32 %v2935, 0.0
    %v3043 = vmax.f32 %v2937, 0.0
    %v3044 = vmax.f32 %v3008, 0.0
    %v3045 = vmax.f32 %v3010, 0.0
    %v3046 = vmax.f32 %v2941, 0.0
    %v3047 = vmax.f32 %v2943, 0.0
    %v3048 = vmax.f32 %v3014, 0.0
    %v3049 = vmax.f32 %v3016, 0.0
    %v3050 = vmax.f32 %v2945, 0.0
    %v3051 = vmax.f32 %v2947, 0.0
    %v3052 = vmax.f32 %v3018, 0.0
    %v3053 = vmax.f32 %v3020, 0.0
    %v3054 = vpack.c.bf16 %v3026, %v3022
    %v3055 = vpack.c.bf16 %v3027, %v3023
    %v3056 = vpack.c.bf16 %v3028, %v3024
    %v3057 = vpack.c.bf16 %v3029, %v3025
    %v3058 = vpack.c.bf16 %v3034, %v3030
    %v3059 = vpack.c.bf16 %v3035, %v3031
    %v3060 = vpack.c.bf16 %v3036, %v3032
    %v3061 = vpack.c.bf16 %v3037, %v3033
    %v3062 = vpack.c.bf16 %v3042, %v3038
    %v3063 = vpack.c.bf16 %v3043, %v3039
    %v3064 = vpack.c.bf16 %v3044, %v3040
    %v3065 = vpack.c.bf16 %v3045, %v3041
    %v3066 = vpack.c.bf16 %v3050, %v3046
    %v3067 = vpack.c.bf16 %v3051, %v3047
    %v3068 = vpack.c.bf16 %v3052, %v3048
    %v3069 = vpack.c.bf16 %v3053, %v3049
    %v3070 = vld [vmem:[%s7 + $0x100] sm:$0xf]
    %v3071 = vld [vmem:[%s7 + $0x104] sm:$0xf]
    %v3072 = vld [vmem:[%s7 + $0x108] sm:$0xf]
    %v3073 = vld [vmem:[%s7 + $0x10c] sm:$0xf]
    %v3074 = vld [vmem:[%s7 + $0x110] sm:$0xf]
    %v3075 = vld [vmem:[%s7 + $0x114] sm:$0xf]
    %v3076 = vld [vmem:[%s7 + $0x118] sm:$0xf]
    %v3077 = vld [vmem:[%s7 + $0x11c] sm:$0xf]
    %v3078 = vld [vmem:[%s7 + $0x120] sm:$0xf]
    %v3079 = vld [vmem:[%s7 + $0x124] sm:$0xf]
    %v3080 = vld [vmem:[%s7 + $0x128] sm:$0xf]
    %v3081 = vld [vmem:[%s7 + $0x12c] sm:$0xf]
    %v3082 = vld [vmem:[%s7 + $0x130] sm:$0xf]
    %v3083 = vld [vmem:[%s7 + $0x134] sm:$0xf]
    %v3084 = vld [vmem:[%s7 + $0x138] sm:$0xf]
    %v3085 = vld [vmem:[%s7 + $0x13c] sm:$0xf]
    %v3086 = vld [vmem:[%s7 + $0x140] sm:$0xf]
    %v3087 = vld [vmem:[%s7 + $0x144] sm:$0xf]
    %v3088 = vld [vmem:[%s7 + $0x148] sm:$0xf]
    %v3089 = vld [vmem:[%s7 + $0x14c] sm:$0xf]
    %v3090 = vld [vmem:[%s7 + $0x150] sm:$0xf]
    %v3091 = vld [vmem:[%s7 + $0x154] sm:$0xf]
    %v3092 = vld [vmem:[%s7 + $0x158] sm:$0xf]
    %v3093 = vld [vmem:[%s7 + $0x15c] sm:$0xf]
    %v3094 = vld [vmem:[%s7 + $0x160] sm:$0xf]
    %v3095 = vld [vmem:[%s7 + $0x164] sm:$0xf]
    %v3096 = vld [vmem:[%s7 + $0x168] sm:$0xf]
    %v3097 = vld [vmem:[%s7 + $0x16c] sm:$0xf]
    %v3098 = vld [vmem:[%s7 + $0x170] sm:$0xf]
    %v3099 = vld [vmem:[%s7 + $0x174] sm:$0xf]
    %v3100 = vld [vmem:[%s7 + $0x178] sm:$0xf]
    %v3101 = vld [vmem:[%s7 + $0x17c] sm:$0xf]
    %v3102 = vld [vmem:[%s7 + $0x180] sm:$0xf]
    %v3103 = vld [vmem:[%s7 + $0x184] sm:$0xf]
    %v3104 = vld [vmem:[%s7 + $0x188] sm:$0xf]
    %v3105 = vld [vmem:[%s7 + $0x18c] sm:$0xf]
    %v3106 = vld [vmem:[%s7 + $0x190] sm:$0xf]
    %v3107 = vld [vmem:[%s7 + $0x194] sm:$0xf]
    %v3108 = vld [vmem:[%s7 + $0x198] sm:$0xf]
    %v3109 = vld [vmem:[%s7 + $0x19c] sm:$0xf]
    %v3110 = vld [vmem:[%s7 + $0x1a0] sm:$0xf]
    %v3111 = vld [vmem:[%s7 + $0x1a4] sm:$0xf]
    %v3112 = vld [vmem:[%s7 + $0x1a8] sm:$0xf]
    %v3113 = vld [vmem:[%s7 + $0x1ac] sm:$0xf]
    %v3114 = vld [vmem:[%s7 + $0x1b0] sm:$0xf]
    %v3115 = vld [vmem:[%s7 + $0x1b4] sm:$0xf]
    %v3116 = vld [vmem:[%s7 + $0x1b8] sm:$0xf]
    %v3117 = vld [vmem:[%s7 + $0x1bc] sm:$0xf]
    %v3118 = vld [vmem:[%s7 + $0x1c0] sm:$0xf]
    %v3119 = vld [vmem:[%s7 + $0x1c4] sm:$0xf]
    %v3120 = vld [vmem:[%s7 + $0x1c8] sm:$0xf]
    %v3121 = vld [vmem:[%s7 + $0x1cc] sm:$0xf]
    %v3122 = vld [vmem:[%s7 + $0x1d0] sm:$0xf]
    %v3123 = vld [vmem:[%s7 + $0x1d4] sm:$0xf]
    %v3124 = vld [vmem:[%s7 + $0x1d8] sm:$0xf]
    %v3125 = vld [vmem:[%s7 + $0x1dc] sm:$0xf]
    %v3126 = vld [vmem:[%s7 + $0x1e0] sm:$0xf]
    %v3127 = vld [vmem:[%s7 + $0x1e4] sm:$0xf]
    %v3128 = vld [vmem:[%s7 + $0x1e8] sm:$0xf]
    %v3129 = vld [vmem:[%s7 + $0x1ec] sm:$0xf]
    %v3130 = vld [vmem:[%s7 + $0x1f0] sm:$0xf]
    %v3131 = vld [vmem:[%s7 + $0x1f4] sm:$0xf]
    %v3132 = vld [vmem:[%s7 + $0x1f8] sm:$0xf]
    %v3133 = vld [vmem:[%s7 + $0x1fc] sm:$0xf]
    %v3198 = vunpack.c.l.b16 %v3070
    %v3199 = vunpack.c.l.b16 %v3071
    %v3200 = vunpack.c.l.b16 %v3072
    %v3201 = vunpack.c.l.b16 %v3073
    %v3202 = vunpack.c.l.b16 %v3074
    %v3203 = vunpack.c.l.b16 %v3075
    %v3204 = vunpack.c.l.b16 %v3076
    %v3205 = vunpack.c.l.b16 %v3077
    %v3206 = vunpack.c.l.b16 %v3078
    %v3207 = vunpack.c.l.b16 %v3079
    %v3208 = vunpack.c.l.b16 %v3080
    %v3209 = vunpack.c.l.b16 %v3081
    %v3210 = vunpack.c.l.b16 %v3082
    %v3211 = vunpack.c.l.b16 %v3083
    %v3212 = vunpack.c.l.b16 %v3084
    %v3213 = vunpack.c.l.b16 %v3085
    %v3214 = vunpack.c.l.b16 %v3086
    %v3215 = vunpack.c.l.b16 %v3087
    %v3216 = vunpack.c.l.b16 %v3088
    %v3217 = vunpack.c.l.b16 %v3089
    %v3218 = vunpack.c.l.b16 %v3090
    %v3219 = vunpack.c.l.b16 %v3091
    %v3220 = vunpack.c.l.b16 %v3092
    %v3221 = vunpack.c.l.b16 %v3093
    %v3222 = vunpack.c.l.b16 %v3094
    %v3223 = vunpack.c.l.b16 %v3095
    %v3224 = vunpack.c.l.b16 %v3096
    %v3225 = vunpack.c.l.b16 %v3097
    %v3226 = vunpack.c.l.b16 %v3098
    %v3227 = vunpack.c.l.b16 %v3099
    %v3228 = vunpack.c.l.b16 %v3100
    %v3229 = vunpack.c.l.b16 %v3101
    %v3230 = vunpack.c.l.b16 %v3102
    %v3231 = vunpack.c.l.b16 %v3103
    %v3232 = vunpack.c.l.b16 %v3104
    %v3233 = vunpack.c.l.b16 %v3105
    %v3234 = vunpack.c.l.b16 %v3106
    %v3235 = vunpack.c.l.b16 %v3107
    %v3236 = vunpack.c.l.b16 %v3108
    %v3237 = vunpack.c.l.b16 %v3109
    %v3238 = vunpack.c.l.b16 %v3110
    %v3239 = vunpack.c.l.b16 %v3111
    %v3240 = vunpack.c.l.b16 %v3112
    %v3241 = vunpack.c.l.b16 %v3113
    %v3242 = vunpack.c.l.b16 %v3114
    %v3243 = vunpack.c.l.b16 %v3115
    %v3244 = vunpack.c.l.b16 %v3116
    %v3245 = vunpack.c.l.b16 %v3117
    %v3246 = vunpack.c.l.b16 %v3118
    %v3247 = vunpack.c.l.b16 %v3119
    %v3248 = vunpack.c.l.b16 %v3120
    %v3249 = vunpack.c.l.b16 %v3121
    %v3250 = vunpack.c.l.b16 %v3122
    %v3251 = vunpack.c.l.b16 %v3123
    %v3252 = vunpack.c.l.b16 %v3124
    %v3253 = vunpack.c.l.b16 %v3125
    %v3254 = vunpack.c.l.b16 %v3126
    %v3255 = vunpack.c.l.b16 %v3127
    %v3256 = vunpack.c.l.b16 %v3128
    %v3257 = vunpack.c.l.b16 %v3129
    %v3258 = vunpack.c.l.b16 %v3130
    %v3259 = vunpack.c.l.b16 %v3131
    %v3260 = vunpack.c.l.b16 %v3132
    %v3261 = vunpack.c.l.b16 %v3133
    %v3262 = vpack.c.b16 %v3199, %v3198
    %v3263 = vpack.c.b16 %v3201, %v3200
    %v3264 = vpack.c.b16 %v3203, %v3202
    %v3265 = vpack.c.b16 %v3205, %v3204
    %v3266 = vpack.c.b16 %v3207, %v3206
    %v3267 = vpack.c.b16 %v3209, %v3208
    %v3268 = vpack.c.b16 %v3211, %v3210
    %v3269 = vpack.c.b16 %v3213, %v3212
    %v3270 = vpack.c.b16 %v3215, %v3214
    %v3271 = vpack.c.b16 %v3217, %v3216
    %v3272 = vpack.c.b16 %v3219, %v3218
    %v3273 = vpack.c.b16 %v3221, %v3220
    %v3274 = vpack.c.b16 %v3223, %v3222
    %v3275 = vpack.c.b16 %v3225, %v3224
    %v3276 = vpack.c.b16 %v3227, %v3226
    %v3277 = vpack.c.b16 %v3229, %v3228
    %v3278 = vpack.c.b16 %v3231, %v3230
    %v3279 = vpack.c.b16 %v3233, %v3232
    %v3280 = vpack.c.b16 %v3235, %v3234
    %v3281 = vpack.c.b16 %v3237, %v3236
    %v3282 = vpack.c.b16 %v3239, %v3238
    %v3283 = vpack.c.b16 %v3241, %v3240
    %v3284 = vpack.c.b16 %v3243, %v3242
    %v3285 = vpack.c.b16 %v3245, %v3244
    %v3286 = vpack.c.b16 %v3247, %v3246
    %v3287 = vpack.c.b16 %v3249, %v3248
    %v3288 = vpack.c.b16 %v3251, %v3250
    %v3289 = vpack.c.b16 %v3253, %v3252
    %v3290 = vpack.c.b16 %v3255, %v3254
    %v3291 = vpack.c.b16 %v3257, %v3256
    %v3292 = vpack.c.b16 %v3259, %v3258
    %v3293 = vpack.c.b16 %v3261, %v3260
    %3326 = vmatprep.subr.bf16.mxu0 0
    %3327 = vmatpush1.bf16.msra.mxu0 %v3269
    %3328 = vmatprep.subr.bf16.mxu0 0
    %3329 = vmatpush1.bf16.msra.mxu0 %v3268
    %3330 = vmatprep.subr.bf16.mxu0 0
    %3331 = vmatpush1.bf16.msra.mxu0 %v3267
    %3332 = vmatprep.subr.bf16.mxu0 0
    %3333 = vmatpush1.bf16.msra.mxu0 %v3266
    %3334 = vmatprep.subr.bf16.mxu0 0
    %3335 = vmatpush1.bf16.msra.mxu0 %v3265
    %3336 = vmatprep.subr.bf16.mxu0 0
    %3337 = vmatpush1.bf16.msra.mxu0 %v3264
    %3338 = vmatprep.subr.bf16.mxu0 0
    %3339 = vmatpush1.bf16.msra.mxu0 %v3263
    %3340 = vmatprep.subr.bf16.mxu0 0
    %3341 = vmatpush1.bf16.msra.mxu0 %v3262
    %3342 = vmatprep.subr.bf16.mxu0 0
    %3343 = vmatpush2.bf16.msra.mxu0 %v3277
    %3344 = vmatprep.subr.bf16.mxu0 0
    %3345 = vmatpush2.bf16.msra.mxu0 %v3276
    %3346 = vmatprep.subr.bf16.mxu0 0
    %3347 = vmatpush2.bf16.msra.mxu0 %v3275
    %3348 = vmatprep.subr.bf16.mxu0 0
    %3349 = vmatpush2.bf16.msra.mxu0 %v3274
    %3350 = vmatprep.subr.bf16.mxu0 0
    %3351 = vmatpush2.bf16.msra.mxu0 %v3273
    %3352 = vmatprep.subr.bf16.mxu0 0
    %3353 = vmatpush2.bf16.msra.mxu0 %v3272
    %3354 = vmatprep.subr.bf16.mxu0 0
    %3355 = vmatpush2.bf16.msra.mxu0 %v3271
    %3356 = vmatprep.subr.bf16.mxu0 0
    %3357 = vmatpush2.bf16.msra.mxu0 %v3270
    %3358 = vmatprep.mubr.bf16.mxu0 %v3055
    %3359 = vmatmul.mubr.bf16.gmra.mxu0 %v3054
    %v3360 = vpop.f32.mrf.mxu0
    %v3361 = vadd.f32 0.0, %v3360
    %v3362 = vpop.f32.mrf.mxu0
    %v3363 = vpop.f32.mrf.mxu0
    %v3364 = vadd.f32 0.0, %v3363
    %v3365 = vpop.f32.mrf.mxu0
    %3366 = vmatprep.mubr.bf16.mxu0 %v3059
    %3367 = vmatmul.mubr.bf16.gmra.mxu0 %v3058
    %v3368 = vpop.f32.mrf.mxu0
    %v3369 = vadd.f32 0.0, %v3368
    %v3370 = vpop.f32.mrf.mxu0
    %v3371 = vpop.f32.mrf.mxu0
    %v3372 = vadd.f32 0.0, %v3371
    %v3373 = vpop.f32.mrf.mxu0
    %3374 = vmatprep.mubr.bf16.mxu0 %v3063
    %3375 = vmatmul.mubr.bf16.gmra.mxu0 %v3062
    %v3376 = vpop.f32.mrf.mxu0
    %v3377 = vadd.f32 0.0, %v3376
    %v3378 = vpop.f32.mrf.mxu0
    %v3379 = vpop.f32.mrf.mxu0
    %v3380 = vadd.f32 0.0, %v3379
    %v3381 = vpop.f32.mrf.mxu0
    %3382 = vmatprep.mubr.bf16.mxu0 %v3067
    %3383 = vmatmul.mubr.bf16.gmra.mxu0 %v3066
    %v3384 = vpop.f32.mrf.mxu0
    %v3385 = vadd.f32 0.0, %v3384
    %v3386 = vpop.f32.mrf.mxu0
    %v3387 = vpop.f32.mrf.mxu0
    %v3388 = vadd.f32 0.0, %v3387
    %v3389 = vpop.f32.mrf.mxu0
    %3390 = vdwg.mxu0
    %3391 = vmatprep.subr.bf16.mxu0 0
    %3392 = vmatpush1.bf16.msra.mxu0 %v3285
    %3393 = vmatprep.subr.bf16.mxu0 0
    %3394 = vmatpush1.bf16.msra.mxu0 %v3284
    %3395 = vmatprep.subr.bf16.mxu0 0
    %3396 = vmatpush1.bf16.msra.mxu0 %v3283
    %3397 = vmatprep.subr.bf16.mxu0 0
    %3398 = vmatpush1.bf16.msra.mxu0 %v3282
    %3399 = vmatprep.subr.bf16.mxu0 0
    %3400 = vmatpush1.bf16.msra.mxu0 %v3281
    %3401 = vmatprep.subr.bf16.mxu0 0
    %3402 = vmatpush1.bf16.msra.mxu0 %v3280
    %3403 = vmatprep.subr.bf16.mxu0 0
    %3404 = vmatpush1.bf16.msra.mxu0 %v3279
    %3405 = vmatprep.subr.bf16.mxu0 0
    %3406 = vmatpush1.bf16.msra.mxu0 %v3278
    %3407 = vmatprep.subr.bf16.mxu0 0
    %3408 = vmatpush2.bf16.msra.mxu0 %v3293
    %3409 = vmatprep.subr.bf16.mxu0 0
    %3410 = vmatpush2.bf16.msra.mxu0 %v3292
    %3411 = vmatprep.subr.bf16.mxu0 0
    %3412 = vmatpush2.bf16.msra.mxu0 %v3291
    %3413 = vmatprep.subr.bf16.mxu0 0
    %3414 = vmatpush2.bf16.msra.mxu0 %v3290
    %3415 = vmatprep.subr.bf16.mxu0 0
    %3416 = vmatpush2.bf16.msra.mxu0 %v3289
    %3417 = vmatprep.subr.bf16.mxu0 0
    %3418 = vmatpush2.bf16.msra.mxu0 %v3288
    %3419 = vmatprep.subr.bf16.mxu0 0
    %3420 = vmatpush2.bf16.msra.mxu0 %v3287
    %3421 = vmatprep.subr.bf16.mxu0 0
    %3422 = vmatpush2.bf16.msra.mxu0 %v3286
    %3423 = vmatprep.mubr.bf16.mxu0 %v3057
    %3424 = vmatmul.mubr.bf16.gmra.mxu0 %v3056
    %v3425 = vpop.f32.mrf.mxu0
    %v3426 = vadd.f32 %v3361, %v3425
    %v3427 = vpop.f32.mrf.mxu0
    %v3428 = vpop.f32.mrf.mxu0
    %v3429 = vadd.f32 %v3364, %v3428
    %v3430 = vpop.f32.mrf.mxu0
    %3431 = vmatprep.mubr.bf16.mxu0 %v3061
    %3432 = vmatmul.mubr.bf16.gmra.mxu0 %v3060
    %v3433 = vpop.f32.mrf.mxu0
    %v3434 = vadd.f32 %v3369, %v3433
    %v3435 = vpop.f32.mrf.mxu0
    %v3436 = vpop.f32.mrf.mxu0
    %v3437 = vadd.f32 %v3372, %v3436
    %v3438 = vpop.f32.mrf.mxu0
    %3439 = vmatprep.mubr.bf16.mxu0 %v3065
    %3440 = vmatmul.mubr.bf16.gmra.mxu0 %v3064
    %v3441 = vpop.f32.mrf.mxu0
    %v3442 = vadd.f32 %v3377, %v3441
    %v3443 = vpop.f32.mrf.mxu0
    %v3444 = vpop.f32.mrf.mxu0
    %v3445 = vadd.f32 %v3380, %v3444
    %v3446 = vpop.f32.mrf.mxu0
    %3447 = vmatprep.mubr.bf16.mxu0 %v3069
    %3448 = vmatmul.mubr.bf16.gmra.mxu0 %v3068
    %v3449 = vpop.f32.mrf.mxu0
    %v3450 = vadd.f32 %v3385, %v3449
    %v3451 = vpop.f32.mrf.mxu0
    %v3452 = vpop.f32.mrf.mxu0
    %v3453 = vadd.f32 %v3388, %v3452
    %v3454 = vpop.f32.mrf.mxu0
    %3455 = vdwg.mxu0
    %v3520 = vunpack.c.l.b16 %v2694
    %v3521 = vunpack.c.l.b16 %v2695
    %v3522 = vunpack.c.l.b16 %v2696
    %v3523 = vunpack.c.l.b16 %v2697
    %v3524 = vunpack.c.l.b16 %v2698
    %v3525 = vunpack.c.l.b16 %v2699
    %v3526 = vunpack.c.l.b16 %v2700
    %v3527 = vunpack.c.l.b16 %v2701
    %v3528 = vunpack.c.l.b16 %v2702
    %v3529 = vunpack.c.l.b16 %v2703
    %v3530 = vunpack.c.l.b16 %v2704
    %v3531 = vunpack.c.l.b16 %v2705
    %v3532 = vunpack.c.l.b16 %v2706
    %v3533 = vunpack.c.l.b16 %v2707
    %v3534 = vunpack.c.l.b16 %v2708
    %v3535 = vunpack.c.l.b16 %v2709
    %v3536 = vunpack.c.l.b16 %v2710
    %v3537 = vunpack.c.l.b16 %v2711
    %v3538 = vunpack.c.l.b16 %v2712
    %v3539 = vunpack.c.l.b16 %v2713
    %v3540 = vunpack.c.l.b16 %v2714
    %v3541 = vunpack.c.l.b16 %v2715
    %v3542 = vunpack.c.l.b16 %v2716
    %v3543 = vunpack.c.l.b16 %v2717
    %v3544 = vunpack.c.l.b16 %v2718
    %v3545 = vunpack.c.l.b16 %v2719
    %v3546 = vunpack.c.l.b16 %v2720
    %v3547 = vunpack.c.l.b16 %v2721
    %v3548 = vunpack.c.l.b16 %v2722
    %v3549 = vunpack.c.l.b16 %v2723
    %v3550 = vunpack.c.l.b16 %v2724
    %v3551 = vunpack.c.l.b16 %v2725
    %v3552 = vunpack.c.l.b16 %v2726
    %v3553 = vunpack.c.l.b16 %v2727
    %v3554 = vunpack.c.l.b16 %v2728
    %v3555 = vunpack.c.l.b16 %v2729
    %v3556 = vunpack.c.l.b16 %v2730
    %v3557 = vunpack.c.l.b16 %v2731
    %v3558 = vunpack.c.l.b16 %v2732
    %v3559 = vunpack.c.l.b16 %v2733
    %v3560 = vunpack.c.l.b16 %v2734
    %v3561 = vunpack.c.l.b16 %v2735
    %v3562 = vunpack.c.l.b16 %v2736
    %v3563 = vunpack.c.l.b16 %v2737
    %v3564 = vunpack.c.l.b16 %v2738
    %v3565 = vunpack.c.l.b16 %v2739
    %v3566 = vunpack.c.l.b16 %v2740
    %v3567 = vunpack.c.l.b16 %v2741
    %v3568 = vunpack.c.l.b16 %v2742
    %v3569 = vunpack.c.l.b16 %v2743
    %v3570 = vunpack.c.l.b16 %v2744
    %v3571 = vunpack.c.l.b16 %v2745
    %v3572 = vunpack.c.l.b16 %v2746
    %v3573 = vunpack.c.l.b16 %v2747
    %v3574 = vunpack.c.l.b16 %v2748
    %v3575 = vunpack.c.l.b16 %v2749
    %v3576 = vunpack.c.l.b16 %v2750
    %v3577 = vunpack.c.l.b16 %v2751
    %v3578 = vunpack.c.l.b16 %v2752
    %v3579 = vunpack.c.l.b16 %v2753
    %v3580 = vunpack.c.l.b16 %v2754
    %v3581 = vunpack.c.l.b16 %v2755
    %v3582 = vunpack.c.l.b16 %v2756
    %v3583 = vunpack.c.l.b16 %v2757
    %v3584 = vpack.c.b16 %v3521, %v3520
    %v3585 = vpack.c.b16 %v3523, %v3522
    %v3586 = vpack.c.b16 %v3525, %v3524
    %v3587 = vpack.c.b16 %v3527, %v3526
    %v3588 = vpack.c.b16 %v3529, %v3528
    %v3589 = vpack.c.b16 %v3531, %v3530
    %v3590 = vpack.c.b16 %v3533, %v3532
    %v3591 = vpack.c.b16 %v3535, %v3534
    %v3592 = vpack.c.b16 %v3537, %v3536
    %v3593 = vpack.c.b16 %v3539, %v3538
    %v3594 = vpack.c.b16 %v3541, %v3540
    %v3595 = vpack.c.b16 %v3543, %v3542
    %v3596 = vpack.c.b16 %v3545, %v3544
    %v3597 = vpack.c.b16 %v3547, %v3546
    %v3598 = vpack.c.b16 %v3549, %v3548
    %v3599 = vpack.c.b16 %v3551, %v3550
    %v3600 = vpack.c.b16 %v3553, %v3552
    %v3601 = vpack.c.b16 %v3555, %v3554
    %v3602 = vpack.c.b16 %v3557, %v3556
    %v3603 = vpack.c.b16 %v3559, %v3558
    %v3604 = vpack.c.b16 %v3561, %v3560
    %v3605 = vpack.c.b16 %v3563, %v3562
    %v3606 = vpack.c.b16 %v3565, %v3564
    %v3607 = vpack.c.b16 %v3567, %v3566
    %v3608 = vpack.c.b16 %v3569, %v3568
    %v3609 = vpack.c.b16 %v3571, %v3570
    %v3610 = vpack.c.b16 %v3573, %v3572
    %v3611 = vpack.c.b16 %v3575, %v3574
    %v3612 = vpack.c.b16 %v3577, %v3576
    %v3613 = vpack.c.b16 %v3579, %v3578
    %v3614 = vpack.c.b16 %v3581, %v3580
    %v3615 = vpack.c.b16 %v3583, %v3582
    %3648 = vmatprep.subr.bf16.mxu0 0
    %3649 = vmatpush1.bf16.msra.mxu0 %v3591
    %3650 = vmatprep.subr.bf16.mxu0 0
    %3651 = vmatpush1.bf16.msra.mxu0 %v3590
    %3652 = vmatprep.subr.bf16.mxu0 0
    %3653 = vmatpush1.bf16.msra.mxu0 %v3589
    %3654 = vmatprep.subr.bf16.mxu0 0
    %3655 = vmatpush1.bf16.msra.mxu0 %v3588
    %3656 = vmatprep.subr.bf16.mxu0 0
    %3657 = vmatpush1.bf16.msra.mxu0 %v3587
    %3658 = vmatprep.subr.bf16.mxu0 0
    %3659 = vmatpush1.bf16.msra.mxu0 %v3586
    %3660 = vmatprep.subr.bf16.mxu0 0
    %3661 = vmatpush1.bf16.msra.mxu0 %v3585
    %3662 = vmatprep.subr.bf16.mxu0 0
    %3663 = vmatpush1.bf16.msra.mxu0 %v3584
    %3664 = vmatprep.subr.bf16.mxu0 0
    %3665 = vmatpush2.bf16.msra.mxu0 %v3599
    %3666 = vmatprep.subr.bf16.mxu0 0
    %3667 = vmatpush2.bf16.msra.mxu0 %v3598
    %3668 = vmatprep.subr.bf16.mxu0 0
    %3669 = vmatpush2.bf16.msra.mxu0 %v3597
    %3670 = vmatprep.subr.bf16.mxu0 0
    %3671 = vmatpush2.bf16.msra.mxu0 %v3596
    %3672 = vmatprep.subr.bf16.mxu0 0
    %3673 = vmatpush2.bf16.msra.mxu0 %v3595
    %3674 = vmatprep.subr.bf16.mxu0 0
    %3675 = vmatpush2.bf16.msra.mxu0 %v3594
    %3676 = vmatprep.subr.bf16.mxu0 0
    %3677 = vmatpush2.bf16.msra.mxu0 %v3593
    %3678 = vmatprep.subr.bf16.mxu0 0
    %3679 = vmatpush2.bf16.msra.mxu0 %v3592
    %3680 = vmatprep.mubr.bf16.mxu0 %v2679
    %3681 = vmatmul.mubr.bf16.gmra.mxu0 %v2678
    %v3682 = vpop.f32.mrf.mxu0
    %v3683 = vadd.f32 %v3426, %v3682
    %v3684 = vpop.f32.mrf.mxu0
    %v3685 = vpop.f32.mrf.mxu0
    %v3686 = vadd.f32 %v3429, %v3685
    %v3687 = vpop.f32.mrf.mxu0
    %3688 = vmatprep.mubr.bf16.mxu0 %v2683
    %3689 = vmatmul.mubr.bf16.gmra.mxu0 %v2682
    %v3690 = vpop.f32.mrf.mxu0
    %v3691 = vadd.f32 %v3434, %v3690
    %v3692 = vpop.f32.mrf.mxu0
    %v3693 = vpop.f32.mrf.mxu0
    %v3694 = vadd.f32 %v3437, %v3693
    %v3695 = vpop.f32.mrf.mxu0
    %3696 = vmatprep.mubr.bf16.mxu0 %v2687
    %3697 = vmatmul.mubr.bf16.gmra.mxu0 %v2686
    %v3698 = vpop.f32.mrf.mxu0
    %v3699 = vadd.f32 %v3442, %v3698
    %v3700 = vpop.f32.mrf.mxu0
    %v3701 = vpop.f32.mrf.mxu0
    %v3702 = vadd.f32 %v3445, %v3701
    %v3703 = vpop.f32.mrf.mxu0
    %3704 = vmatprep.mubr.bf16.mxu0 %v2691
    %3705 = vmatmul.mubr.bf16.gmra.mxu0 %v2690
    %v3706 = vpop.f32.mrf.mxu0
    %v3707 = vadd.f32 %v3450, %v3706
    %v3708 = vpop.f32.mrf.mxu0
    %v3709 = vpop.f32.mrf.mxu0
    %v3710 = vadd.f32 %v3453, %v3709
    %v3711 = vpop.f32.mrf.mxu0
    %3712 = vdwg.mxu0
    %3713 = vmatprep.subr.bf16.mxu0 0
    %3714 = vmatpush1.bf16.msra.mxu0 %v3607
    %3715 = vmatprep.subr.bf16.mxu0 0
    %3716 = vmatpush1.bf16.msra.mxu0 %v3606
    %3717 = vmatprep.subr.bf16.mxu0 0
    %3718 = vmatpush1.bf16.msra.mxu0 %v3605
    %3719 = vmatprep.subr.bf16.mxu0 0
    %3720 = vmatpush1.bf16.msra.mxu0 %v3604
    %3721 = vmatprep.subr.bf16.mxu0 0
    %3722 = vmatpush1.bf16.msra.mxu0 %v3603
    %3723 = vmatprep.subr.bf16.mxu0 0
    %3724 = vmatpush1.bf16.msra.mxu0 %v3602
    %3725 = vmatprep.subr.bf16.mxu0 0
    %3726 = vmatpush1.bf16.msra.mxu0 %v3601
    %3727 = vmatprep.subr.bf16.mxu0 0
    %3728 = vmatpush1.bf16.msra.mxu0 %v3600
    %3729 = vmatprep.subr.bf16.mxu0 0
    %3730 = vmatpush2.bf16.msra.mxu0 %v3615
    %3731 = vmatprep.subr.bf16.mxu0 0
    %3732 = vmatpush2.bf16.msra.mxu0 %v3614
    %3733 = vmatprep.subr.bf16.mxu0 0
    %3734 = vmatpush2.bf16.msra.mxu0 %v3613
    %3735 = vmatprep.subr.bf16.mxu0 0
    %3736 = vmatpush2.bf16.msra.mxu0 %v3612
    %3737 = vmatprep.subr.bf16.mxu0 0
    %3738 = vmatpush2.bf16.msra.mxu0 %v3611
    %3739 = vmatprep.subr.bf16.mxu0 0
    %3740 = vmatpush2.bf16.msra.mxu0 %v3610
    %3741 = vmatprep.subr.bf16.mxu0 0
    %3742 = vmatpush2.bf16.msra.mxu0 %v3609
    %3743 = vmatprep.subr.bf16.mxu0 0
    %3744 = vmatpush2.bf16.msra.mxu0 %v3608
    %3745 = vmatprep.mubr.bf16.mxu0 %v2681
    %3746 = vmatmul.mubr.bf16.gmra.mxu0 %v2680
    %v3747 = vpop.f32.mrf.mxu0
    %v3748 = vadd.f32 %v3683, %v3747
    %v3749 = vpop.f32.mrf.mxu0
    %v3750 = vpop.f32.mrf.mxu0
    %v3751 = vadd.f32 %v3686, %v3750
    %v3752 = vpop.f32.mrf.mxu0
    %3753 = vmatprep.mubr.bf16.mxu0 %v2685
    %3754 = vmatmul.mubr.bf16.gmra.mxu0 %v2684
    %v3755 = vpop.f32.mrf.mxu0
    %v3756 = vadd.f32 %v3691, %v3755
    %v3757 = vpop.f32.mrf.mxu0
    %v3758 = vpop.f32.mrf.mxu0
    %v3759 = vadd.f32 %v3694, %v3758
    %v3760 = vpop.f32.mrf.mxu0
    %3761 = vmatprep.mubr.bf16.mxu0 %v2689
    %3762 = vmatmul.mubr.bf16.gmra.mxu0 %v2688
    %v3763 = vpop.f32.mrf.mxu0
    %v3764 = vadd.f32 %v3699, %v3763
    %v3765 = vpop.f32.mrf.mxu0
    %v3766 = vpop.f32.mrf.mxu0
    %v3767 = vadd.f32 %v3702, %v3766
    %v3768 = vpop.f32.mrf.mxu0
    %3769 = vmatprep.mubr.bf16.mxu0 %v2693
    %3770 = vmatmul.mubr.bf16.gmra.mxu0 %v2692
    %v3771 = vpop.f32.mrf.mxu0
    %v3772 = vadd.f32 %v3707, %v3771
    %v3773 = vpop.f32.mrf.mxu0
    %v3774 = vpop.f32.mrf.mxu0
    %v3775 = vadd.f32 %v3710, %v3774
    %v3776 = vpop.f32.mrf.mxu0
    %3777 = vdwg.mxu0
    %v3778 = vld [vmem:[%s5 + $0x20] sm:$0xff]
    %v3779 = vld [vmem:[%s5 + $0x28] sm:$0xff]
    %v3780 = vld [vmem:[%s5 + $0x60] sm:$0xff]
    %v3781 = vld [vmem:[%s5 + $0x68] sm:$0xff]
    %v3782 = vld [vmem:[%s5 + $0xa0] sm:$0xff]
    %v3783 = vld [vmem:[%s5 + $0xa8] sm:$0xff]
    %v3784 = vld [vmem:[%s5 + $0xe0] sm:$0xff]
    %v3785 = vld [vmem:[%s5 + $0xe8] sm:$0xff]
    %v3786 = vld [vmem:[%s5 + $0x120] sm:$0xff]
    %v3787 = vld [vmem:[%s5 + $0x128] sm:$0xff]
    %v3788 = vld [vmem:[%s5 + $0x160] sm:$0xff]
    %v3789 = vld [vmem:[%s5 + $0x168] sm:$0xff]
    %v3790 = vld [vmem:[%s5 + $0x1a0] sm:$0xff]
    %v3791 = vld [vmem:[%s5 + $0x1a8] sm:$0xff]
    %v3792 = vld [vmem:[%s5 + $0x1e0] sm:$0xff]
    %v3793 = vld [vmem:[%s5 + $0x1e8] sm:$0xff]
    %v3794 = vld [vmem:[%s6 + $0x8] sm:$0xf]
    %v3796 = vlaneseq
    %v3797 = vshrl.u32 %v3796, 7
    %v3798 = vsub.s32 0, %v3797
    %v3799 = vrot.slane %v3794, %v3798
    %v3800 = vlaneseq
    %v3801 = vshrl.u32 %v3800, 7
    %v3802 = vsub.s32 1, %v3801
    %v3803 = vrot.slane %v3794, %v3802
    %v3804 = vlaneseq
    %v3805 = vshrl.u32 %v3804, 7
    %v3806 = vsub.s32 2, %v3805
    %v3807 = vrot.slane %v3794, %v3806
    %v3808 = vlaneseq
    %v3809 = vshrl.u32 %v3808, 7
    %v3810 = vsub.s32 3, %v3809
    %v3811 = vrot.slane %v3794, %v3810
    %v3832 = vunpack.c.l.b16 %v3778
    %v3833 = vunpack.c.h.b16 %v3778
    %v3834 = vunpack.c.l.b16 %v3779
    %v3835 = vunpack.c.h.b16 %v3779
    %v3836 = vunpack.c.l.b16 %v3780
    %v3837 = vunpack.c.h.b16 %v3780
    %v3838 = vunpack.c.l.b16 %v3781
    %v3839 = vunpack.c.h.b16 %v3781
    %v3840 = vunpack.c.l.b16 %v3782
    %v3841 = vunpack.c.h.b16 %v3782
    %v3842 = vunpack.c.l.b16 %v3783
    %v3843 = vunpack.c.h.b16 %v3783
    %v3844 = vunpack.c.l.b16 %v3784
    %v3845 = vunpack.c.h.b16 %v3784
    %v3846 = vunpack.c.l.b16 %v3785
    %v3847 = vunpack.c.h.b16 %v3785
    %v3848 = vunpack.c.l.b16 %v3786
    %v3849 = vunpack.c.h.b16 %v3786
    %v3850 = vunpack.c.l.b16 %v3787
    %v3851 = vunpack.c.h.b16 %v3787
    %v3852 = vunpack.c.l.b16 %v3788
    %v3853 = vunpack.c.h.b16 %v3788
    %v3854 = vunpack.c.l.b16 %v3789
    %v3855 = vunpack.c.h.b16 %v3789
    %v3856 = vunpack.c.l.b16 %v3790
    %v3857 = vunpack.c.h.b16 %v3790
    %v3858 = vunpack.c.l.b16 %v3791
    %v3859 = vunpack.c.h.b16 %v3791
    %v3860 = vunpack.c.l.b16 %v3792
    %v3861 = vunpack.c.h.b16 %v3792
    %v3862 = vunpack.c.l.b16 %v3793
    %v3863 = vunpack.c.h.b16 %v3793
    %v3864 = vpack.c.b16 %v3836, %v3832
    %v3865 = vpack.c.b16 %v3837, %v3833
    %v3866 = vpack.c.b16 %v3838, %v3834
    %v3867 = vpack.c.b16 %v3839, %v3835
    %v3868 = vpack.c.b16 %v3844, %v3840
    %v3869 = vpack.c.b16 %v3845, %v3841
    %v3870 = vpack.c.b16 %v3846, %v3842
    %v3871 = vpack.c.b16 %v3847, %v3843
    %v3872 = vpack.c.b16 %v3852, %v3848
    %v3873 = vpack.c.b16 %v3853, %v3849
    %v3874 = vpack.c.b16 %v3854, %v3850
    %v3875 = vpack.c.b16 %v3855, %v3851
    %v3876 = vpack.c.b16 %v3860, %v3856
    %v3877 = vpack.c.b16 %v3861, %v3857
    %v3878 = vpack.c.b16 %v3862, %v3858
    %v3879 = vpack.c.b16 %v3863, %v3859
    %3896 = vmatprep.subr.bf16.mxu0 0
    %3897 = vmatpush1.bf16.msra.mxu0 0
    %3898 = vmatprep.subr.bf16.mxu0 0
    %3899 = vmatpush1.bf16.msra.mxu0 0
    %3900 = vmatprep.subr.bf16.mxu0 0
    %3901 = vmatpush1.bf16.msra.mxu0 0
    %3902 = vmatprep.subr.bf16.mxu0 0
    %3903 = vmatpush1.bf16.msra.mxu0 0
    %3904 = vmatprep.subr.bf16.mxu0 %v3877
    %3905 = vmatpush1.bf16.msra.mxu0 %v3876
    %3906 = vmatprep.subr.bf16.mxu0 %v3873
    %3907 = vmatpush1.bf16.msra.mxu0 %v3872
    %3908 = vmatprep.subr.bf16.mxu0 %v3869
    %3909 = vmatpush1.bf16.msra.mxu0 %v3868
    %3910 = vmatprep.subr.bf16.mxu0 %v3865
    %3911 = vmatpush1.bf16.msra.mxu0 %v3864
    %3912 = vmatprep.subr.bf16.mxu0 0
    %3913 = vmatpush2.bf16.msra.mxu0 0
    %3914 = vmatprep.subr.bf16.mxu0 0
    %3915 = vmatpush2.bf16.msra.mxu0 0
    %3916 = vmatprep.subr.bf16.mxu0 0
    %3917 = vmatpush2.bf16.msra.mxu0 0
    %3918 = vmatprep.subr.bf16.mxu0 0
    %3919 = vmatpush2.bf16.msra.mxu0 0
    %3920 = vmatprep.subr.bf16.mxu0 0
    %3921 = vmatpush2.bf16.msra.mxu0 0
    %3922 = vmatprep.subr.bf16.mxu0 0
    %3923 = vmatpush2.bf16.msra.mxu0 0
    %3924 = vmatprep.subr.bf16.mxu0 0
    %3925 = vmatpush2.bf16.msra.mxu0 0
    %3926 = vmatprep.subr.bf16.mxu0 0
    %3927 = vmatpush2.bf16.msra.mxu0 0
    %3928 = vmatprep.mubr.bf16.mxu0 0
    %3929 = vmatmul.mubr.bf16.gmra.mxu0 %v2489
    %v3930 = vpop.f32.mrf.mxu0
    %v3931 = vadd.f32 %v3799, %v3930
    %v3932 = vpop.f32.mrf.mxu0
    %v3933 = vadd.f32 %v3803, %v3932
    %v3934 = vpop.f32.mrf.mxu0
    %v3935 = vadd.f32 %v3799, %v3934
    %v3936 = vpop.f32.mrf.mxu0
    %v3937 = vadd.f32 %v3803, %v3936
    %3938 = vmatprep.mubr.bf16.mxu0 0
    %3939 = vmatmul.mubr.bf16.gmra.mxu0 %v2492
    %v3940 = vpop.f32.mrf.mxu0
    %v3941 = vadd.f32 %v3799, %v3940
    %v3942 = vpop.f32.mrf.mxu0
    %v3943 = vadd.f32 %v3803, %v3942
    %v3944 = vpop.f32.mrf.mxu0
    %v3945 = vadd.f32 %v3799, %v3944
    %v3946 = vpop.f32.mrf.mxu0
    %v3947 = vadd.f32 %v3803, %v3946
    %3948 = vmatprep.mubr.bf16.mxu0 0
    %3949 = vmatmul.mubr.bf16.gmra.mxu0 %v2495
    %v3950 = vpop.f32.mrf.mxu0
    %v3951 = vadd.f32 %v3799, %v3950
    %v3952 = vpop.f32.mrf.mxu0
    %v3953 = vadd.f32 %v3803, %v3952
    %v3954 = vpop.f32.mrf.mxu0
    %v3955 = vadd.f32 %v3799, %v3954
    %v3956 = vpop.f32.mrf.mxu0
    %v3957 = vadd.f32 %v3803, %v3956
    %3958 = vmatprep.mubr.bf16.mxu0 0
    %3959 = vmatmul.mubr.bf16.gmra.mxu0 %v2498
    %v3960 = vpop.f32.mrf.mxu0
    %v3961 = vadd.f32 %v3799, %v3960
    %v3962 = vpop.f32.mrf.mxu0
    %v3963 = vadd.f32 %v3803, %v3962
    %v3964 = vpop.f32.mrf.mxu0
    %v3965 = vadd.f32 %v3799, %v3964
    %v3966 = vpop.f32.mrf.mxu0
    %v3967 = vadd.f32 %v3803, %v3966
    %3968 = vdwg.mxu0
    %3969 = vmatprep.subr.bf16.mxu0 0
    %3970 = vmatpush1.bf16.msra.mxu0 0
    %3971 = vmatprep.subr.bf16.mxu0 0
    %3972 = vmatpush1.bf16.msra.mxu0 0
    %3973 = vmatprep.subr.bf16.mxu0 0
    %3974 = vmatpush1.bf16.msra.mxu0 0
    %3975 = vmatprep.subr.bf16.mxu0 0
    %3976 = vmatpush1.bf16.msra.mxu0 0
    %3977 = vmatprep.subr.bf16.mxu0 %v3879
    %3978 = vmatpush1.bf16.msra.mxu0 %v3878
    %3979 = vmatprep.subr.bf16.mxu0 %v3875
    %3980 = vmatpush1.bf16.msra.mxu0 %v3874
    %3981 = vmatprep.subr.bf16.mxu0 %v3871
    %3982 = vmatpush1.bf16.msra.mxu0 %v3870
    %3983 = vmatprep.subr.bf16.mxu0 %v3867
    %3984 = vmatpush1.bf16.msra.mxu0 %v3866
    %3985 = vmatprep.subr.bf16.mxu0 0
    %3986 = vmatpush2.bf16.msra.mxu0 0
    %3987 = vmatprep.subr.bf16.mxu0 0
    %3988 = vmatpush2.bf16.msra.mxu0 0
    %3989 = vmatprep.subr.bf16.mxu0 0
    %3990 = vmatpush2.bf16.msra.mxu0 0
    %3991 = vmatprep.subr.bf16.mxu0 0
    %3992 = vmatpush2.bf16.msra.mxu0 0
    %3993 = vmatprep.subr.bf16.mxu0 0
    %3994 = vmatpush2.bf16.msra.mxu0 0
    %3995 = vmatprep.subr.bf16.mxu0 0
    %3996 = vmatpush2.bf16.msra.mxu0 0
    %3997 = vmatprep.subr.bf16.mxu0 0
    %3998 = vmatpush2.bf16.msra.mxu0 0
    %3999 = vmatprep.subr.bf16.mxu0 0
    %4000 = vmatpush2.bf16.msra.mxu0 0
    %4001 = vmatprep.mubr.bf16.mxu0 0
    %4002 = vmatmul.mubr.bf16.gmra.mxu0 %v2489
    %v4003 = vpop.f32.mrf.mxu0
    %v4004 = vadd.f32 %v3807, %v4003
    %v4005 = vpop.f32.mrf.mxu0
    %v4006 = vadd.f32 %v3811, %v4005
    %v4007 = vpop.f32.mrf.mxu0
    %v4008 = vadd.f32 %v3807, %v4007
    %v4009 = vpop.f32.mrf.mxu0
    %v4010 = vadd.f32 %v3811, %v4009
    %4011 = vmatprep.mubr.bf16.mxu0 0
    %4012 = vmatmul.mubr.bf16.gmra.mxu0 %v2492
    %v4013 = vpop.f32.mrf.mxu0
    %v4014 = vadd.f32 %v3807, %v4013
    %v4015 = vpop.f32.mrf.mxu0
    %v4016 = vadd.f32 %v3811, %v4015
    %v4017 = vpop.f32.mrf.mxu0
    %v4018 = vadd.f32 %v3807, %v4017
    %v4019 = vpop.f32.mrf.mxu0
    %v4020 = vadd.f32 %v3811, %v4019
    %4021 = vmatprep.mubr.bf16.mxu0 0
    %4022 = vmatmul.mubr.bf16.gmra.mxu0 %v2495
    %v4023 = vpop.f32.mrf.mxu0
    %v4024 = vadd.f32 %v3807, %v4023
    %v4025 = vpop.f32.mrf.mxu0
    %v4026 = vadd.f32 %v3811, %v4025
    %v4027 = vpop.f32.mrf.mxu0
    %v4028 = vadd.f32 %v3807, %v4027
    %v4029 = vpop.f32.mrf.mxu0
    %v4030 = vadd.f32 %v3811, %v4029
    %4031 = vmatprep.mubr.bf16.mxu0 0
    %4032 = vmatmul.mubr.bf16.gmra.mxu0 %v2498
    %v4033 = vpop.f32.mrf.mxu0
    %v4034 = vadd.f32 %v3807, %v4033
    %v4035 = vpop.f32.mrf.mxu0
    %v4036 = vadd.f32 %v3811, %v4035
    %v4037 = vpop.f32.mrf.mxu0
    %v4038 = vadd.f32 %v3807, %v4037
    %v4039 = vpop.f32.mrf.mxu0
    %v4040 = vadd.f32 %v3811, %v4039
    %4041 = vdwg.mxu0
    %v4042 = vmax.f32 %v3931, 0.0
    %v4043 = vmax.f32 %v3933, 0.0
    %v4044 = vmax.f32 %v4004, 0.0
    %v4045 = vmax.f32 %v4006, 0.0
    %v4046 = vmax.f32 %v3935, 0.0
    %v4047 = vmax.f32 %v3937, 0.0
    %v4048 = vmax.f32 %v4008, 0.0
    %v4049 = vmax.f32 %v4010, 0.0
    %v4050 = vmax.f32 %v3941, 0.0
    %v4051 = vmax.f32 %v3943, 0.0
    %v4052 = vmax.f32 %v4014, 0.0
    %v4053 = vmax.f32 %v4016, 0.0
    %v4054 = vmax.f32 %v3945, 0.0
    %v4055 = vmax.f32 %v3947, 0.0
    %v4056 = vmax.f32 %v4018, 0.0
    %v4057 = vmax.f32 %v4020, 0.0
    %v4058 = vmax.f32 %v3951, 0.0
    %v4059 = vmax.f32 %v3953, 0.0
    %v4060 = vmax.f32 %v4024, 0.0
    %v4061 = vmax.f32 %v4026, 0.0
    %v4062 = vmax.f32 %v3955, 0.0
    %v4063 = vmax.f32 %v3957, 0.0
    %v4064 = vmax.f32 %v4028, 0.0
    %v4065 = vmax.f32 %v4030, 0.0
    %v4066 = vmax.f32 %v3961, 0.0
    %v4067 = vmax.f32 %v3963, 0.0
    %v4068 = vmax.f32 %v4034, 0.0
    %v4069 = vmax.f32 %v4036, 0.0
    %v4070 = vmax.f32 %v3965, 0.0
    %v4071 = vmax.f32 %v3967, 0.0
    %v4072 = vmax.f32 %v4038, 0.0
    %v4073 = vmax.f32 %v4040, 0.0
    %v4074 = vpack.c.bf16 %v4046, %v4042
    %v4075 = vpack.c.bf16 %v4047, %v4043
    %v4076 = vpack.c.bf16 %v4048, %v4044
    %v4077 = vpack.c.bf16 %v4049, %v4045
    %v4078 = vpack.c.bf16 %v4054, %v4050
    %v4079 = vpack.c.bf16 %v4055, %v4051
    %v4080 = vpack.c.bf16 %v4056, %v4052
    %v4081 = vpack.c.bf16 %v4057, %v4053
    %v4082 = vpack.c.bf16 %v4062, %v4058
    %v4083 = vpack.c.bf16 %v4063, %v4059
    %v4084 = vpack.c.bf16 %v4064, %v4060
    %v4085 = vpack.c.bf16 %v4065, %v4061
    %v4086 = vpack.c.bf16 %v4070, %v4066
    %v4087 = vpack.c.bf16 %v4071, %v4067
    %v4088 = vpack.c.bf16 %v4072, %v4068
    %v4089 = vpack.c.bf16 %v4073, %v4069
    %v4090 = vld [vmem:[%s7 + $0x200] sm:$0xf]
    %v4091 = vld [vmem:[%s7 + $0x204] sm:$0xf]
    %v4092 = vld [vmem:[%s7 + $0x208] sm:$0xf]
    %v4093 = vld [vmem:[%s7 + $0x20c] sm:$0xf]
    %v4094 = vld [vmem:[%s7 + $0x210] sm:$0xf]
    %v4095 = vld [vmem:[%s7 + $0x214] sm:$0xf]
    %v4096 = vld [vmem:[%s7 + $0x218] sm:$0xf]
    %v4097 = vld [vmem:[%s7 + $0x21c] sm:$0xf]
    %v4098 = vld [vmem:[%s7 + $0x220] sm:$0xf]
    %v4099 = vld [vmem:[%s7 + $0x224] sm:$0xf]
    %v4100 = vld [vmem:[%s7 + $0x228] sm:$0xf]
    %v4101 = vld [vmem:[%s7 + $0x22c] sm:$0xf]
    %v4102 = vld [vmem:[%s7 + $0x230] sm:$0xf]
    %v4103 = vld [vmem:[%s7 + $0x234] sm:$0xf]
    %v4104 = vld [vmem:[%s7 + $0x238] sm:$0xf]
    %v4105 = vld [vmem:[%s7 + $0x23c] sm:$0xf]
    %v4106 = vld [vmem:[%s7 + $0x240] sm:$0xf]
    %v4107 = vld [vmem:[%s7 + $0x244] sm:$0xf]
    %v4108 = vld [vmem:[%s7 + $0x248] sm:$0xf]
    %v4109 = vld [vmem:[%s7 + $0x24c] sm:$0xf]
    %v4110 = vld [vmem:[%s7 + $0x250] sm:$0xf]
    %v4111 = vld [vmem:[%s7 + $0x254] sm:$0xf]
    %v4112 = vld [vmem:[%s7 + $0x258] sm:$0xf]
    %v4113 = vld [vmem:[%s7 + $0x25c] sm:$0xf]
    %v4114 = vld [vmem:[%s7 + $0x260] sm:$0xf]
    %v4115 = vld [vmem:[%s7 + $0x264] sm:$0xf]
    %v4116 = vld [vmem:[%s7 + $0x268] sm:$0xf]
    %v4117 = vld [vmem:[%s7 + $0x26c] sm:$0xf]
    %v4118 = vld [vmem:[%s7 + $0x270] sm:$0xf]
    %v4119 = vld [vmem:[%s7 + $0x274] sm:$0xf]
    %v4120 = vld [vmem:[%s7 + $0x278] sm:$0xf]
    %v4121 = vld [vmem:[%s7 + $0x27c] sm:$0xf]
    %v4122 = vld [vmem:[%s7 + $0x280] sm:$0xf]
    %v4123 = vld [vmem:[%s7 + $0x284] sm:$0xf]
    %v4124 = vld [vmem:[%s7 + $0x288] sm:$0xf]
    %v4125 = vld [vmem:[%s7 + $0x28c] sm:$0xf]
    %v4126 = vld [vmem:[%s7 + $0x290] sm:$0xf]
    %v4127 = vld [vmem:[%s7 + $0x294] sm:$0xf]
    %v4128 = vld [vmem:[%s7 + $0x298] sm:$0xf]
    %v4129 = vld [vmem:[%s7 + $0x29c] sm:$0xf]
    %v4130 = vld [vmem:[%s7 + $0x2a0] sm:$0xf]
    %v4131 = vld [vmem:[%s7 + $0x2a4] sm:$0xf]
    %v4132 = vld [vmem:[%s7 + $0x2a8] sm:$0xf]
    %v4133 = vld [vmem:[%s7 + $0x2ac] sm:$0xf]
    %v4134 = vld [vmem:[%s7 + $0x2b0] sm:$0xf]
    %v4135 = vld [vmem:[%s7 + $0x2b4] sm:$0xf]
    %v4136 = vld [vmem:[%s7 + $0x2b8] sm:$0xf]
    %v4137 = vld [vmem:[%s7 + $0x2bc] sm:$0xf]
    %v4138 = vld [vmem:[%s7 + $0x2c0] sm:$0xf]
    %v4139 = vld [vmem:[%s7 + $0x2c4] sm:$0xf]
    %v4140 = vld [vmem:[%s7 + $0x2c8] sm:$0xf]
    %v4141 = vld [vmem:[%s7 + $0x2cc] sm:$0xf]
    %v4142 = vld [vmem:[%s7 + $0x2d0] sm:$0xf]
    %v4143 = vld [vmem:[%s7 + $0x2d4] sm:$0xf]
    %v4144 = vld [vmem:[%s7 + $0x2d8] sm:$0xf]
    %v4145 = vld [vmem:[%s7 + $0x2dc] sm:$0xf]
    %v4146 = vld [vmem:[%s7 + $0x2e0] sm:$0xf]
    %v4147 = vld [vmem:[%s7 + $0x2e4] sm:$0xf]
    %v4148 = vld [vmem:[%s7 + $0x2e8] sm:$0xf]
    %v4149 = vld [vmem:[%s7 + $0x2ec] sm:$0xf]
    %v4150 = vld [vmem:[%s7 + $0x2f0] sm:$0xf]
    %v4151 = vld [vmem:[%s7 + $0x2f4] sm:$0xf]
    %v4152 = vld [vmem:[%s7 + $0x2f8] sm:$0xf]
    %v4153 = vld [vmem:[%s7 + $0x2fc] sm:$0xf]
    %v4218 = vunpack.c.l.b16 %v4090
    %v4219 = vunpack.c.l.b16 %v4091
    %v4220 = vunpack.c.l.b16 %v4092
    %v4221 = vunpack.c.l.b16 %v4093
    %v4222 = vunpack.c.l.b16 %v4094
    %v4223 = vunpack.c.l.b16 %v4095
    %v4224 = vunpack.c.l.b16 %v4096
    %v4225 = vunpack.c.l.b16 %v4097
    %v4226 = vunpack.c.l.b16 %v4098
    %v4227 = vunpack.c.l.b16 %v4099
    %v4228 = vunpack.c.l.b16 %v4100
    %v4229 = vunpack.c.l.b16 %v4101
    %v4230 = vunpack.c.l.b16 %v4102
    %v4231 = vunpack.c.l.b16 %v4103
    %v4232 = vunpack.c.l.b16 %v4104
    %v4233 = vunpack.c.l.b16 %v4105
    %v4234 = vunpack.c.l.b16 %v4106
    %v4235 = vunpack.c.l.b16 %v4107
    %v4236 = vunpack.c.l.b16 %v4108
    %v4237 = vunpack.c.l.b16 %v4109
    %v4238 = vunpack.c.l.b16 %v4110
    %v4239 = vunpack.c.l.b16 %v4111
    %v4240 = vunpack.c.l.b16 %v4112
    %v4241 = vunpack.c.l.b16 %v4113
    %v4242 = vunpack.c.l.b16 %v4114
    %v4243 = vunpack.c.l.b16 %v4115
    %v4244 = vunpack.c.l.b16 %v4116
    %v4245 = vunpack.c.l.b16 %v4117
    %v4246 = vunpack.c.l.b16 %v4118
    %v4247 = vunpack.c.l.b16 %v4119
    %v4248 = vunpack.c.l.b16 %v4120
    %v4249 = vunpack.c.l.b16 %v4121
    %v4250 = vunpack.c.l.b16 %v4122
    %v4251 = vunpack.c.l.b16 %v4123
    %v4252 = vunpack.c.l.b16 %v4124
    %v4253 = vunpack.c.l.b16 %v4125
    %v4254 = vunpack.c.l.b16 %v4126
    %v4255 = vunpack.c.l.b16 %v4127
    %v4256 = vunpack.c.l.b16 %v4128
    %v4257 = vunpack.c.l.b16 %v4129
    %v4258 = vunpack.c.l.b16 %v4130
    %v4259 = vunpack.c.l.b16 %v4131
    %v4260 = vunpack.c.l.b16 %v4132
    %v4261 = vunpack.c.l.b16 %v4133
    %v4262 = vunpack.c.l.b16 %v4134
    %v4263 = vunpack.c.l.b16 %v4135
    %v4264 = vunpack.c.l.b16 %v4136
    %v4265 = vunpack.c.l.b16 %v4137
    %v4266 = vunpack.c.l.b16 %v4138
    %v4267 = vunpack.c.l.b16 %v4139
    %v4268 = vunpack.c.l.b16 %v4140
    %v4269 = vunpack.c.l.b16 %v4141
    %v4270 = vunpack.c.l.b16 %v4142
    %v4271 = vunpack.c.l.b16 %v4143
    %v4272 = vunpack.c.l.b16 %v4144
    %v4273 = vunpack.c.l.b16 %v4145
    %v4274 = vunpack.c.l.b16 %v4146
    %v4275 = vunpack.c.l.b16 %v4147
    %v4276 = vunpack.c.l.b16 %v4148
    %v4277 = vunpack.c.l.b16 %v4149
    %v4278 = vunpack.c.l.b16 %v4150
    %v4279 = vunpack.c.l.b16 %v4151
    %v4280 = vunpack.c.l.b16 %v4152
    %v4281 = vunpack.c.l.b16 %v4153
    %v4282 = vpack.c.b16 %v4219, %v4218
    %v4283 = vpack.c.b16 %v4221, %v4220
    %v4284 = vpack.c.b16 %v4223, %v4222
    %v4285 = vpack.c.b16 %v4225, %v4224
    %v4286 = vpack.c.b16 %v4227, %v4226
    %v4287 = vpack.c.b16 %v4229, %v4228
    %v4288 = vpack.c.b16 %v4231, %v4230
    %v4289 = vpack.c.b16 %v4233, %v4232
    %v4290 = vpack.c.b16 %v4235, %v4234
    %v4291 = vpack.c.b16 %v4237, %v4236
    %v4292 = vpack.c.b16 %v4239, %v4238
    %v4293 = vpack.c.b16 %v4241, %v4240
    %v4294 = vpack.c.b16 %v4243, %v4242
    %v4295 = vpack.c.b16 %v4245, %v4244
    %v4296 = vpack.c.b16 %v4247, %v4246
    %v4297 = vpack.c.b16 %v4249, %v4248
    %v4298 = vpack.c.b16 %v4251, %v4250
    %v4299 = vpack.c.b16 %v4253, %v4252
    %v4300 = vpack.c.b16 %v4255, %v4254
    %v4301 = vpack.c.b16 %v4257, %v4256
    %v4302 = vpack.c.b16 %v4259, %v4258
    %v4303 = vpack.c.b16 %v4261, %v4260
    %v4304 = vpack.c.b16 %v4263, %v4262
    %v4305 = vpack.c.b16 %v4265, %v4264
    %v4306 = vpack.c.b16 %v4267, %v4266
    %v4307 = vpack.c.b16 %v4269, %v4268
    %v4308 = vpack.c.b16 %v4271, %v4270
    %v4309 = vpack.c.b16 %v4273, %v4272
    %v4310 = vpack.c.b16 %v4275, %v4274
    %v4311 = vpack.c.b16 %v4277, %v4276
    %v4312 = vpack.c.b16 %v4279, %v4278
    %v4313 = vpack.c.b16 %v4281, %v4280
    %4346 = vmatprep.subr.bf16.mxu0 0
    %4347 = vmatpush1.bf16.msra.mxu0 %v4289
    %4348 = vmatprep.subr.bf16.mxu0 0
    %4349 = vmatpush1.bf16.msra.mxu0 %v4288
    %4350 = vmatprep.subr.bf16.mxu0 0
    %4351 = vmatpush1.bf16.msra.mxu0 %v4287
    %4352 = vmatprep.subr.bf16.mxu0 0
    %4353 = vmatpush1.bf16.msra.mxu0 %v4286
    %4354 = vmatprep.subr.bf16.mxu0 0
    %4355 = vmatpush1.bf16.msra.mxu0 %v4285
    %4356 = vmatprep.subr.bf16.mxu0 0
    %4357 = vmatpush1.bf16.msra.mxu0 %v4284
    %4358 = vmatprep.subr.bf16.mxu0 0
    %4359 = vmatpush1.bf16.msra.mxu0 %v4283
    %4360 = vmatprep.subr.bf16.mxu0 0
    %4361 = vmatpush1.bf16.msra.mxu0 %v4282
    %4362 = vmatprep.subr.bf16.mxu0 0
    %4363 = vmatpush2.bf16.msra.mxu0 %v4297
    %4364 = vmatprep.subr.bf16.mxu0 0
    %4365 = vmatpush2.bf16.msra.mxu0 %v4296
    %4366 = vmatprep.subr.bf16.mxu0 0
    %4367 = vmatpush2.bf16.msra.mxu0 %v4295
    %4368 = vmatprep.subr.bf16.mxu0 0
    %4369 = vmatpush2.bf16.msra.mxu0 %v4294
    %4370 = vmatprep.subr.bf16.mxu0 0
    %4371 = vmatpush2.bf16.msra.mxu0 %v4293
    %4372 = vmatprep.subr.bf16.mxu0 0
    %4373 = vmatpush2.bf16.msra.mxu0 %v4292
    %4374 = vmatprep.subr.bf16.mxu0 0
    %4375 = vmatpush2.bf16.msra.mxu0 %v4291
    %4376 = vmatprep.subr.bf16.mxu0 0
    %4377 = vmatpush2.bf16.msra.mxu0 %v4290
    %4378 = vmatprep.mubr.bf16.mxu0 %v4075
    %4379 = vmatmul.mubr.bf16.gmra.mxu0 %v4074
    %v4380 = vpop.f32.mrf.mxu0
    %v4381 = vadd.f32 0.0, %v4380
    %v4382 = vpop.f32.mrf.mxu0
    %v4383 = vpop.f32.mrf.mxu0
    %v4384 = vadd.f32 0.0, %v4383
    %v4385 = vpop.f32.mrf.mxu0
    %4386 = vmatprep.mubr.bf16.mxu0 %v4079
    %4387 = vmatmul.mubr.bf16.gmra.mxu0 %v4078
    %v4388 = vpop.f32.mrf.mxu0
    %v4389 = vadd.f32 0.0, %v4388
    %v4390 = vpop.f32.mrf.mxu0
    %v4391 = vpop.f32.mrf.mxu0
    %v4392 = vadd.f32 0.0, %v4391
    %v4393 = vpop.f32.mrf.mxu0
    %4394 = vmatprep.mubr.bf16.mxu0 %v4083
    %4395 = vmatmul.mubr.bf16.gmra.mxu0 %v4082
    %v4396 = vpop.f32.mrf.mxu0
    %v4397 = vadd.f32 0.0, %v4396
    %v4398 = vpop.f32.mrf.mxu0
    %v4399 = vpop.f32.mrf.mxu0
    %v4400 = vadd.f32 0.0, %v4399
    %v4401 = vpop.f32.mrf.mxu0
    %4402 = vmatprep.mubr.bf16.mxu0 %v4087
    %4403 = vmatmul.mubr.bf16.gmra.mxu0 %v4086
    %v4404 = vpop.f32.mrf.mxu0
    %v4405 = vadd.f32 0.0, %v4404
    %v4406 = vpop.f32.mrf.mxu0
    %v4407 = vpop.f32.mrf.mxu0
    %v4408 = vadd.f32 0.0, %v4407
    %v4409 = vpop.f32.mrf.mxu0
    %4410 = vdwg.mxu0
    %4411 = vmatprep.subr.bf16.mxu0 0
    %4412 = vmatpush1.bf16.msra.mxu0 %v4305
    %4413 = vmatprep.subr.bf16.mxu0 0
    %4414 = vmatpush1.bf16.msra.mxu0 %v4304
    %4415 = vmatprep.subr.bf16.mxu0 0
    %4416 = vmatpush1.bf16.msra.mxu0 %v4303
    %4417 = vmatprep.subr.bf16.mxu0 0
    %4418 = vmatpush1.bf16.msra.mxu0 %v4302
    %4419 = vmatprep.subr.bf16.mxu0 0
    %4420 = vmatpush1.bf16.msra.mxu0 %v4301
    %4421 = vmatprep.subr.bf16.mxu0 0
    %4422 = vmatpush1.bf16.msra.mxu0 %v4300
    %4423 = vmatprep.subr.bf16.mxu0 0
    %4424 = vmatpush1.bf16.msra.mxu0 %v4299
    %4425 = vmatprep.subr.bf16.mxu0 0
    %4426 = vmatpush1.bf16.msra.mxu0 %v4298
    %4427 = vmatprep.subr.bf16.mxu0 0
    %4428 = vmatpush2.bf16.msra.mxu0 %v4313
    %4429 = vmatprep.subr.bf16.mxu0 0
    %4430 = vmatpush2.bf16.msra.mxu0 %v4312
    %4431 = vmatprep.subr.bf16.mxu0 0
    %4432 = vmatpush2.bf16.msra.mxu0 %v4311
    %4433 = vmatprep.subr.bf16.mxu0 0
    %4434 = vmatpush2.bf16.msra.mxu0 %v4310
    %4435 = vmatprep.subr.bf16.mxu0 0
    %4436 = vmatpush2.bf16.msra.mxu0 %v4309
    %4437 = vmatprep.subr.bf16.mxu0 0
    %4438 = vmatpush2.bf16.msra.mxu0 %v4308
    %4439 = vmatprep.subr.bf16.mxu0 0
    %4440 = vmatpush2.bf16.msra.mxu0 %v4307
    %4441 = vmatprep.subr.bf16.mxu0 0
    %4442 = vmatpush2.bf16.msra.mxu0 %v4306
    %4443 = vmatprep.mubr.bf16.mxu0 %v4077
    %4444 = vmatmul.mubr.bf16.gmra.mxu0 %v4076
    %v4445 = vpop.f32.mrf.mxu0
    %v4446 = vadd.f32 %v4381, %v4445
    %v4447 = vpop.f32.mrf.mxu0
    %v4448 = vpop.f32.mrf.mxu0
    %v4449 = vadd.f32 %v4384, %v4448
    %v4450 = vpop.f32.mrf.mxu0
    %4451 = vmatprep.mubr.bf16.mxu0 %v4081
    %4452 = vmatmul.mubr.bf16.gmra.mxu0 %v4080
    %v4453 = vpop.f32.mrf.mxu0
    %v4454 = vadd.f32 %v4389, %v4453
    %v4455 = vpop.f32.mrf.mxu0
    %v4456 = vpop.f32.mrf.mxu0
    %v4457 = vadd.f32 %v4392, %v4456
    %v4458 = vpop.f32.mrf.mxu0
    %4459 = vmatprep.mubr.bf16.mxu0 %v4085
    %4460 = vmatmul.mubr.bf16.gmra.mxu0 %v4084
    %v4461 = vpop.f32.mrf.mxu0
    %v4462 = vadd.f32 %v4397, %v4461
    %v4463 = vpop.f32.mrf.mxu0
    %v4464 = vpop.f32.mrf.mxu0
    %v4465 = vadd.f32 %v4400, %v4464
    %v4466 = vpop.f32.mrf.mxu0
    %4467 = vmatprep.mubr.bf16.mxu0 %v4089
    %4468 = vmatmul.mubr.bf16.gmra.mxu0 %v4088
    %v4469 = vpop.f32.mrf.mxu0
    %v4470 = vadd.f32 %v4405, %v4469
    %v4471 = vpop.f32.mrf.mxu0
    %v4472 = vpop.f32.mrf.mxu0
    %v4473 = vadd.f32 %v4408, %v4472
    %v4474 = vpop.f32.mrf.mxu0
    %4475 = vdwg.mxu0
    %v4476 = vadd.f32 %v3748, %v4446
    %v4477 = vadd.f32 %v3751, %v4449
    %v4478 = vadd.f32 %v3756, %v4454
    %v4479 = vadd.f32 %v3759, %v4457
    %v4480 = vadd.f32 %v3764, %v4462
    %v4481 = vadd.f32 %v3767, %v4465
    %v4482 = vadd.f32 %v3772, %v4470
    %v4483 = vadd.f32 %v3775, %v4473
    %v4484 = vld [vmem:[%s5 + $0x30] sm:$0xff]
    %v4485 = vld [vmem:[%s5 + $0x38] sm:$0xff]
    %v4486 = vld [vmem:[%s5 + $0x70] sm:$0xff]
    %v4487 = vld [vmem:[%s5 + $0x78] sm:$0xff]
    %v4488 = vld [vmem:[%s5 + $0xb0] sm:$0xff]
    %v4489 = vld [vmem:[%s5 + $0xb8] sm:$0xff]
    %v4490 = vld [vmem:[%s5 + $0xf0] sm:$0xff]
    %v4491 = vld [vmem:[%s5 + $0xf8] sm:$0xff]
    %v4492 = vld [vmem:[%s5 + $0x130] sm:$0xff]
    %v4493 = vld [vmem:[%s5 + $0x138] sm:$0xff]
    %v4494 = vld [vmem:[%s5 + $0x170] sm:$0xff]
    %v4495 = vld [vmem:[%s5 + $0x178] sm:$0xff]
    %v4496 = vld [vmem:[%s5 + $0x1b0] sm:$0xff]
    %v4497 = vld [vmem:[%s5 + $0x1b8] sm:$0xff]
    %v4498 = vld [vmem:[%s5 + $0x1f0] sm:$0xff]
    %v4499 = vld [vmem:[%s5 + $0x1f8] sm:$0xff]
    %v4500 = vld [vmem:[%s6 + $0xc] sm:$0xf]
    %v4502 = vlaneseq
    %v4503 = vshrl.u32 %v4502, 7
    %v4504 = vsub.s32 0, %v4503
    %v4505 = vrot.slane %v4500, %v4504
    %v4506 = vlaneseq
    %v4507 = vshrl.u32 %v4506, 7
    %v4508 = vsub.s32 1, %v4507
    %v4509 = vrot.slane %v4500, %v4508
    %v4510 = vlaneseq
    %v4511 = vshrl.u32 %v4510, 7
    %v4512 = vsub.s32 2, %v4511
    %v4513 = vrot.slane %v4500, %v4512
    %v4514 = vlaneseq
    %v4515 = vshrl.u32 %v4514, 7
    %v4516 = vsub.s32 3, %v4515
    %v4517 = vrot.slane %v4500, %v4516
    %v4538 = vunpack.c.l.b16 %v4484
    %v4539 = vunpack.c.h.b16 %v4484
    %v4540 = vunpack.c.l.b16 %v4485
    %v4541 = vunpack.c.h.b16 %v4485
    %v4542 = vunpack.c.l.b16 %v4486
    %v4543 = vunpack.c.h.b16 %v4486
    %v4544 = vunpack.c.l.b16 %v4487
    %v4545 = vunpack.c.h.b16 %v4487
    %v4546 = vunpack.c.l.b16 %v4488
    %v4547 = vunpack.c.h.b16 %v4488
    %v4548 = vunpack.c.l.b16 %v4489
    %v4549 = vunpack.c.h.b16 %v4489
    %v4550 = vunpack.c.l.b16 %v4490
    %v4551 = vunpack.c.h.b16 %v4490
    %v4552 = vunpack.c.l.b16 %v4491
    %v4553 = vunpack.c.h.b16 %v4491
    %v4554 = vunpack.c.l.b16 %v4492
    %v4555 = vunpack.c.h.b16 %v4492
    %v4556 = vunpack.c.l.b16 %v4493
    %v4557 = vunpack.c.h.b16 %v4493
    %v4558 = vunpack.c.l.b16 %v4494
    %v4559 = vunpack.c.h.b16 %v4494
    %v4560 = vunpack.c.l.b16 %v4495
    %v4561 = vunpack.c.h.b16 %v4495
    %v4562 = vunpack.c.l.b16 %v4496
    %v4563 = vunpack.c.h.b16 %v4496
    %v4564 = vunpack.c.l.b16 %v4497
    %v4565 = vunpack.c.h.b16 %v4497
    %v4566 = vunpack.c.l.b16 %v4498
    %v4567 = vunpack.c.h.b16 %v4498
    %v4568 = vunpack.c.l.b16 %v4499
    %v4569 = vunpack.c.h.b16 %v4499
    %v4570 = vpack.c.b16 %v4542, %v4538
    %v4571 = vpack.c.b16 %v4543, %v4539
    %v4572 = vpack.c.b16 %v4544, %v4540
    %v4573 = vpack.c.b16 %v4545, %v4541
    %v4574 = vpack.c.b16 %v4550, %v4546
    %v4575 = vpack.c.b16 %v4551, %v4547
    %v4576 = vpack.c.b16 %v4552, %v4548
    %v4577 = vpack.c.b16 %v4553, %v4549
    %v4578 = vpack.c.b16 %v4558, %v4554
    %v4579 = vpack.c.b16 %v4559, %v4555
    %v4580 = vpack.c.b16 %v4560, %v4556
    %v4581 = vpack.c.b16 %v4561, %v4557
    %v4582 = vpack.c.b16 %v4566, %v4562
    %v4583 = vpack.c.b16 %v4567, %v4563
    %v4584 = vpack.c.b16 %v4568, %v4564
    %v4585 = vpack.c.b16 %v4569, %v4565
    %4602 = vmatprep.subr.bf16.mxu0 0
    %4603 = vmatpush1.bf16.msra.mxu0 0
    %4604 = vmatprep.subr.bf16.mxu0 0
    %4605 = vmatpush1.bf16.msra.mxu0 0
    %4606 = vmatprep.subr.bf16.mxu0 0
    %4607 = vmatpush1.bf16.msra.mxu0 0
    %4608 = vmatprep.subr.bf16.mxu0 0
    %4609 = vmatpush1.bf16.msra.mxu0 0
    %4610 = vmatprep.subr.bf16.mxu0 %v4583
    %4611 = vmatpush1.bf16.msra.mxu0 %v4582
    %4612 = vmatprep.subr.bf16.mxu0 %v4579
    %4613 = vmatpush1.bf16.msra.mxu0 %v4578
    %4614 = vmatprep.subr.bf16.mxu0 %v4575
    %4615 = vmatpush1.bf16.msra.mxu0 %v4574
    %4616 = vmatprep.subr.bf16.mxu0 %v4571
    %4617 = vmatpush1.bf16.msra.mxu0 %v4570
    %4618 = vmatprep.subr.bf16.mxu0 0
    %4619 = vmatpush2.bf16.msra.mxu0 0
    %4620 = vmatprep.subr.bf16.mxu0 0
    %4621 = vmatpush2.bf16.msra.mxu0 0
    %4622 = vmatprep.subr.bf16.mxu0 0
    %4623 = vmatpush2.bf16.msra.mxu0 0
    %4624 = vmatprep.subr.bf16.mxu0 0
    %4625 = vmatpush2.bf16.msra.mxu0 0
    %4626 = vmatprep.subr.bf16.mxu0 0
    %4627 = vmatpush2.bf16.msra.mxu0 0
    %4628 = vmatprep.subr.bf16.mxu0 0
    %4629 = vmatpush2.bf16.msra.mxu0 0
    %4630 = vmatprep.subr.bf16.mxu0 0
    %4631 = vmatpush2.bf16.msra.mxu0 0
    %4632 = vmatprep.subr.bf16.mxu0 0
    %4633 = vmatpush2.bf16.msra.mxu0 0
    %4634 = vmatprep.mubr.bf16.mxu0 0
    %4635 = vmatmul.mubr.bf16.gmra.mxu0 %v2489
    %v4636 = vpop.f32.mrf.mxu0
    %v4637 = vadd.f32 %v4505, %v4636
    %v4638 = vpop.f32.mrf.mxu0
    %v4639 = vadd.f32 %v4509, %v4638
    %v4640 = vpop.f32.mrf.mxu0
    %v4641 = vadd.f32 %v4505, %v4640
    %v4642 = vpop.f32.mrf.mxu0
    %v4643 = vadd.f32 %v4509, %v4642
    %4644 = vmatprep.mubr.bf16.mxu0 0
    %4645 = vmatmul.mubr.bf16.gmra.mxu0 %v2492
    %v4646 = vpop.f32.mrf.mxu0
    %v4647 = vadd.f32 %v4505, %v4646
    %v4648 = vpop.f32.mrf.mxu0
    %v4649 = vadd.f32 %v4509, %v4648
    %v4650 = vpop.f32.mrf.mxu0
    %v4651 = vadd.f32 %v4505, %v4650
    %v4652 = vpop.f32.mrf.mxu0
    %v4653 = vadd.f32 %v4509, %v4652
    %4654 = vmatprep.mubr.bf16.mxu0 0
    %4655 = vmatmul.mubr.bf16.gmra.mxu0 %v2495
    %v4656 = vpop.f32.mrf.mxu0
    %v4657 = vadd.f32 %v4505, %v4656
    %v4658 = vpop.f32.mrf.mxu0
    %v4659 = vadd.f32 %v4509, %v4658
    %v4660 = vpop.f32.mrf.mxu0
    %v4661 = vadd.f32 %v4505, %v4660
    %v4662 = vpop.f32.mrf.mxu0
    %v4663 = vadd.f32 %v4509, %v4662
    %4664 = vmatprep.mubr.bf16.mxu0 0
    %4665 = vmatmul.mubr.bf16.gmra.mxu0 %v2498
    %v4666 = vpop.f32.mrf.mxu0
    %v4667 = vadd.f32 %v4505, %v4666
    %v4668 = vpop.f32.mrf.mxu0
    %v4669 = vadd.f32 %v4509, %v4668
    %v4670 = vpop.f32.mrf.mxu0
    %v4671 = vadd.f32 %v4505, %v4670
    %v4672 = vpop.f32.mrf.mxu0
    %v4673 = vadd.f32 %v4509, %v4672
    %4674 = vdwg.mxu0
    %4675 = vmatprep.subr.bf16.mxu0 0
    %4676 = vmatpush1.bf16.msra.mxu0 0
    %4677 = vmatprep.subr.bf16.mxu0 0
    %4678 = vmatpush1.bf16.msra.mxu0 0
    %4679 = vmatprep.subr.bf16.mxu0 0
    %4680 = vmatpush1.bf16.msra.mxu0 0
    %4681 = vmatprep.subr.bf16.mxu0 0
    %4682 = vmatpush1.bf16.msra.mxu0 0
    %4683 = vmatprep.subr.bf16.mxu0 %v4585
    %4684 = vmatpush1.bf16.msra.mxu0 %v4584
    %4685 = vmatprep.subr.bf16.mxu0 %v4581
    %4686 = vmatpush1.bf16.msra.mxu0 %v4580
    %4687 = vmatprep.subr.bf16.mxu0 %v4577
    %4688 = vmatpush1.bf16.msra.mxu0 %v4576
    %4689 = vmatprep.subr.bf16.mxu0 %v4573
    %4690 = vmatpush1.bf16.msra.mxu0 %v4572
    %4691 = vmatprep.subr.bf16.mxu0 0
    %4692 = vmatpush2.bf16.msra.mxu0 0
    %4693 = vmatprep.subr.bf16.mxu0 0
    %4694 = vmatpush2.bf16.msra.mxu0 0
    %4695 = vmatprep.subr.bf16.mxu0 0
    %4696 = vmatpush2.bf16.msra.mxu0 0
    %4697 = vmatprep.subr.bf16.mxu0 0
    %4698 = vmatpush2.bf16.msra.mxu0 0
    %4699 = vmatprep.subr.bf16.mxu0 0
    %4700 = vmatpush2.bf16.msra.mxu0 0
    %4701 = vmatprep.subr.bf16.mxu0 0
    %4702 = vmatpush2.bf16.msra.mxu0 0
    %4703 = vmatprep.subr.bf16.mxu0 0
    %4704 = vmatpush2.bf16.msra.mxu0 0
    %4705 = vmatprep.subr.bf16.mxu0 0
    %4706 = vmatpush2.bf16.msra.mxu0 0
    %4707 = vmatprep.mubr.bf16.mxu0 0
    %4708 = vmatmul.mubr.bf16.gmra.mxu0 %v2489
    %v4709 = vpop.f32.mrf.mxu0
    %v4710 = vadd.f32 %v4513, %v4709
    %v4711 = vpop.f32.mrf.mxu0
    %v4712 = vadd.f32 %v4517, %v4711
    %v4713 = vpop.f32.mrf.mxu0
    %v4714 = vadd.f32 %v4513, %v4713
    %v4715 = vpop.f32.mrf.mxu0
    %v4716 = vadd.f32 %v4517, %v4715
    %4717 = vmatprep.mubr.bf16.mxu0 0
    %4718 = vmatmul.mubr.bf16.gmra.mxu0 %v2492
    %v4719 = vpop.f32.mrf.mxu0
    %v4720 = vadd.f32 %v4513, %v4719
    %v4721 = vpop.f32.mrf.mxu0
    %v4722 = vadd.f32 %v4517, %v4721
    %v4723 = vpop.f32.mrf.mxu0
    %v4724 = vadd.f32 %v4513, %v4723
    %v4725 = vpop.f32.mrf.mxu0
    %v4726 = vadd.f32 %v4517, %v4725
    %4727 = vmatprep.mubr.bf16.mxu0 0
    %4728 = vmatmul.mubr.bf16.gmra.mxu0 %v2495
    %v4729 = vpop.f32.mrf.mxu0
    %v4730 = vadd.f32 %v4513, %v4729
    %v4731 = vpop.f32.mrf.mxu0
    %v4732 = vadd.f32 %v4517, %v4731
    %v4733 = vpop.f32.mrf.mxu0
    %v4734 = vadd.f32 %v4513, %v4733
    %v4735 = vpop.f32.mrf.mxu0
    %v4736 = vadd.f32 %v4517, %v4735
    %4737 = vmatprep.mubr.bf16.mxu0 0
    %4738 = vmatmul.mubr.bf16.gmra.mxu0 %v2498
    %v4739 = vpop.f32.mrf.mxu0
    %v4740 = vadd.f32 %v4513, %v4739
    %v4741 = vpop.f32.mrf.mxu0
    %v4742 = vadd.f32 %v4517, %v4741
    %v4743 = vpop.f32.mrf.mxu0
    %v4744 = vadd.f32 %v4513, %v4743
    %v4745 = vpop.f32.mrf.mxu0
    %v4746 = vadd.f32 %v4517, %v4745
    %4747 = vdwg.mxu0
    %v4748 = vmax.f32 %v4637, 0.0
    %v4749 = vmax.f32 %v4639, 0.0
    %v4750 = vmax.f32 %v4710, 0.0
    %v4751 = vmax.f32 %v4712, 0.0
    %v4752 = vmax.f32 %v4641, 0.0
    %v4753 = vmax.f32 %v4643, 0.0
    %v4754 = vmax.f32 %v4714, 0.0
    %v4755 = vmax.f32 %v4716, 0.0
    %v4756 = vmax.f32 %v4647, 0.0
    %v4757 = vmax.f32 %v4649, 0.0
    %v4758 = vmax.f32 %v4720, 0.0
    %v4759 = vmax.f32 %v4722, 0.0
    %v4760 = vmax.f32 %v4651, 0.0
    %v4761 = vmax.f32 %v4653, 0.0
    %v4762 = vmax.f32 %v4724, 0.0
    %v4763 = vmax.f32 %v4726, 0.0
    %v4764 = vmax.f32 %v4657, 0.0
    %v4765 = vmax.f32 %v4659, 0.0
    %v4766 = vmax.f32 %v4730, 0.0
    %v4767 = vmax.f32 %v4732, 0.0
    %v4768 = vmax.f32 %v4661, 0.0
    %v4769 = vmax.f32 %v4663, 0.0
    %v4770 = vmax.f32 %v4734, 0.0
    %v4771 = vmax.f32 %v4736, 0.0
    %v4772 = vmax.f32 %v4667, 0.0
    %v4773 = vmax.f32 %v4669, 0.0
    %v4774 = vmax.f32 %v4740, 0.0
    %v4775 = vmax.f32 %v4742, 0.0
    %v4776 = vmax.f32 %v4671, 0.0
    %v4777 = vmax.f32 %v4673, 0.0
    %v4778 = vmax.f32 %v4744, 0.0
    %v4779 = vmax.f32 %v4746, 0.0
    %v4780 = vpack.c.bf16 %v4752, %v4748
    %v4781 = vpack.c.bf16 %v4753, %v4749
    %v4782 = vpack.c.bf16 %v4754, %v4750
    %v4783 = vpack.c.bf16 %v4755, %v4751
    %v4784 = vpack.c.bf16 %v4760, %v4756
    %v4785 = vpack.c.bf16 %v4761, %v4757
    %v4786 = vpack.c.bf16 %v4762, %v4758
    %v4787 = vpack.c.bf16 %v4763, %v4759
    %v4788 = vpack.c.bf16 %v4768, %v4764
    %v4789 = vpack.c.bf16 %v4769, %v4765
    %v4790 = vpack.c.bf16 %v4770, %v4766
    %v4791 = vpack.c.bf16 %v4771, %v4767
    %v4792 = vpack.c.bf16 %v4776, %v4772
    %v4793 = vpack.c.bf16 %v4777, %v4773
    %v4794 = vpack.c.bf16 %v4778, %v4774
    %v4795 = vpack.c.bf16 %v4779, %v4775
    %v4796 = vld [vmem:[%s7 + $0x300] sm:$0xf]
    %v4797 = vld [vmem:[%s7 + $0x304] sm:$0xf]
    %v4798 = vld [vmem:[%s7 + $0x308] sm:$0xf]
    %v4799 = vld [vmem:[%s7 + $0x30c] sm:$0xf]
    %v4800 = vld [vmem:[%s7 + $0x310] sm:$0xf]
    %v4801 = vld [vmem:[%s7 + $0x314] sm:$0xf]
    %v4802 = vld [vmem:[%s7 + $0x318] sm:$0xf]
    %v4803 = vld [vmem:[%s7 + $0x31c] sm:$0xf]
    %v4804 = vld [vmem:[%s7 + $0x320] sm:$0xf]
    %v4805 = vld [vmem:[%s7 + $0x324] sm:$0xf]
    %v4806 = vld [vmem:[%s7 + $0x328] sm:$0xf]
    %v4807 = vld [vmem:[%s7 + $0x32c] sm:$0xf]
    %v4808 = vld [vmem:[%s7 + $0x330] sm:$0xf]
    %v4809 = vld [vmem:[%s7 + $0x334] sm:$0xf]
    %v4810 = vld [vmem:[%s7 + $0x338] sm:$0xf]
    %v4811 = vld [vmem:[%s7 + $0x33c] sm:$0xf]
    %v4812 = vld [vmem:[%s7 + $0x340] sm:$0xf]
    %v4813 = vld [vmem:[%s7 + $0x344] sm:$0xf]
    %v4814 = vld [vmem:[%s7 + $0x348] sm:$0xf]
    %v4815 = vld [vmem:[%s7 + $0x34c] sm:$0xf]
    %v4816 = vld [vmem:[%s7 + $0x350] sm:$0xf]
    %v4817 = vld [vmem:[%s7 + $0x354] sm:$0xf]
    %v4818 = vld [vmem:[%s7 + $0x358] sm:$0xf]
    %v4819 = vld [vmem:[%s7 + $0x35c] sm:$0xf]
    %v4820 = vld [vmem:[%s7 + $0x360] sm:$0xf]
    %v4821 = vld [vmem:[%s7 + $0x364] sm:$0xf]
    %v4822 = vld [vmem:[%s7 + $0x368] sm:$0xf]
    %v4823 = vld [vmem:[%s7 + $0x36c] sm:$0xf]
    %v4824 = vld [vmem:[%s7 + $0x370] sm:$0xf]
    %v4825 = vld [vmem:[%s7 + $0x374] sm:$0xf]
    %v4826 = vld [vmem:[%s7 + $0x378] sm:$0xf]
    %v4827 = vld [vmem:[%s7 + $0x37c] sm:$0xf]
    %v4828 = vld [vmem:[%s7 + $0x380] sm:$0xf]
    %v4829 = vld [vmem:[%s7 + $0x384] sm:$0xf]
    %v4830 = vld [vmem:[%s7 + $0x388] sm:$0xf]
    %v4831 = vld [vmem:[%s7 + $0x38c] sm:$0xf]
    %v4832 = vld [vmem:[%s7 + $0x390] sm:$0xf]
    %v4833 = vld [vmem:[%s7 + $0x394] sm:$0xf]
    %v4834 = vld [vmem:[%s7 + $0x398] sm:$0xf]
    %v4835 = vld [vmem:[%s7 + $0x39c] sm:$0xf]
    %v4836 = vld [vmem:[%s7 + $0x3a0] sm:$0xf]
    %v4837 = vld [vmem:[%s7 + $0x3a4] sm:$0xf]
    %v4838 = vld [vmem:[%s7 + $0x3a8] sm:$0xf]
    %v4839 = vld [vmem:[%s7 + $0x3ac] sm:$0xf]
    %v4840 = vld [vmem:[%s7 + $0x3b0] sm:$0xf]
    %v4841 = vld [vmem:[%s7 + $0x3b4] sm:$0xf]
    %v4842 = vld [vmem:[%s7 + $0x3b8] sm:$0xf]
    %v4843 = vld [vmem:[%s7 + $0x3bc] sm:$0xf]
    %v4844 = vld [vmem:[%s7 + $0x3c0] sm:$0xf]
    %v4845 = vld [vmem:[%s7 + $0x3c4] sm:$0xf]
    %v4846 = vld [vmem:[%s7 + $0x3c8] sm:$0xf]
    %v4847 = vld [vmem:[%s7 + $0x3cc] sm:$0xf]
    %v4848 = vld [vmem:[%s7 + $0x3d0] sm:$0xf]
    %v4849 = vld [vmem:[%s7 + $0x3d4] sm:$0xf]
    %v4850 = vld [vmem:[%s7 + $0x3d8] sm:$0xf]
    %v4851 = vld [vmem:[%s7 + $0x3dc] sm:$0xf]
    %v4852 = vld [vmem:[%s7 + $0x3e0] sm:$0xf]
    %v4853 = vld [vmem:[%s7 + $0x3e4] sm:$0xf]
    %v4854 = vld [vmem:[%s7 + $0x3e8] sm:$0xf]
    %v4855 = vld [vmem:[%s7 + $0x3ec] sm:$0xf]
    %v4856 = vld [vmem:[%s7 + $0x3f0] sm:$0xf]
    %v4857 = vld [vmem:[%s7 + $0x3f4] sm:$0xf]
    %v4858 = vld [vmem:[%s7 + $0x3f8] sm:$0xf]
    %v4859 = vld [vmem:[%s7 + $0x3fc] sm:$0xf]
    %v4924 = vunpack.c.l.b16 %v4796
    %v4925 = vunpack.c.l.b16 %v4797
    %v4926 = vunpack.c.l.b16 %v4798
    %v4927 = vunpack.c.l.b16 %v4799
    %v4928 = vunpack.c.l.b16 %v4800
    %v4929 = vunpack.c.l.b16 %v4801
    %v4930 = vunpack.c.l.b16 %v4802
    %v4931 = vunpack.c.l.b16 %v4803
    %v4932 = vunpack.c.l.b16 %v4804
    %v4933 = vunpack.c.l.b16 %v4805
    %v4934 = vunpack.c.l.b16 %v4806
    %v4935 = vunpack.c.l.b16 %v4807
    %v4936 = vunpack.c.l.b16 %v4808
    %v4937 = vunpack.c.l.b16 %v4809
    %v4938 = vunpack.c.l.b16 %v4810
    %v4939 = vunpack.c.l.b16 %v4811
    %v4940 = vunpack.c.l.b16 %v4812
    %v4941 = vunpack.c.l.b16 %v4813
    %v4942 = vunpack.c.l.b16 %v4814
    %v4943 = vunpack.c.l.b16 %v4815
    %v4944 = vunpack.c.l.b16 %v4816
    %v4945 = vunpack.c.l.b16 %v4817
    %v4946 = vunpack.c.l.b16 %v4818
    %v4947 = vunpack.c.l.b16 %v4819
    %v4948 = vunpack.c.l.b16 %v4820
    %v4949 = vunpack.c.l.b16 %v4821
    %v4950 = vunpack.c.l.b16 %v4822
    %v4951 = vunpack.c.l.b16 %v4823
    %v4952 = vunpack.c.l.b16 %v4824
    %v4953 = vunpack.c.l.b16 %v4825
    %v4954 = vunpack.c.l.b16 %v4826
    %v4955 = vunpack.c.l.b16 %v4827
    %v4956 = vunpack.c.l.b16 %v4828
    %v4957 = vunpack.c.l.b16 %v4829
    %v4958 = vunpack.c.l.b16 %v4830
    %v4959 = vunpack.c.l.b16 %v4831
    %v4960 = vunpack.c.l.b16 %v4832
    %v4961 = vunpack.c.l.b16 %v4833
    %v4962 = vunpack.c.l.b16 %v4834
    %v4963 = vunpack.c.l.b16 %v4835
    %v4964 = vunpack.c.l.b16 %v4836
    %v4965 = vunpack.c.l.b16 %v4837
    %v4966 = vunpack.c.l.b16 %v4838
    %v4967 = vunpack.c.l.b16 %v4839
    %v4968 = vunpack.c.l.b16 %v4840
    %v4969 = vunpack.c.l.b16 %v4841
    %v4970 = vunpack.c.l.b16 %v4842
    %v4971 = vunpack.c.l.b16 %v4843
    %v4972 = vunpack.c.l.b16 %v4844
    %v4973 = vunpack.c.l.b16 %v4845
    %v4974 = vunpack.c.l.b16 %v4846
    %v4975 = vunpack.c.l.b16 %v4847
    %v4976 = vunpack.c.l.b16 %v4848
    %v4977 = vunpack.c.l.b16 %v4849
    %v4978 = vunpack.c.l.b16 %v4850
    %v4979 = vunpack.c.l.b16 %v4851
    %v4980 = vunpack.c.l.b16 %v4852
    %v4981 = vunpack.c.l.b16 %v4853
    %v4982 = vunpack.c.l.b16 %v4854
    %v4983 = vunpack.c.l.b16 %v4855
    %v4984 = vunpack.c.l.b16 %v4856
    %v4985 = vunpack.c.l.b16 %v4857
    %v4986 = vunpack.c.l.b16 %v4858
    %v4987 = vunpack.c.l.b16 %v4859
    %v4988 = vpack.c.b16 %v4925, %v4924
    %v4989 = vpack.c.b16 %v4927, %v4926
    %v4990 = vpack.c.b16 %v4929, %v4928
    %v4991 = vpack.c.b16 %v4931, %v4930
    %v4992 = vpack.c.b16 %v4933, %v4932
    %v4993 = vpack.c.b16 %v4935, %v4934
    %v4994 = vpack.c.b16 %v4937, %v4936
    %v4995 = vpack.c.b16 %v4939, %v4938
    %v4996 = vpack.c.b16 %v4941, %v4940
    %v4997 = vpack.c.b16 %v4943, %v4942
    %v4998 = vpack.c.b16 %v4945, %v4944
    %v4999 = vpack.c.b16 %v4947, %v4946
    %v5000 = vpack.c.b16 %v4949, %v4948
    %v5001 = vpack.c.b16 %v4951, %v4950
    %v5002 = vpack.c.b16 %v4953, %v4952
    %v5003 = vpack.c.b16 %v4955, %v4954
    %v5004 = vpack.c.b16 %v4957, %v4956
    %v5005 = vpack.c.b16 %v4959, %v4958
    %v5006 = vpack.c.b16 %v4961, %v4960
    %v5007 = vpack.c.b16 %v4963, %v4962
    %v5008 = vpack.c.b16 %v4965, %v4964
    %v5009 = vpack.c.b16 %v4967, %v4966
    %v5010 = vpack.c.b16 %v4969, %v4968
    %v5011 = vpack.c.b16 %v4971, %v4970
    %v5012 = vpack.c.b16 %v4973, %v4972
    %v5013 = vpack.c.b16 %v4975, %v4974
    %v5014 = vpack.c.b16 %v4977, %v4976
    %v5015 = vpack.c.b16 %v4979, %v4978
    %v5016 = vpack.c.b16 %v4981, %v4980
    %v5017 = vpack.c.b16 %v4983, %v4982
    %v5018 = vpack.c.b16 %v4985, %v4984
    %v5019 = vpack.c.b16 %v4987, %v4986
    %5052 = vmatprep.subr.bf16.mxu0 0
    %5053 = vmatpush1.bf16.msra.mxu0 %v4995
    %5054 = vmatprep.subr.bf16.mxu0 0
    %5055 = vmatpush1.bf16.msra.mxu0 %v4994
    %5056 = vmatprep.subr.bf16.mxu0 0
    %5057 = vmatpush1.bf16.msra.mxu0 %v4993
    %5058 = vmatprep.subr.bf16.mxu0 0
    %5059 = vmatpush1.bf16.msra.mxu0 %v4992
    %5060 = vmatprep.subr.bf16.mxu0 0
    %5061 = vmatpush1.bf16.msra.mxu0 %v4991
    %5062 = vmatprep.subr.bf16.mxu0 0
    %5063 = vmatpush1.bf16.msra.mxu0 %v4990
    %5064 = vmatprep.subr.bf16.mxu0 0
    %5065 = vmatpush1.bf16.msra.mxu0 %v4989
    %5066 = vmatprep.subr.bf16.mxu0 0
    %5067 = vmatpush1.bf16.msra.mxu0 %v4988
    %5068 = vmatprep.subr.bf16.mxu0 0
    %5069 = vmatpush2.bf16.msra.mxu0 %v5003
    %5070 = vmatprep.subr.bf16.mxu0 0
    %5071 = vmatpush2.bf16.msra.mxu0 %v5002
    %5072 = vmatprep.subr.bf16.mxu0 0
    %5073 = vmatpush2.bf16.msra.mxu0 %v5001
    %5074 = vmatprep.subr.bf16.mxu0 0
    %5075 = vmatpush2.bf16.msra.mxu0 %v5000
    %5076 = vmatprep.subr.bf16.mxu0 0
    %5077 = vmatpush2.bf16.msra.mxu0 %v4999
    %5078 = vmatprep.subr.bf16.mxu0 0
    %5079 = vmatpush2.bf16.msra.mxu0 %v4998
    %5080 = vmatprep.subr.bf16.mxu0 0
    %5081 = vmatpush2.bf16.msra.mxu0 %v4997
    %5082 = vmatprep.subr.bf16.mxu0 0
    %5083 = vmatpush2.bf16.msra.mxu0 %v4996
    %5084 = vmatprep.mubr.bf16.mxu0 %v4781
    %5085 = vmatmul.mubr.bf16.gmra.mxu0 %v4780
    %v5086 = vpop.f32.mrf.mxu0
    %v5087 = vadd.f32 0.0, %v5086
    %v5088 = vpop.f32.mrf.mxu0
    %v5089 = vpop.f32.mrf.mxu0
    %v5090 = vadd.f32 0.0, %v5089
    %v5091 = vpop.f32.mrf.mxu0
    %5092 = vmatprep.mubr.bf16.mxu0 %v4785
    %5093 = vmatmul.mubr.bf16.gmra.mxu0 %v4784
    %v5094 = vpop.f32.mrf.mxu0
    %v5095 = vadd.f32 0.0, %v5094
    %v5096 = vpop.f32.mrf.mxu0
    %v5097 = vpop.f32.mrf.mxu0
    %v5098 = vadd.f32 0.0, %v5097
    %v5099 = vpop.f32.mrf.mxu0
    %5100 = vmatprep.mubr.bf16.mxu0 %v4789
    %5101 = vmatmul.mubr.bf16.gmra.mxu0 %v4788
    %v5102 = vpop.f32.mrf.mxu0
    %v5103 = vadd.f32 0.0, %v5102
    %v5104 = vpop.f32.mrf.mxu0
    %v5105 = vpop.f32.mrf.mxu0
    %v5106 = vadd.f32 0.0, %v5105
    %v5107 = vpop.f32.mrf.mxu0
    %5108 = vmatprep.mubr.bf16.mxu0 %v4793
    %5109 = vmatmul.mubr.bf16.gmra.mxu0 %v4792
    %v5110 = vpop.f32.mrf.mxu0
    %v5111 = vadd.f32 0.0, %v5110
    %v5112 = vpop.f32.mrf.mxu0
    %v5113 = vpop.f32.mrf.mxu0
    %v5114 = vadd.f32 0.0, %v5113
    %v5115 = vpop.f32.mrf.mxu0
    %5116 = vdwg.mxu0
    %5117 = vmatprep.subr.bf16.mxu0 0
    %5118 = vmatpush1.bf16.msra.mxu0 %v5011
    %5119 = vmatprep.subr.bf16.mxu0 0
    %5120 = vmatpush1.bf16.msra.mxu0 %v5010
    %5121 = vmatprep.subr.bf16.mxu0 0
    %5122 = vmatpush1.bf16.msra.mxu0 %v5009
    %5123 = vmatprep.subr.bf16.mxu0 0
    %5124 = vmatpush1.bf16.msra.mxu0 %v5008
    %5125 = vmatprep.subr.bf16.mxu0 0
    %5126 = vmatpush1.bf16.msra.mxu0 %v5007
    %5127 = vmatprep.subr.bf16.mxu0 0
    %5128 = vmatpush1.bf16.msra.mxu0 %v5006
    %5129 = vmatprep.subr.bf16.mxu0 0
    %5130 = vmatpush1.bf16.msra.mxu0 %v5005
    %5131 = vmatprep.subr.bf16.mxu0 0
    %5132 = vmatpush1.bf16.msra.mxu0 %v5004
    %5133 = vmatprep.subr.bf16.mxu0 0
    %5134 = vmatpush2.bf16.msra.mxu0 %v5019
    %5135 = vmatprep.subr.bf16.mxu0 0
    %5136 = vmatpush2.bf16.msra.mxu0 %v5018
    %5137 = vmatprep.subr.bf16.mxu0 0
    %5138 = vmatpush2.bf16.msra.mxu0 %v5017
    %5139 = vmatprep.subr.bf16.mxu0 0
    %5140 = vmatpush2.bf16.msra.mxu0 %v5016
    %5141 = vmatprep.subr.bf16.mxu0 0
    %5142 = vmatpush2.bf16.msra.mxu0 %v5015
    %5143 = vmatprep.subr.bf16.mxu0 0
    %5144 = vmatpush2.bf16.msra.mxu0 %v5014
    %5145 = vmatprep.subr.bf16.mxu0 0
    %5146 = vmatpush2.bf16.msra.mxu0 %v5013
    %5147 = vmatprep.subr.bf16.mxu0 0
    %5148 = vmatpush2.bf16.msra.mxu0 %v5012
    %5149 = vmatprep.mubr.bf16.mxu0 %v4783
    %5150 = vmatmul.mubr.bf16.gmra.mxu0 %v4782
    %v5151 = vpop.f32.mrf.mxu0
    %v5152 = vadd.f32 %v5087, %v5151
    %v5153 = vpop.f32.mrf.mxu0
    %v5154 = vpop.f32.mrf.mxu0
    %v5155 = vadd.f32 %v5090, %v5154
    %v5156 = vpop.f32.mrf.mxu0
    %5157 = vmatprep.mubr.bf16.mxu0 %v4787
    %5158 = vmatmul.mubr.bf16.gmra.mxu0 %v4786
    %v5159 = vpop.f32.mrf.mxu0
    %v5160 = vadd.f32 %v5095, %v5159
    %v5161 = vpop.f32.mrf.mxu0
    %v5162 = vpop.f32.mrf.mxu0
    %v5163 = vadd.f32 %v5098, %v5162
    %v5164 = vpop.f32.mrf.mxu0
    %5165 = vmatprep.mubr.bf16.mxu0 %v4791
    %5166 = vmatmul.mubr.bf16.gmra.mxu0 %v4790
    %v5167 = vpop.f32.mrf.mxu0
    %v5168 = vadd.f32 %v5103, %v5167
    %v5169 = vpop.f32.mrf.mxu0
    %v5170 = vpop.f32.mrf.mxu0
    %v5171 = vadd.f32 %v5106, %v5170
    %v5172 = vpop.f32.mrf.mxu0
    %5173 = vmatprep.mubr.bf16.mxu0 %v4795
    %5174 = vmatmul.mubr.bf16.gmra.mxu0 %v4794
    %v5175 = vpop.f32.mrf.mxu0
    %v5176 = vadd.f32 %v5111, %v5175
    %v5177 = vpop.f32.mrf.mxu0
    %v5178 = vpop.f32.mrf.mxu0
    %v5179 = vadd.f32 %v5114, %v5178
    %v5180 = vpop.f32.mrf.mxu0
    %5181 = vdwg.mxu0
    %v5182 = vadd.f32 %v4476, %v5152
    %v5183 = vadd.f32 %v4477, %v5155
    %v5184 = vadd.f32 %v4478, %v5160
    %v5185 = vadd.f32 %v4479, %v5163
    %v5186 = vadd.f32 %v4480, %v5168
    %v5187 = vadd.f32 %v4481, %v5171
    %v5188 = vadd.f32 %v4482, %v5176
    %v5189 = vadd.f32 %v4483, %v5179
    %v5190 = vlaneseq
    %v5191 = vshrl.u32 %v5190, 7
    %v5192 = vsub.s32 6, %v5191
    %v5193 = vrot.slane %v40, %v5192
    %v5194 = vadd.f32 %v5182, %v5193
    %v5195 = vadd.f32 %v5183, %v5193
    %v5196 = vadd.f32 %v5184, %v5193
    %v5197 = vadd.f32 %v5185, %v5193
    %v5198 = vadd.f32 %v5186, %v5193
    %v5199 = vadd.f32 %v5187, %v5193
    %v5200 = vadd.f32 %v5188, %v5193
    %v5201 = vadd.f32 %v5189, %v5193
    %v5202 = vadd.f32 %v2358, %v5194
    %v5203 = vadd.f32 %v2359, %v5195
    %v5204 = vadd.f32 %v2360, %v5196
    %v5205 = vadd.f32 %v2361, %v5197
    %v5206 = vadd.f32 %v2362, %v5198
    %v5207 = vadd.f32 %v2363, %v5199
    %v5208 = vadd.f32 %v2364, %v5200
    %v5209 = vadd.f32 %v2365, %v5201
    %v5210 = vsel %vm223, %v5202, 0.0
    %5211 = vadd.xlane.f32.xlu0 %v5210
    %v5212 = vpop.xlane.xlu0 %5211
    %v5213 = vsel %vm223, %v5203, 0.0
    %5214 = vadd.xlane.f32.xlu0 %v5213
    %v5215 = vpop.xlane.xlu0 %5214
    %v5216 = vsel %vm223, %v5204, 0.0
    %5217 = vadd.xlane.f32.xlu0 %v5216
    %v5218 = vpop.xlane.xlu0 %5217
    %v5219 = vsel %vm223, %v5205, 0.0
    %5220 = vadd.xlane.f32.xlu0 %v5219
    %v5221 = vpop.xlane.xlu0 %5220
    %v5222 = vsel %vm223, %v5206, 0.0
    %5223 = vadd.xlane.f32.xlu0 %v5222
    %v5224 = vpop.xlane.xlu0 %5223
    %v5225 = vsel %vm223, %v5207, 0.0
    %5226 = vadd.xlane.f32.xlu0 %v5225
    %v5227 = vpop.xlane.xlu0 %5226
    %v5228 = vsel %vm223, %v5208, 0.0
    %5229 = vadd.xlane.f32.xlu0 %v5228
    %v5230 = vpop.xlane.xlu0 %5229
    %v5231 = vsel %vm223, %v5209, 0.0
    %5232 = vadd.xlane.f32.xlu0 %v5231
    %v5233 = vpop.xlane.xlu0 %5232
    %v5234 = vmul.f32 %v5212, %v2261
    %v5235 = vmul.f32 %v5215, %v2261
    %v5236 = vmul.f32 %v5218, %v2261
    %v5237 = vmul.f32 %v5221, %v2261
    %v5238 = vmul.f32 %v5224, %v2261
    %v5239 = vmul.f32 %v5227, %v2261
    %v5240 = vmul.f32 %v5230, %v2261
    %v5241 = vmul.f32 %v5233, %v2261
    %v5242 = vsub.f32 %v5202, %v5234
    %v5243 = vsub.f32 %v5203, %v5235
    %v5244 = vsub.f32 %v5204, %v5236
    %v5245 = vsub.f32 %v5205, %v5237
    %v5246 = vsub.f32 %v5206, %v5238
    %v5247 = vsub.f32 %v5207, %v5239
    %v5248 = vsub.f32 %v5208, %v5240
    %v5249 = vsub.f32 %v5209, %v5241
    %v5250 = vmul.f32 %v5242, %v5242
    %v5251 = vmul.f32 %v5243, %v5243
    %v5252 = vmul.f32 %v5244, %v5244
    %v5253 = vmul.f32 %v5245, %v5245
    %v5254 = vmul.f32 %v5246, %v5246
    %v5255 = vmul.f32 %v5247, %v5247
    %v5256 = vmul.f32 %v5248, %v5248
    %v5257 = vmul.f32 %v5249, %v5249
    %v5258 = vsel %vm223, %v5250, 0.0
    %5259 = vadd.xlane.f32.xlu0 %v5258
    %v5260 = vpop.xlane.xlu0 %5259
    %v5261 = vsel %vm223, %v5251, 0.0
    %5262 = vadd.xlane.f32.xlu0 %v5261
    %v5263 = vpop.xlane.xlu0 %5262
    %v5264 = vsel %vm223, %v5252, 0.0
    %5265 = vadd.xlane.f32.xlu0 %v5264
    %v5266 = vpop.xlane.xlu0 %5265
    %v5267 = vsel %vm223, %v5253, 0.0
    %5268 = vadd.xlane.f32.xlu0 %v5267
    %v5269 = vpop.xlane.xlu0 %5268
    %v5270 = vsel %vm223, %v5254, 0.0
    %5271 = vadd.xlane.f32.xlu0 %v5270
    %v5272 = vpop.xlane.xlu0 %5271
    %v5273 = vsel %vm223, %v5255, 0.0
    %5274 = vadd.xlane.f32.xlu0 %v5273
    %v5275 = vpop.xlane.xlu0 %5274
    %v5276 = vsel %vm223, %v5256, 0.0
    %5277 = vadd.xlane.f32.xlu0 %v5276
    %v5278 = vpop.xlane.xlu0 %5277
    %v5279 = vsel %vm223, %v5257, 0.0
    %5280 = vadd.xlane.f32.xlu0 %v5279
    %v5281 = vpop.xlane.xlu0 %5280
    %v5282 = vmul.f32 %v5260, %v2261
    %v5283 = vmul.f32 %v5263, %v2261
    %v5284 = vmul.f32 %v5266, %v2261
    %v5285 = vmul.f32 %v5269, %v2261
    %v5286 = vmul.f32 %v5272, %v2261
    %v5287 = vmul.f32 %v5275, %v2261
    %v5288 = vmul.f32 %v5278, %v2261
    %v5289 = vmul.f32 %v5281, %v2261
    %v5290 = vadd.f32 %v5282, 1e-05
    %v5291 = vadd.f32 %v5283, 1e-05
    %v5292 = vadd.f32 %v5284, 1e-05
    %v5293 = vadd.f32 %v5285, 1e-05
    %v5294 = vadd.f32 %v5286, 1e-05
    %v5295 = vadd.f32 %v5287, 1e-05
    %v5296 = vadd.f32 %v5288, 1e-05
    %v5297 = vadd.f32 %v5289, 1e-05
    %v5298 = vrsqrt.pop %v5290
    %v5299 = vrsqrt.pop %v5291
    %v5300 = vrsqrt.pop %v5292
    %v5301 = vrsqrt.pop %v5293
    %v5302 = vrsqrt.pop %v5294
    %v5303 = vrsqrt.pop %v5295
    %v5304 = vrsqrt.pop %v5296
    %v5305 = vrsqrt.pop %v5297
    %v5306 = vmul.f32 %v5242, %v5298
    %v5307 = vmul.f32 %v5243, %v5299
    %v5308 = vmul.f32 %v5244, %v5300
    %v5309 = vmul.f32 %v5245, %v5301
    %v5310 = vmul.f32 %v5246, %v5302
    %v5311 = vmul.f32 %v5247, %v5303
    %v5312 = vmul.f32 %v5248, %v5304
    %v5313 = vmul.f32 %v5249, %v5305
    %v5314 = vlaneseq
    %v5315 = vshrl.u32 %v5314, 7
    %v5316 = vsub.s32 4, %v5315
    %v5317 = vrot.slane %v40, %v5316
    %v5318 = vmul.f32 %v5306, %v5317
    %v5319 = vmul.f32 %v5307, %v5317
    %v5320 = vmul.f32 %v5308, %v5317
    %v5321 = vmul.f32 %v5309, %v5317
    %v5322 = vmul.f32 %v5310, %v5317
    %v5323 = vmul.f32 %v5311, %v5317
    %v5324 = vmul.f32 %v5312, %v5317
    %v5325 = vmul.f32 %v5313, %v5317
    %v5326 = vlaneseq
    %v5327 = vshrl.u32 %v5326, 7
    %v5328 = vsub.s32 5, %v5327
    %v5329 = vrot.slane %v40, %v5328
    %v5330 = vadd.f32 %v5318, %v5329
    %v5331 = vadd.f32 %v5319, %v5329
    %v5332 = vadd.f32 %v5320, %v5329
    %v5333 = vadd.f32 %v5321, %v5329
    %v5334 = vadd.f32 %v5322, %v5329
    %v5335 = vadd.f32 %v5323, %v5329
    %v5336 = vadd.f32 %v5324, %v5329
    %v5337 = vadd.f32 %v5325, %v5329
    %v5338 = vsel %vm223, %v5330, 0.0
    %v5339 = vrot.slane %v5338, 4
    %v5340 = vadd.f32 %v5338, %v5339
    %v5341 = vrot.slane %v5340, 2
    %v5342 = vadd.f32 %v5340, %v5341
    %v5343 = vrot.slane %v5342, 1
    %v5344 = vadd.f32 %v5342, %v5343
    %v5345 = vsel %vm223, %v5331, 0.0
    %v5346 = vrot.slane %v5345, 4
    %v5347 = vadd.f32 %v5345, %v5346
    %v5348 = vrot.slane %v5347, 2
    %v5349 = vadd.f32 %v5347, %v5348
    %v5350 = vrot.slane %v5349, 1
    %v5351 = vadd.f32 %v5349, %v5350
    %v5352 = vsel %vm223, %v5332, 0.0
    %v5353 = vrot.slane %v5352, 4
    %v5354 = vadd.f32 %v5352, %v5353
    %v5355 = vrot.slane %v5354, 2
    %v5356 = vadd.f32 %v5354, %v5355
    %v5357 = vrot.slane %v5356, 1
    %v5358 = vadd.f32 %v5356, %v5357
    %v5359 = vsel %vm223, %v5333, 0.0
    %v5360 = vrot.slane %v5359, 4
    %v5361 = vadd.f32 %v5359, %v5360
    %v5362 = vrot.slane %v5361, 2
    %v5363 = vadd.f32 %v5361, %v5362
    %v5364 = vrot.slane %v5363, 1
    %v5365 = vadd.f32 %v5363, %v5364
    %v5366 = vsel %vm223, %v5334, 0.0
    %v5367 = vrot.slane %v5366, 4
    %v5368 = vadd.f32 %v5366, %v5367
    %v5369 = vrot.slane %v5368, 2
    %v5370 = vadd.f32 %v5368, %v5369
    %v5371 = vrot.slane %v5370, 1
    %v5372 = vadd.f32 %v5370, %v5371
    %v5373 = vsel %vm223, %v5335, 0.0
    %v5374 = vrot.slane %v5373, 4
    %v5375 = vadd.f32 %v5373, %v5374
    %v5376 = vrot.slane %v5375, 2
    %v5377 = vadd.f32 %v5375, %v5376
    %v5378 = vrot.slane %v5377, 1
    %v5379 = vadd.f32 %v5377, %v5378
    %v5380 = vsel %vm223, %v5336, 0.0
    %v5381 = vrot.slane %v5380, 4
    %v5382 = vadd.f32 %v5380, %v5381
    %v5383 = vrot.slane %v5382, 2
    %v5384 = vadd.f32 %v5382, %v5383
    %v5385 = vrot.slane %v5384, 1
    %v5386 = vadd.f32 %v5384, %v5385
    %v5387 = vsel %vm223, %v5337, 0.0
    %v5388 = vrot.slane %v5387, 4
    %v5389 = vadd.f32 %v5387, %v5388
    %v5390 = vrot.slane %v5389, 2
    %v5391 = vadd.f32 %v5389, %v5390
    %v5392 = vrot.slane %v5391, 1
    %v5393 = vadd.f32 %v5391, %v5392
    %v5394 = vmul.f32 %v5344, 0.125
    %v5395 = vmul.f32 %v5351, 0.125
    %v5396 = vmul.f32 %v5358, 0.125
    %v5397 = vmul.f32 %v5365, 0.125
    %v5398 = vmul.f32 %v5372, 0.125
    %v5399 = vmul.f32 %v5379, 0.125
    %v5400 = vmul.f32 %v5386, 0.125
    %v5401 = vmul.f32 %v5393, 0.125
    %v5402 = vpack.c.bf16 %v5394, %v5394
    %v5403 = vpack.c.bf16 %v5395, %v5395
    %v5404 = vpack.c.bf16 %v5396, %v5396
    %v5405 = vpack.c.bf16 %v5397, %v5397
    %v5406 = vpack.c.bf16 %v5398, %v5398
    %v5407 = vpack.c.bf16 %v5399, %v5399
    %v5408 = vpack.c.bf16 %v5400, %v5400
    %v5409 = vpack.c.bf16 %v5401, %v5401
    %v5410 = vld [vmem:[%s8] sm:$0xf]
    %v5411 = vld [vmem:[%s8 + $0x4] sm:$0xf]
    %v5412 = vld [vmem:[%s8 + $0x8] sm:$0xf]
    %v5413 = vld [vmem:[%s8 + $0xc] sm:$0xf]
    %v5414 = vld [vmem:[%s8 + $0x10] sm:$0xf]
    %v5415 = vld [vmem:[%s8 + $0x14] sm:$0xf]
    %v5416 = vld [vmem:[%s8 + $0x18] sm:$0xf]
    %v5417 = vld [vmem:[%s8 + $0x1c] sm:$0xf]
    %v5418 = vld [vmem:[%s9] sm:$0x1]
    %v5420 = vlaneseq
    %v5421 = vshrl.u32 %v5420, 7
    %v5422 = vsub.s32 0, %v5421
    %v5423 = vrot.slane %v5418, %v5422
    %v5433 = vunpack.c.l.b16 %v5402
    %v5434 = vunpack.c.l.b16 %v5403
    %v5435 = vunpack.c.l.b16 %v5404
    %v5436 = vunpack.c.l.b16 %v5405
    %v5437 = vunpack.c.l.b16 %v5406
    %v5438 = vunpack.c.l.b16 %v5407
    %v5439 = vunpack.c.l.b16 %v5408
    %v5440 = vunpack.c.l.b16 %v5409
    %vm5441 = vcmask 1041409
    %v5442 = vsel %vm5441, %v5434, %v5433
    %vm5443 = vcmask 1042434
    %v5444 = vsel %vm5443, %v5435, %v5442
    %vm5445 = vcmask 1043459
    %v5446 = vsel %vm5445, %v5436, %v5444
    %vm5447 = vcmask 1044484
    %v5448 = vsel %vm5447, %v5437, %v5446
    %vm5449 = vcmask 1045509
    %v5450 = vsel %vm5449, %v5438, %v5448
    %vm5451 = vcmask 1046534
    %v5452 = vsel %vm5451, %v5439, %v5450
    %vm5453 = vcmask 1047559
    %v5454 = vsel %vm5453, %v5440, %v5452
    %v5455 = vpack.c.b16 %v5454, %v5454
    %v5464 = vunpack.c.l.b16 %v5410
    %v5465 = vunpack.c.l.b16 %v5411
    %v5466 = vunpack.c.l.b16 %v5412
    %v5467 = vunpack.c.l.b16 %v5413
    %v5468 = vunpack.c.l.b16 %v5414
    %v5469 = vunpack.c.l.b16 %v5415
    %v5470 = vunpack.c.l.b16 %v5416
    %v5471 = vunpack.c.l.b16 %v5417
    %v5472 = vpack.c.b16 %v5465, %v5464
    %v5473 = vpack.c.b16 %v5467, %v5466
    %v5474 = vpack.c.b16 %v5469, %v5468
    %v5475 = vpack.c.b16 %v5471, %v5470
    %v5481 = vsel %vm223, %v5455, 0
    %5483 = vmatprep.subr.bf16.mxu0 0
    %5484 = vmatpush1.bf16.msra.mxu0 0
    %5485 = vmatprep.subr.bf16.mxu0 0
    %5486 = vmatpush1.bf16.msra.mxu0 0
    %5487 = vmatprep.subr.bf16.mxu0 0
    %5488 = vmatpush1.bf16.msra.mxu0 0
    %5489 = vmatprep.subr.bf16.mxu0 0
    %5490 = vmatpush1.bf16.msra.mxu0 0
    %5491 = vmatprep.subr.bf16.mxu0 0
    %5492 = vmatpush1.bf16.msra.mxu0 %v5475
    %5493 = vmatprep.subr.bf16.mxu0 0
    %5494 = vmatpush1.bf16.msra.mxu0 %v5474
    %5495 = vmatprep.subr.bf16.mxu0 0
    %5496 = vmatpush1.bf16.msra.mxu0 %v5473
    %5497 = vmatprep.subr.bf16.mxu0 0
    %5498 = vmatpush1.bf16.msra.mxu0 %v5472
    %5499 = vmatprep.subr.bf16.mxu0 0
    %5500 = vmatpush2.bf16.msra.mxu0 0
    %5501 = vmatprep.subr.bf16.mxu0 0
    %5502 = vmatpush2.bf16.msra.mxu0 0
    %5503 = vmatprep.subr.bf16.mxu0 0
    %5504 = vmatpush2.bf16.msra.mxu0 0
    %5505 = vmatprep.subr.bf16.mxu0 0
    %5506 = vmatpush2.bf16.msra.mxu0 0
    %5507 = vmatprep.subr.bf16.mxu0 0
    %5508 = vmatpush2.bf16.msra.mxu0 0
    %5509 = vmatprep.subr.bf16.mxu0 0
    %5510 = vmatpush2.bf16.msra.mxu0 0
    %5511 = vmatprep.subr.bf16.mxu0 0
    %5512 = vmatpush2.bf16.msra.mxu0 0
    %5513 = vmatprep.subr.bf16.mxu0 0
    %5514 = vmatpush2.bf16.msra.mxu0 0
    %5515 = vmatprep.mubr.bf16.mxu0 0
    %5516 = vmatmul.mubr.bf16.gmra.mxu0 %v5481
    %v5517 = vpop.f32.mrf.mxu0
    %v5518 = vadd.f32 %v5423, %v5517
    %v5519 = vpop.f32.mrf.mxu0
    %v5520 = vpop.f32.mrf.mxu0
    %v5521 = vpop.f32.mrf.mxu0
    %5522 = vdwg.mxu0
    %5523 = vst [vmem:[#allocation2] sm:$0xff] %v5518
    // Predicated region
    $region46: #{tpu_custom_call.1} parent=1 // pred_check
      _
    $region47: #{tpu_custom_call.1} parent=1 // pred_check_branch
      %5525 = sbr.rel (0) target = $region49
    $region48: #{tpu_custom_call.1} parent=1 // pred_region
      %s5527 = ssub.s32 128, 128
      %5528 = vsyncadd [#allocation3], %s5527
      %s5530 = sshll.u32 [#allocation2], 4
      %s5531 = int_to_ptr.vmem [resolvable:$true] %s5530
      %5533 = dma.vmem_to_hbm [thread:$0]  %s5531, 128, %s11, [#allocation3]
    $region49: #{tpu_custom_call.1} parent=1 // pred_fallthru
      _
    // Predicated region
    $region50: #{tpu_custom_call.1} parent=1 // pred_check
      _
    $region51: #{tpu_custom_call.1} parent=1 // pred_check_branch
      %5535 = sbr.rel (0) target = $region53
    $region52: #{tpu_custom_call.1} parent=1 // pred_region
      %5536 = dma.done [#allocation3], 128
    $region53: #{tpu_custom_call.1} parent=1 // pred_fallthru
      _
    %5537 = vsyncpa [#allocation3], 1

</llo_original>
